<compile_context>
chip_gen: v5e
topology: v5e:2x2
jax: 0.10.0
libtpu: 0.0.40
codegen_flags: <defaults>
</compile_context>

<pallas_src>
import functools

import jax
import jax.numpy as jnp
from jax.experimental import pallas as pl
from jax.experimental.pallas import tpu as pltpu


H_LAYER = 512           # fixed inside the PyTorch module
LANE = 128              # TPU lane width
TN_MAX = 8192           # w4 tile width: 8 MiB bf16/tile, 16 MiB double-buffered
VMEM_LIMIT = 48 << 20   # fits v7x (64 MiB phys) and v5e/v6e (128 MiB phys)


def _round_up(n, m):
    return ((n + m - 1) // m) * m


def _w4_tiling(io):
    """Return (io_pad, tile_n, num_tiles) for the flattened w-output dimension.

    Aims for >= 2 tiles whenever io allows (so dimension_semantics=("parallel",)
    shards the w4 HBM stream across v7x's two TensorCores) while capping the
    tile at TN_MAX so double-buffered VMEM stays ~16 MiB.
    """
    io_pad = _round_up(io, LANE)
    if io_pad <= 2 * LANE:
        return io_pad, io_pad, 1
    tn = min(TN_MAX, _round_up((io_pad + 1) // 2, LANE))
    io_pad = _round_up(io_pad, tn)
    return io_pad, tn, io_pad // tn


def _elu(v):
    # torch.nn.ELU(alpha=1.0); clamp before exp so large positives never overflow.
    return jnp.where(v > 0, v, jnp.exp(jnp.minimum(v, 0.0)) - 1.0)


# ---------------------------------------------------------------------------
# Kernel 1: runs ONCE.  x -> z -> fused [hw|hb|hs] -> (hw vector, b|s outputs).
# ---------------------------------------------------------------------------
def chain_kernel(
    x_ref,
    w1_ref, b1_ref, w2_ref, b2_ref,      # self.net
    w357_ref, b357_ref,                  # fused first layers of W / b / s
    w68_ref, b68_ref,                    # block-diag fused second layers of b / s
    hw_ref, bs_ref,
):
    bf16 = jnp.bfloat16
    x = x_ref[...].astype(bf16)                                            # (1, L)

    # z = net(x) = Linear -> ELU -> Linear
    h1 = _elu(jnp.dot(x, w1_ref[...], preferred_element_type=jnp.float32) + b1_ref[...])
    z = jnp.dot(h1.astype(bf16), w2_ref[...],
                preferred_element_type=jnp.float32) + b2_ref[...]

    # fused first layers of the three branches: hall = [hw | hb | hs], (1, 1536)
    hall = _elu(jnp.dot(z.astype(bf16), w357_ref[...],
                        preferred_element_type=jnp.float32) + b357_ref[...])

    # hand the W-branch hidden vector to the streaming kernel (bf16)
    hw_ref[...] = hall[:, :H_LAYER].astype(jnp.bfloat16)

    # b / s branches: single block-diagonal dot -> one lane-dense (1, 128) store
    hbs = hall[:, H_LAYER:].astype(bf16)                                   # (1, 1024)
    bs_ref[...] = (
        jnp.dot(hbs, w68_ref[...], preferred_element_type=jnp.float32) + b68_ref[...]
    )


# ---------------------------------------------------------------------------
# Kernel 2: streams one (512, TN) tile of w4 per grid step ("parallel" axis).
# Per-step work is a single matvec + lane-dense store; the tile DMA dominates.
# ---------------------------------------------------------------------------
def stream_w_kernel(hw_ref, w4_ref, b4_ref, wflat_ref):
    wflat_ref[...] = (
        jnp.dot(hw_ref[...], w4_ref[...], preferred_element_type=jnp.float32)
        + b4_ref[...]
    )


def init_head_params(key, latent_dim, output_dim_in, output_dim_out):
    """Deterministic params mirroring the module's shapes.

    Weights are (in, out) and stored in bfloat16; biases stay f32.  Per
    Head.init_layers(), the weights of both Linear layers in `self.b` are zeroed.
    """
    io = output_dim_in * output_dim_out
    shapes = [
        ("w1", (latent_dim, H_LAYER)), ("b1", (1, H_LAYER)),
        ("w2", (H_LAYER, H_LAYER)),    ("b2", (1, H_LAYER)),
        ("w3", (H_LAYER, H_LAYER)),    ("b3", (1, H_LAYER)),
        ("w4", (H_LAYER, io)),         ("b4", (1, io)),
        ("w5", (H_LAYER, H_LAYER)),    ("b5", (1, H_LAYER)),
        ("w6", (H_LAYER, output_dim_out)), ("b6", (1, output_dim_out)),
        ("w7", (H_LAYER, H_LAYER)),    ("b7", (1, H_LAYER)),
        ("w8", (H_LAYER, output_dim_out)), ("b8", (1, output_dim_out)),
    ]
    keys = jax.random.split(key, len(shapes))
    params = {}
    for (name, shp), k in zip(shapes, keys):
        fan_in = shp[0] if name.startswith("w") else H_LAYER
        bound = 1.0 / (float(fan_in) ** 0.5)
        v = jax.random.uniform(k, shp, dtype=jnp.float32, minval=-bound, maxval=bound)
        params[name] = v.astype(jnp.bfloat16) if name.startswith("w") else v
    # Head.init_layers(): zero the weights of every Linear in self.b
    params["w5"] = jnp.zeros_like(params["w5"])
    params["w6"] = jnp.zeros_like(params["w6"])
    return params


def pack_head_params(params, output_dim_in, output_dim_out):
    """One-time repack: fuse branch weights and pad to lane-dense widths."""
    H = H_LAYER
    odo = output_dim_out
    io = output_dim_in * odo
    io_pad, _, _ = _w4_tiling(io)
    bs_w = _round_up(2 * odo, LANE)

    # fused first layers of the W / b / s branches: (512, 1536)
    w357 = jnp.concatenate([params["w3"], params["w5"], params["w7"]], axis=1)
    b357 = jnp.concatenate([params["b3"], params["b5"], params["b7"]], axis=1)

    # w4 padded to a multiple of the tile width (lane-dense output stores)
    w4 = jnp.zeros((H, io_pad), jnp.bfloat16).at[:, :io].set(params["w4"])
    b4 = jnp.zeros((1, io_pad), jnp.float32).at[:, :io].set(params["b4"])

    # block-diagonal fusion of the b/s second layers, padded to 128 lanes
    w68 = jnp.zeros((2 * H, bs_w), jnp.bfloat16)
    w68 = w68.at[:H, :odo].set(params["w6"])
    w68 = w68.at[H:, odo:2 * odo].set(params["w8"])
    b68 = jnp.zeros((1, bs_w), jnp.float32)
    b68 = b68.at[:, :odo].set(params["b6"][0])
    b68 = b68.at[:, odo:2 * odo].set(params["b8"][0])

    return {
        "w1": params["w1"], "b1": params["b1"],
        "w2": params["w2"], "b2": params["b2"],
        "w357": w357, "b357": b357,
        "w4": w4, "b4": b4,
        "w68": w68, "b68": b68,
    }


@functools.partial(jax.jit, static_argnames=("output_dim_in", "output_dim_out"))
def head_forward(x, packed, *, output_dim_in, output_dim_out):
    H = H_LAYER
    odo = output_dim_out
    io = output_dim_in * odo
    io_pad, tn, num_tiles = _w4_tiling(io)
    bs_w = packed["w68"].shape[1]
    latent_dim = x.shape[-1]

    x2d = x.reshape(1, latent_dim).astype(jnp.float32)

    const = lambda i: (0, 0)

    # --- single-step chain kernel: z, fused branches, b/s outputs -----------
    hw, bs = pl.pallas_call(
        chain_kernel,
        grid=(1,),
        in_specs=[
            pl.BlockSpec((1, latent_dim), const),       # x
            pl.BlockSpec((latent_dim, H), const),       # w1
            pl.BlockSpec((1, H), const),                # b1
            pl.BlockSpec((H, H), const),                # w2
            pl.BlockSpec((1, H), const),                # b2
            pl.BlockSpec((H, 3 * H), const),            # w357
            pl.BlockSpec((1, 3 * H), const),            # b357
            pl.BlockSpec((2 * H, bs_w), const),         # w68
            pl.BlockSpec((1, bs_w), const),             # b68
        ],
        out_specs=(
            pl.BlockSpec((1, H), const),                # hw (bf16, feeds stream)
            pl.BlockSpec((1, bs_w), const),             # [b | s] (f32)
        ),
        out_shape=(
            jax.ShapeDtypeStruct((1, H), jnp.bfloat16),
            jax.ShapeDtypeStruct((1, bs_w), jnp.float32),
        ),
        compiler_params=pltpu.CompilerParams(
            dimension_semantics=("arbitrary",),
            vmem_limit_bytes=VMEM_LIMIT,
        ),
    )(
        x2d,
        packed["w1"], packed["b1"], packed["w2"], packed["b2"],
        packed["w357"], packed["b357"], packed["w68"], packed["b68"],
    )

    # --- w4 streaming kernel: one big matvec tile per grid step -------------
    wflat_pad = pl.pallas_call(
        stream_w_kernel,
        grid=(num_tiles,),
        in_specs=[
            pl.BlockSpec((1, H), lambda j: (0, 0)),     # hw (tiny, resident)
            pl.BlockSpec((H, tn), lambda j: (0, j)),    # w4 tile (double-buffered stream)
            pl.BlockSpec((1, tn), lambda j: (0, j)),    # b4 tile
        ],
        out_specs=pl.BlockSpec((1, tn), lambda j: (0, j)),
        out_shape=jax.ShapeDtypeStruct((1, io_pad), jnp.float32),
        compiler_params=pltpu.CompilerParams(
            dimension_semantics=("parallel",),          # shards the stream on v7x's 2 TCs
            vmem_limit_bytes=VMEM_LIMIT,
        ),
    )(hw, packed["w4"], packed["b4"])

    w = wflat_pad[0, :io].reshape(output_dim_in, output_dim_out)
    b = bs[0, :odo]
    s = 1.0 + bs[0, odo:2 * odo]
    return w, b, s


def _reference_forward(x, params, output_dim_in, output_dim_out):
    """Pure-JAX f32 reference using the same (bf16-valued) weights."""
    def elu(v):
        return jnp.where(v > 0, v, jnp.exp(jnp.minimum(v, 0.0)) - 1.0)

    f32 = lambda a: a.astype(jnp.float32)
    x2d = x.reshape(1, -1).astype(jnp.float32)
    h = elu(x2d @ f32(params["w1"]) + params["b1"])
    z = h @ f32(params["w2"]) + params["b2"]
    hw = elu(z @ f32(params["w3"]) + params["b3"])
    w = (hw @ f32(params["w4"]) + params["b4"]).reshape(output_dim_in, output_dim_out)
    hb = elu(z @ f32(params["w5"]) + params["b5"])
    b = (hb @ f32(params["w6"]) + params["b6"])[0]
    hs = elu(z @ f32(params["w7"]) + params["b7"])
    s = 1.0 + (hs @ f32(params["w8"]) + params["b8"])[0]
    return w, b, s


if __name__ == "__main__":
    latent_dim = 32
    output_dim_in = 16
    output_dim_out = 4

    key = jax.random.PRNGKey(0)
    k_x, k_p = jax.random.split(key)
    x = jax.random.normal(k_x, (latent_dim,), dtype=jnp.float32)
    params = init_head_params(k_p, latent_dim, output_dim_in, output_dim_out)
    packed = pack_head_params(params, output_dim_in, output_dim_out)

    w, b, s = head_forward(
        x, packed, output_dim_in=output_dim_in, output_dim_out=output_dim_out
    )
    jax.block_until_ready((w, b, s))

    # sanity check against a pure-JAX reference (kernel uses bf16 activations,
    # f32 accumulation -> modest tolerance vs the f32-activation reference)
    w_ref, b_ref, s_ref = _reference_forward(x, params, output_dim_in, output_dim_out)
    assert w.shape == (output_dim_in, output_dim_out)
    assert b.shape == (output_dim_out,)
    assert s.shape == (output_dim_out,)
    assert jnp.allclose(w, w_ref, atol=2e-2, rtol=2e-2)
    assert jnp.allclose(b, b_ref, atol=2e-2, rtol=2e-2)
    assert jnp.allclose(s, s_ref, atol=2e-2, rtol=2e-2)

    print("KERNEL_OK")
</pallas_src>

<mosaic_0001>
module attributes {stable_mosaic.version = 11 : i64} {
  func.func @chain_kernel(%arg0: i32, %arg1: memref<1x32xf32, #tpu.memory_space<vmem>>, %arg2: memref<32x512xbf16, #tpu.memory_space<vmem>>, %arg3: memref<1x512xf32, #tpu.memory_space<vmem>>, %arg4: memref<512x512xbf16, #tpu.memory_space<vmem>>, %arg5: memref<1x512xf32, #tpu.memory_space<vmem>>, %arg6: memref<512x1536xbf16, #tpu.memory_space<vmem>>, %arg7: memref<1x1536xf32, #tpu.memory_space<vmem>>, %arg8: memref<1024x128xbf16, #tpu.memory_space<vmem>>, %arg9: memref<1x128xf32, #tpu.memory_space<vmem>>, %arg10: memref<1x512xbf16, #tpu.memory_space<vmem>>, %arg11: memref<1x128xf32, #tpu.memory_space<vmem>>) attributes {dimension_semantics = [#tpu.dimension_semantics<arbitrary>], iteration_bounds = array<i64: 1>, scalar_prefetch = 0 : i64, scratch_operands = 0 : i64, tpu.core_type = #tpu.core_type<tc>, window_params = [{pipeline_mode = #tpu.pipeline_mode<synchronous>, transform_indices = @transform_0, window_bounds = array<i64: 1, 32>}, {pipeline_mode = #tpu.pipeline_mode<synchronous>, transform_indices = @transform_1, window_bounds = array<i64: 32, 512>}, {pipeline_mode = #tpu.pipeline_mode<synchronous>, transform_indices = @transform_2, window_bounds = array<i64: 1, 512>}, {pipeline_mode = #tpu.pipeline_mode<synchronous>, transform_indices = @transform_3, window_bounds = array<i64: 512, 512>}, {pipeline_mode = #tpu.pipeline_mode<synchronous>, transform_indices = @transform_4, window_bounds = array<i64: 1, 512>}, {pipeline_mode = #tpu.pipeline_mode<synchronous>, transform_indices = @transform_5, window_bounds = array<i64: 512, 1536>}, {pipeline_mode = #tpu.pipeline_mode<synchronous>, transform_indices = @transform_6, window_bounds = array<i64: 1, 1536>}, {pipeline_mode = #tpu.pipeline_mode<synchronous>, transform_indices = @transform_7, window_bounds = array<i64: 1024, 128>}, {pipeline_mode = #tpu.pipeline_mode<synchronous>, transform_indices = @transform_8, window_bounds = array<i64: 1, 128>}, {pipeline_mode = #tpu.pipeline_mode<synchronous>, transform_indices = @transform_9, window_bounds = array<i64: 1, 512>}, {pipeline_mode = #tpu.pipeline_mode<synchronous>, transform_indices = @transform_10, window_bounds = array<i64: 1, 128>}]} {
    %c0 = arith.constant 0 : index
    %c0_0 = arith.constant 0 : index
    %0 = vector.load %arg1[%c0, %c0_0] : memref<1x32xf32, #tpu.memory_space<vmem>>, vector<1x32xf32>
    %1 = arith.truncf %0 : vector<1x32xf32> to vector<1x32xbf16>
    %c0_1 = arith.constant 0 : index
    %c0_2 = arith.constant 0 : index
    %2 = vector.load %arg2[%c0_1, %c0_2] : memref<32x512xbf16, #tpu.memory_space<vmem>>, vector<32x512xbf16>
    %cst = arith.constant dense<0.000000e+00> : vector<1x512xf32>
    %3 = tpu.matmul %1, %2, %cst {dimension_numbers = #tpu.dot_dimension_numbers<[1], [0], [0], [1], [0, 0, 1, 1], [], []>} : vector<1x32xbf16>, vector<32x512xbf16>, vector<1x512xf32> -> vector<1x512xf32>
    %c0_3 = arith.constant 0 : index
    %c0_4 = arith.constant 0 : index
    %4 = vector.load %arg3[%c0_3, %c0_4] : memref<1x512xf32, #tpu.memory_space<vmem>>, vector<1x512xf32>
    %5 = arith.addf %3, %4 : vector<1x512xf32>
    %cst_5 = arith.constant 0.000000e+00 : f32
    %6 = vector.broadcast %cst_5 : f32 to vector<1x512xf32>
    %7 = arith.cmpf ogt, %5, %6 : vector<1x512xf32>
    %cst_6 = arith.constant 0.000000e+00 : f32
    %8 = vector.broadcast %cst_6 : f32 to vector<1x512xf32>
    %9 = arith.minimumf %5, %8 : vector<1x512xf32>
    %10 = math.exp %9 : vector<1x512xf32>
    %cst_7 = arith.constant 1.000000e+00 : f32
    %11 = vector.broadcast %cst_7 : f32 to vector<1x512xf32>
    %12 = arith.subf %10, %11 : vector<1x512xf32>
    %13 = arith.select %7, %5, %12 : vector<1x512xi1>, vector<1x512xf32>
    %14 = arith.truncf %13 : vector<1x512xf32> to vector<1x512xbf16>
    %c0_8 = arith.constant 0 : index
    %c0_9 = arith.constant 0 : index
    %15 = vector.load %arg4[%c0_8, %c0_9] : memref<512x512xbf16, #tpu.memory_space<vmem>>, vector<512x512xbf16>
    %cst_10 = arith.constant dense<0.000000e+00> : vector<1x512xf32>
    %16 = tpu.matmul %14, %15, %cst_10 {dimension_numbers = #tpu.dot_dimension_numbers<[1], [0], [0], [1], [0, 0, 1, 1], [], []>} : vector<1x512xbf16>, vector<512x512xbf16>, vector<1x512xf32> -> vector<1x512xf32>
    %c0_11 = arith.constant 0 : index
    %c0_12 = arith.constant 0 : index
    %17 = vector.load %arg5[%c0_11, %c0_12] : memref<1x512xf32, #tpu.memory_space<vmem>>, vector<1x512xf32>
    %18 = arith.addf %16, %17 : vector<1x512xf32>
    %19 = arith.truncf %18 : vector<1x512xf32> to vector<1x512xbf16>
    %c0_13 = arith.constant 0 : index
    %c0_14 = arith.constant 0 : index
    %20 = vector.load %arg6[%c0_13, %c0_14] : memref<512x1536xbf16, #tpu.memory_space<vmem>>, vector<512x1536xbf16>
    %cst_15 = arith.constant dense<0.000000e+00> : vector<1x1536xf32>
    %21 = tpu.matmul %19, %20, %cst_15 {dimension_numbers = #tpu.dot_dimension_numbers<[1], [0], [0], [1], [0, 0, 1, 1], [], []>} : vector<1x512xbf16>, vector<512x1536xbf16>, vector<1x1536xf32> -> vector<1x1536xf32>
    %c0_16 = arith.constant 0 : index
    %c0_17 = arith.constant 0 : index
    %22 = vector.load %arg7[%c0_16, %c0_17] : memref<1x1536xf32, #tpu.memory_space<vmem>>, vector<1x1536xf32>
    %23 = arith.addf %21, %22 : vector<1x1536xf32>
    %cst_18 = arith.constant 0.000000e+00 : f32
    %24 = vector.broadcast %cst_18 : f32 to vector<1x1536xf32>
    %25 = arith.cmpf ogt, %23, %24 : vector<1x1536xf32>
    %cst_19 = arith.constant 0.000000e+00 : f32
    %26 = vector.broadcast %cst_19 : f32 to vector<1x1536xf32>
    %27 = arith.minimumf %23, %26 : vector<1x1536xf32>
    %28 = math.exp %27 : vector<1x1536xf32>
    %cst_20 = arith.constant 1.000000e+00 : f32
    %29 = vector.broadcast %cst_20 : f32 to vector<1x1536xf32>
    %30 = arith.subf %28, %29 : vector<1x1536xf32>
    %31 = arith.select %25, %23, %30 : vector<1x1536xi1>, vector<1x1536xf32>
    %32 = vector.extract_strided_slice %31 {offsets = [0, 0], sizes = [1, 512], strides = [1, 1]} : vector<1x1536xf32> to vector<1x512xf32>
    %33 = arith.truncf %32 : vector<1x512xf32> to vector<1x512xbf16>
    %c0_21 = arith.constant 0 : index
    %c0_22 = arith.constant 0 : index
    %34 = vector.load %arg10[%c0_21, %c0_22] : memref<1x512xbf16, #tpu.memory_space<vmem>>, vector<1x512xbf16>
    tpu.vector_store %arg10[%c0_21, %c0_22], %33 {strides = array<i32>} : memref<1x512xbf16, #tpu.memory_space<vmem>>, vector<1x512xbf16>,
    %35 = vector.extract_strided_slice %31 {offsets = [0, 512], sizes = [1, 1024], strides = [1, 1]} : vector<1x1536xf32> to vector<1x1024xf32>
    %36 = arith.truncf %35 : vector<1x1024xf32> to vector<1x1024xbf16>
    %c0_23 = arith.constant 0 : index
    %c0_24 = arith.constant 0 : index
    %37 = vector.load %arg8[%c0_23, %c0_24] : memref<1024x128xbf16, #tpu.memory_space<vmem>>, vector<1024x128xbf16>
    %cst_25 = arith.constant dense<0.000000e+00> : vector<1x128xf32>
    %38 = tpu.matmul %36, %37, %cst_25 {dimension_numbers = #tpu.dot_dimension_numbers<[1], [0], [0], [1], [0, 0, 1, 1], [], []>} : vector<1x1024xbf16>, vector<1024x128xbf16>, vector<1x128xf32> -> vector<1x128xf32>
    %c0_26 = arith.constant 0 : index
    %c0_27 = arith.constant 0 : index
    %39 = vector.load %arg9[%c0_26, %c0_27] : memref<1x128xf32, #tpu.memory_space<vmem>>, vector<1x128xf32>
    %40 = arith.addf %38, %39 : vector<1x128xf32>
    %c0_28 = arith.constant 0 : index
    %c0_29 = arith.constant 0 : index
    %41 = vector.load %arg11[%c0_28, %c0_29] : memref<1x128xf32, #tpu.memory_space<vmem>>, vector<1x128xf32>
    tpu.vector_store %arg11[%c0_28, %c0_29], %40 {strides = array<i32>} : memref<1x128xf32, #tpu.memory_space<vmem>>, vector<1x128xf32>,
    return
  }
  func.func @transform_0(%arg0: i32) -> (i32, i32) {
    %c0_i32 = arith.constant 0 : i32
    %c0_i32_0 = arith.constant 0 : i32
    %c0_i32_1 = arith.constant 0 : i32
    return %c0_i32, %c0_i32_0 : i32, i32
  }
  func.func @transform_1(%arg0: i32) -> (i32, i32) {
    %c0_i32 = arith.constant 0 : i32
    %c0_i32_0 = arith.constant 0 : i32
    %c0_i32_1 = arith.constant 0 : i32
    return %c0_i32, %c0_i32_0 : i32, i32
  }
  func.func @transform_2(%arg0: i32) -> (i32, i32) {
    %c0_i32 = arith.constant 0 : i32
    %c0_i32_0 = arith.constant 0 : i32
    %c0_i32_1 = arith.constant 0 : i32
    return %c0_i32, %c0_i32_0 : i32, i32
  }
  func.func @transform_3(%arg0: i32) -> (i32, i32) {
    %c0_i32 = arith.constant 0 : i32
    %c0_i32_0 = arith.constant 0 : i32
    %c0_i32_1 = arith.constant 0 : i32
    return %c0_i32, %c0_i32_0 : i32, i32
  }
  func.func @transform_4(%arg0: i32) -> (i32, i32) {
    %c0_i32 = arith.constant 0 : i32
    %c0_i32_0 = arith.constant 0 : i32
    %c0_i32_1 = arith.constant 0 : i32
    return %c0_i32, %c0_i32_0 : i32, i32
  }
  func.func @transform_5(%arg0: i32) -> (i32, i32) {
    %c0_i32 = arith.constant 0 : i32
    %c0_i32_0 = arith.constant 0 : i32
    %c0_i32_1 = arith.constant 0 : i32
    return %c0_i32, %c0_i32_0 : i32, i32
  }
  func.func @transform_6(%arg0: i32) -> (i32, i32) {
    %c0_i32 = arith.constant 0 : i32
    %c0_i32_0 = arith.constant 0 : i32
    %c0_i32_1 = arith.constant 0 : i32
    return %c0_i32, %c0_i32_0 : i32, i32
  }
  func.func @transform_7(%arg0: i32) -> (i32, i32) {
    %c0_i32 = arith.constant 0 : i32
    %c0_i32_0 = arith.constant 0 : i32
    %c0_i32_1 = arith.constant 0 : i32
    return %c0_i32, %c0_i32_0 : i32, i32
  }
  func.func @transform_8(%arg0: i32) -> (i32, i32) {
    %c0_i32 = arith.constant 0 : i32
    %c0_i32_0 = arith.constant 0 : i32
    %c0_i32_1 = arith.constant 0 : i32
    return %c0_i32, %c0_i32_0 : i32, i32
  }
  func.func @transform_9(%arg0: i32) -> (i32, i32) {
    %c0_i32 = arith.constant 0 : i32
    %c0_i32_0 = arith.constant 0 : i32
    %c0_i32_1 = arith.constant 0 : i32
    return %c0_i32, %c0_i32_0 : i32, i32
  }
  func.func @transform_10(%arg0: i32) -> (i32, i32) {
    %c0_i32 = arith.constant 0 : i32
    %c0_i32_0 = arith.constant 0 : i32
    %c0_i32_1 = arith.constant 0 : i32
    return %c0_i32, %c0_i32_0 : i32, i32
  }
}

module attributes {stable_mosaic.version = 11 : i64} {
  func.func @stream_w_kernel(%arg0: i32, %arg1: memref<1x512xbf16, #tpu.memory_space<vmem>>, %arg2: memref<512x128xbf16, #tpu.memory_space<vmem>>, %arg3: memref<1x128xf32, #tpu.memory_space<vmem>>, %arg4: memref<1x128xf32, #tpu.memory_space<vmem>>) attributes {dimension_semantics = [#tpu.dimension_semantics<parallel>], iteration_bounds = array<i64: 1>, scalar_prefetch = 0 : i64, scratch_operands = 0 : i64, tpu.core_type = #tpu.core_type<tc>, window_params = [{pipeline_mode = #tpu.pipeline_mode<synchronous>, transform_indices = @transform_0, window_bounds = array<i64: 1, 512>}, {transform_indices = @transform_1, window_bounds = array<i64: 512, 128>}, {transform_indices = @transform_2, window_bounds = array<i64: 1, 128>}, {transform_indices = @transform_3, window_bounds = array<i64: 1, 128>}]} {
    %c0 = arith.constant 0 : index
    %c0_0 = arith.constant 0 : index
    %0 = vector.load %arg1[%c0, %c0_0] : memref<1x512xbf16, #tpu.memory_space<vmem>>, vector<1x512xbf16>
    %c0_1 = arith.constant 0 : index
    %c0_2 = arith.constant 0 : index
    %1 = vector.load %arg2[%c0_1, %c0_2] : memref<512x128xbf16, #tpu.memory_space<vmem>>, vector<512x128xbf16>
    %cst = arith.constant dense<0.000000e+00> : vector<1x128xf32>
    %2 = tpu.matmul %0, %1, %cst {dimension_numbers = #tpu.dot_dimension_numbers<[1], [0], [0], [1], [0, 0, 1, 1], [], []>} : vector<1x512xbf16>, vector<512x128xbf16>, vector<1x128xf32> -> vector<1x128xf32>
    %c0_3 = arith.constant 0 : index
    %c0_4 = arith.constant 0 : index
    %3 = vector.load %arg3[%c0_3, %c0_4] : memref<1x128xf32, #tpu.memory_space<vmem>>, vector<1x128xf32>
    %4 = arith.addf %2, %3 : vector<1x128xf32>
    %c0_5 = arith.constant 0 : index
    %c0_6 = arith.constant 0 : index
    %5 = vector.load %arg4[%c0_5, %c0_6] : memref<1x128xf32, #tpu.memory_space<vmem>>, vector<1x128xf32>
    tpu.vector_store %arg4[%c0_5, %c0_6], %4 {strides = array<i32>} : memref<1x128xf32, #tpu.memory_space<vmem>>, vector<1x128xf32>,
    return
  }
  func.func @transform_0(%arg0: i32) -> (i32, i32) {
    %c0_i32 = arith.constant 0 : i32
    %c0_i32_0 = arith.constant 0 : i32
    %c0_i32_1 = arith.constant 0 : i32
    return %c0_i32, %c0_i32_0 : i32, i32
  }
  func.func @transform_1(%arg0: i32) -> (i32, i32) {
    %c0_i32 = arith.constant 0 : i32
    %c0_i32_0 = arith.constant 0 : i32
    return %c0_i32, %arg0 : i32, i32
  }
  func.func @transform_2(%arg0: i32) -> (i32, i32) {
    %c0_i32 = arith.constant 0 : i32
    %c0_i32_0 = arith.constant 0 : i32
    return %c0_i32, %arg0 : i32, i32
  }
  func.func @transform_3(%arg0: i32) -> (i32, i32) {
    %c0_i32 = arith.constant 0 : i32
    %c0_i32_0 = arith.constant 0 : i32
    return %c0_i32, %arg0 : i32, i32
  }
}

</mosaic_0001>

<llo_original>
// kernel: squeeze.3
$region0: #{squeeze.3}
  %s0 = inlined_call_operand.vmem [shape: f32[64], index: 0, kind: input, shape index: {}]
  %s1 = inlined_call_operand.vmem [shape: f32[16,4], index: 1, kind: output, shape index: {}]
  $region1: #{squeeze.3} parent=0
    #allocation0 [shape = 'u8[4096]{0}', space=vmem, size = 0x1000, scoped, tag = 'scoped mem for input reshape']
    %s3 = ssub.s32 2, 1
    %v4 = vld [vmem:[%s0] sm:%s3]
    %5 = vst [vmem:[#allocation0] sm:%s3] %v4
    %v6 = vld [vmem:[#allocation0] sm:$0x1]
    %vm7 = vcmask 31744
    %8 = vst.msk [vmem:[%s1] sm:$0x1] %vm7, %v6
    %v9 = vld [vmem:[#allocation0] sm:$0x1]
    %10 = vrot.lane.b32.xlu0 %v9, 124
    %v11 = vpop.permute.xlu0 %10
    %vm12 = vcmask 31744
    %s13 = scalar_lea.vmem %s1, 1
    %14 = vst.msk [vmem:[%s13] sm:$0x1] %vm12, %v11
    %v15 = vld [vmem:[#allocation0] sm:$0x1]
    %16 = vrot.lane.b32.xlu0 %v15, 120
    %v17 = vpop.permute.xlu0 %16
    %vm18 = vcmask 31744
    %s19 = scalar_lea.vmem %s1, 2
    %20 = vst.msk [vmem:[%s19] sm:$0x1] %vm18, %v17
    %v21 = vld [vmem:[#allocation0] sm:$0x1]
    %22 = vrot.lane.b32.xlu0 %v21, 116
    %v23 = vpop.permute.xlu0 %22
    %vm24 = vcmask 31744
    %s25 = scalar_lea.vmem %s1, 3
    %26 = vst.msk [vmem:[%s25] sm:$0x1] %vm24, %v23
    %v27 = vld [vmem:[#allocation0] sm:$0x1]
    %28 = vrot.lane.b32.xlu0 %v27, 112
    %v29 = vpop.permute.xlu0 %28
    %vm30 = vcmask 31744
    %s31 = scalar_lea.vmem %s1, 4
    %32 = vst.msk [vmem:[%s31] sm:$0x1] %vm30, %v29
    %v33 = vld [vmem:[#allocation0] sm:$0x1]
    %34 = vrot.lane.b32.xlu0 %v33, 108
    %v35 = vpop.permute.xlu0 %34
    %vm36 = vcmask 31744
    %s37 = scalar_lea.vmem %s1, 5
    %38 = vst.msk [vmem:[%s37] sm:$0x1] %vm36, %v35
    %v39 = vld [vmem:[#allocation0] sm:$0x1]
    %40 = vrot.lane.b32.xlu0 %v39, 104
    %v41 = vpop.permute.xlu0 %40
    %vm42 = vcmask 31744
    %s43 = scalar_lea.vmem %s1, 6
    %44 = vst.msk [vmem:[%s43] sm:$0x1] %vm42, %v41
    %v45 = vld [vmem:[#allocation0] sm:$0x1]
    %46 = vrot.lane.b32.xlu0 %v45, 100
    %v47 = vpop.permute.xlu0 %46
    %vm48 = vcmask 31744
    %s49 = scalar_lea.vmem %s1, 7
    %50 = vst.msk [vmem:[%s49] sm:$0x1] %vm48, %v47
    %v51 = vld [vmem:[#allocation0] sm:$0x1]
    %52 = vrot.lane.b32.xlu0 %v51, 96
    %v53 = vpop.permute.xlu0 %52
    %vm54 = vcmask 31744
    %s55 = scalar_lea.vmem %s1, 8
    %56 = vst.msk [vmem:[%s55] sm:$0x1] %vm54, %v53
    %v57 = vld [vmem:[#allocation0] sm:$0x1]
    %58 = vrot.lane.b32.xlu0 %v57, 92
    %v59 = vpop.permute.xlu0 %58
    %vm60 = vcmask 31744
    %s61 = scalar_lea.vmem %s1, 9
    %62 = vst.msk [vmem:[%s61] sm:$0x1] %vm60, %v59
    %v63 = vld [vmem:[#allocation0] sm:$0x1]
    %64 = vrot.lane.b32.xlu0 %v63, 88
    %v65 = vpop.permute.xlu0 %64
    %vm66 = vcmask 31744
    %s67 = scalar_lea.vmem %s1, 10
    %68 = vst.msk [vmem:[%s67] sm:$0x1] %vm66, %v65
    %v69 = vld [vmem:[#allocation0] sm:$0x1]
    %70 = vrot.lane.b32.xlu0 %v69, 84
    %v71 = vpop.permute.xlu0 %70
    %vm72 = vcmask 31744
    %s73 = scalar_lea.vmem %s1, 11
    %74 = vst.msk [vmem:[%s73] sm:$0x1] %vm72, %v71
    %v75 = vld [vmem:[#allocation0] sm:$0x1]
    %76 = vrot.lane.b32.xlu0 %v75, 80
    %v77 = vpop.permute.xlu0 %76
    %vm78 = vcmask 31744
    %s79 = scalar_lea.vmem %s1, 12
    %80 = vst.msk [vmem:[%s79] sm:$0x1] %vm78, %v77
    %v81 = vld [vmem:[#allocation0] sm:$0x1]
    %82 = vrot.lane.b32.xlu0 %v81, 76
    %v83 = vpop.permute.xlu0 %82
    %vm84 = vcmask 31744
    %s85 = scalar_lea.vmem %s1, 13
    %86 = vst.msk [vmem:[%s85] sm:$0x1] %vm84, %v83
    %v87 = vld [vmem:[#allocation0] sm:$0x1]
    %88 = vrot.lane.b32.xlu0 %v87, 72
    %v89 = vpop.permute.xlu0 %88
    %vm90 = vcmask 31744
    %s91 = scalar_lea.vmem %s1, 14
    %92 = vst.msk [vmem:[%s91] sm:$0x1] %vm90, %v89
    %v93 = vld [vmem:[#allocation0] sm:$0x1]
    %94 = vrot.lane.b32.xlu0 %v93, 68
    %v95 = vpop.permute.xlu0 %94
    %vm96 = vcmask 31744
    %s97 = scalar_lea.vmem %s1, 15
    %98 = vst.msk [vmem:[%s97] sm:$0x1] %vm96, %v95

// kernel: head_forward.3
$region0: #{head_forward.3}
  #allocation0 [shape = 'u32[]', space=smem, size = 0x4, offset = 0x4, fixed_abs, tag = 'smem constant byte address 0x4 - core index']
  #allocation1 [shape = 'u32[72,128]{1,0:T(1,128)}', space=vmem, size = 0x9000, scoped, tag = 'internal scratch']
  %s0 = inlined_call_operand.vmem [shape: bf16[1,512], index: 0, kind: input, shape index: {}]
  %s1 = inlined_call_operand.hbm [shape: bf16[512,128], index: 1, kind: input, shape index: {}]
  %s2 = inlined_call_operand.hbm [shape: f32[1,128], index: 2, kind: input, shape index: {}]
  %s3 = inlined_call_operand.vmem [shape: f32[1,128], index: 3, kind: output, shape index: {}]
  %s4 = sld [smem:[#allocation0]]
  $region30: #{head_forward.3} parent=0
    _
  %s6 = ssub.s32 1, %s4
  %s7 = scalar_select 0, %s6, %s4
  $region1: #{head_forward.3} parent=0
    #allocation2 [shape = 'u8[131072]{0}', space=vmem, size = 0x20000, scoped, tag = 'input window, operand 1, single buffered']
    #allocation3 [shape = 's32[1]{0}', space=sflag, size = 0x4, scoped, tag = 'scoped memory for head_forward.3']
    #allocation4 [shape = 'u8[512]{0}', space=vmem, size = 0x400, scoped, tag = 'input window, operand 2, single buffered']
    #allocation5 [shape = 's32[1]{0}', space=sflag, size = 0x4, scoped, tag = 'scoped memory for head_forward.3']
    %8 = vsyncpa [#allocation3], 0
    %9 = vsyncpa [#allocation5], 0
    // Predicated region
    $region2: #{head_forward.3} parent=1 // pred_check
      _
    $region3: #{head_forward.3} parent=1 // pred_check_branch
      %11 = sbr.rel (0) target = $region5
    $region4: #{head_forward.3} parent=1 // pred_region
      _
    $region5: #{head_forward.3} parent=1 // pred_fallthru
      _
    // Predicated region
    $region6: #{head_forward.3} parent=1 // pred_check
      _
    $region7: #{head_forward.3} parent=1 // pred_check_branch
      %13 = sbr.rel (0) target = $region9
    $region8: #{head_forward.3} parent=1 // pred_region
      %15 = vsyncadd [#allocation3], 0
      %s16 = sshll.u32 %s1, 4
      %s17 = int_to_ptr.hbm [resolvable:$true] %s16
      %s18 = sshll.u32 [#allocation2], 4
      %s19 = int_to_ptr.vmem [resolvable:$true] %s18
      %24 = dma.hbm_to_vmem [thread:$0]  %s17, 4096, %s19, [#allocation3], 64, 64, 4
    $region9: #{head_forward.3} parent=1 // pred_fallthru
      _
    // Predicated region
    $region10: #{head_forward.3} parent=1 // pred_check
      _
    $region11: #{head_forward.3} parent=1 // pred_check_branch
      %26 = sbr.rel (0) target = $region13
    $region12: #{head_forward.3} parent=1 // pred_region
      %28 = vsyncadd [#allocation5], 0
      %s30 = sshll.u32 %s2, 4
      %s31 = int_to_ptr.hbm [resolvable:$true] %s30
      %s32 = sshll.u32 [#allocation4], 4
      %s33 = int_to_ptr.vmem [resolvable:$true] %s32
      %35 = dma.hbm_to_vmem [thread:$0]  %s31, 16, %s33, [#allocation5]
    $region13: #{head_forward.3} parent=1 // pred_fallthru
      _
    // Predicated region
    $region14: #{head_forward.3} parent=1 // pred_check
      _
    $region15: #{head_forward.3} parent=1 // pred_check_branch
      %37 = sbr.rel (0) target = $region17
    $region16: #{head_forward.3} parent=1 // pred_region
      %39 = dma.done [#allocation3], 4096
    $region17: #{head_forward.3} parent=1 // pred_fallthru
      _
    // Predicated region
    $region18: #{head_forward.3} parent=1 // pred_check
      _
    $region19: #{head_forward.3} parent=1 // pred_check_branch
      %41 = sbr.rel (0) target = $region21
    $region20: #{head_forward.3} parent=1 // pred_region
      %43 = dma.done [#allocation5], 16
    $region21: #{head_forward.3} parent=1 // pred_fallthru
      _
    %v44 = vld [vmem:[%s0] sm:$0xf]
    %v45 = vld [vmem:[#allocation2] sm:$0xf]
    %v46 = vld [vmem:[#allocation2 + $0x4] sm:$0xf]
    %v47 = vld [vmem:[#allocation2 + $0x8] sm:$0xf]
    %v48 = vld [vmem:[#allocation2 + $0xc] sm:$0xf]
    %v49 = vld [vmem:[#allocation2 + $0x10] sm:$0xf]
    %v50 = vld [vmem:[#allocation2 + $0x14] sm:$0xf]
    %v51 = vld [vmem:[#allocation2 + $0x18] sm:$0xf]
    %v52 = vld [vmem:[#allocation2 + $0x1c] sm:$0xf]
    %v53 = vld [vmem:[#allocation2 + $0x20] sm:$0xf]
    %v54 = vld [vmem:[#allocation2 + $0x24] sm:$0xf]
    %v55 = vld [vmem:[#allocation2 + $0x28] sm:$0xf]
    %v56 = vld [vmem:[#allocation2 + $0x2c] sm:$0xf]
    %v57 = vld [vmem:[#allocation2 + $0x30] sm:$0xf]
    %v58 = vld [vmem:[#allocation2 + $0x34] sm:$0xf]
    %v59 = vld [vmem:[#allocation2 + $0x38] sm:$0xf]
    %v60 = vld [vmem:[#allocation2 + $0x3c] sm:$0xf]
    %v61 = vld [vmem:[#allocation2 + $0x40] sm:$0xf]
    %v62 = vld [vmem:[#allocation2 + $0x44] sm:$0xf]
    %v63 = vld [vmem:[#allocation2 + $0x48] sm:$0xf]
    %v64 = vld [vmem:[#allocation2 + $0x4c] sm:$0xf]
    %v65 = vld [vmem:[#allocation2 + $0x50] sm:$0xf]
    %v66 = vld [vmem:[#allocation2 + $0x54] sm:$0xf]
    %v67 = vld [vmem:[#allocation2 + $0x58] sm:$0xf]
    %v68 = vld [vmem:[#allocation2 + $0x5c] sm:$0xf]
    %v69 = vld [vmem:[#allocation2 + $0x60] sm:$0xf]
    %v70 = vld [vmem:[#allocation2 + $0x64] sm:$0xf]
    %v71 = vld [vmem:[#allocation2 + $0x68] sm:$0xf]
    %v72 = vld [vmem:[#allocation2 + $0x6c] sm:$0xf]
    %v73 = vld [vmem:[#allocation2 + $0x70] sm:$0xf]
    %v74 = vld [vmem:[#allocation2 + $0x74] sm:$0xf]
    %v75 = vld [vmem:[#allocation2 + $0x78] sm:$0xf]
    %v76 = vld [vmem:[#allocation2 + $0x7c] sm:$0xf]
    %v77 = vld [vmem:[#allocation2 + $0x80] sm:$0xf]
    %v78 = vld [vmem:[#allocation2 + $0x84] sm:$0xf]
    %v79 = vld [vmem:[#allocation2 + $0x88] sm:$0xf]
    %v80 = vld [vmem:[#allocation2 + $0x8c] sm:$0xf]
    %v81 = vld [vmem:[#allocation2 + $0x90] sm:$0xf]
    %v82 = vld [vmem:[#allocation2 + $0x94] sm:$0xf]
    %v83 = vld [vmem:[#allocation2 + $0x98] sm:$0xf]
    %v84 = vld [vmem:[#allocation2 + $0x9c] sm:$0xf]
    %v85 = vld [vmem:[#allocation2 + $0xa0] sm:$0xf]
    %v86 = vld [vmem:[#allocation2 + $0xa4] sm:$0xf]
    %v87 = vld [vmem:[#allocation2 + $0xa8] sm:$0xf]
    %v88 = vld [vmem:[#allocation2 + $0xac] sm:$0xf]
    %v89 = vld [vmem:[#allocation2 + $0xb0] sm:$0xf]
    %v90 = vld [vmem:[#allocation2 + $0xb4] sm:$0xf]
    %v91 = vld [vmem:[#allocation2 + $0xb8] sm:$0xf]
    %v92 = vld [vmem:[#allocation2 + $0xbc] sm:$0xf]
    %v93 = vld [vmem:[#allocation2 + $0xc0] sm:$0xf]
    %v94 = vld [vmem:[#allocation2 + $0xc4] sm:$0xf]
    %v95 = vld [vmem:[#allocation2 + $0xc8] sm:$0xf]
    %v96 = vld [vmem:[#allocation2 + $0xcc] sm:$0xf]
    %v97 = vld [vmem:[#allocation2 + $0xd0] sm:$0xf]
    %v98 = vld [vmem:[#allocation2 + $0xd4] sm:$0xf]
    %v99 = vld [vmem:[#allocation2 + $0xd8] sm:$0xf]
    %v100 = vld [vmem:[#allocation2 + $0xdc] sm:$0xf]
    %v101 = vld [vmem:[#allocation2 + $0xe0] sm:$0xf]
    %v102 = vld [vmem:[#allocation2 + $0xe4] sm:$0xf]
    %v103 = vld [vmem:[#allocation2 + $0xe8] sm:$0xf]
    %v104 = vld [vmem:[#allocation2 + $0xec] sm:$0xf]
    %v105 = vld [vmem:[#allocation2 + $0xf0] sm:$0xf]
    %v106 = vld [vmem:[#allocation2 + $0xf4] sm:$0xf]
    %v107 = vld [vmem:[#allocation2 + $0xf8] sm:$0xf]
    %v108 = vld [vmem:[#allocation2 + $0xfc] sm:$0xf]
    %v109 = vld [vmem:[#allocation4] sm:$0x1]
    %111 = vst [vmem:[#allocation1] ss:$9 sm:$0xff] %v44
    %v112 = vld [vmem:[#allocation1] sm:$0xff]
    %v113 = vld [vmem:[#allocation1 + $0x9] sm:$0xff]
    %v114 = vld [vmem:[#allocation1 + $0x12] sm:$0xff]
    %v115 = vld [vmem:[#allocation1 + $0x1b] sm:$0xff]
    %v184 = vunpack.c.l.b16 %v45
    %v185 = vunpack.c.l.b16 %v46
    %v186 = vunpack.c.l.b16 %v47
    %v187 = vunpack.c.l.b16 %v48
    %v188 = vunpack.c.l.b16 %v49
    %v189 = vunpack.c.l.b16 %v50
    %v190 = vunpack.c.l.b16 %v51
    %v191 = vunpack.c.l.b16 %v52
    %v192 = vunpack.c.l.b16 %v53
    %v193 = vunpack.c.l.b16 %v54
    %v194 = vunpack.c.l.b16 %v55
    %v195 = vunpack.c.l.b16 %v56
    %v196 = vunpack.c.l.b16 %v57
    %v197 = vunpack.c.l.b16 %v58
    %v198 = vunpack.c.l.b16 %v59
    %v199 = vunpack.c.l.b16 %v60
    %v200 = vunpack.c.l.b16 %v61
    %v201 = vunpack.c.l.b16 %v62
    %v202 = vunpack.c.l.b16 %v63
    %v203 = vunpack.c.l.b16 %v64
    %v204 = vunpack.c.l.b16 %v65
    %v205 = vunpack.c.l.b16 %v66
    %v206 = vunpack.c.l.b16 %v67
    %v207 = vunpack.c.l.b16 %v68
    %v208 = vunpack.c.l.b16 %v69
    %v209 = vunpack.c.l.b16 %v70
    %v210 = vunpack.c.l.b16 %v71
    %v211 = vunpack.c.l.b16 %v72
    %v212 = vunpack.c.l.b16 %v73
    %v213 = vunpack.c.l.b16 %v74
    %v214 = vunpack.c.l.b16 %v75
    %v215 = vunpack.c.l.b16 %v76
    %v216 = vunpack.c.l.b16 %v77
    %v217 = vunpack.c.l.b16 %v78
    %v218 = vunpack.c.l.b16 %v79
    %v219 = vunpack.c.l.b16 %v80
    %v220 = vunpack.c.l.b16 %v81
    %v221 = vunpack.c.l.b16 %v82
    %v222 = vunpack.c.l.b16 %v83
    %v223 = vunpack.c.l.b16 %v84
    %v224 = vunpack.c.l.b16 %v85
    %v225 = vunpack.c.l.b16 %v86
    %v226 = vunpack.c.l.b16 %v87
    %v227 = vunpack.c.l.b16 %v88
    %v228 = vunpack.c.l.b16 %v89
    %v229 = vunpack.c.l.b16 %v90
    %v230 = vunpack.c.l.b16 %v91
    %v231 = vunpack.c.l.b16 %v92
    %v232 = vunpack.c.l.b16 %v93
    %v233 = vunpack.c.l.b16 %v94
    %v234 = vunpack.c.l.b16 %v95
    %v235 = vunpack.c.l.b16 %v96
    %v236 = vunpack.c.l.b16 %v97
    %v237 = vunpack.c.l.b16 %v98
    %v238 = vunpack.c.l.b16 %v99
    %v239 = vunpack.c.l.b16 %v100
    %v240 = vunpack.c.l.b16 %v101
    %v241 = vunpack.c.l.b16 %v102
    %v242 = vunpack.c.l.b16 %v103
    %v243 = vunpack.c.l.b16 %v104
    %v244 = vunpack.c.l.b16 %v105
    %v245 = vunpack.c.l.b16 %v106
    %v246 = vunpack.c.l.b16 %v107
    %v247 = vunpack.c.l.b16 %v108
    %v248 = vpack.c.b16 %v185, %v184
    %v249 = vpack.c.b16 %v187, %v186
    %v250 = vpack.c.b16 %v189, %v188
    %v251 = vpack.c.b16 %v191, %v190
    %v252 = vpack.c.b16 %v193, %v192
    %v253 = vpack.c.b16 %v195, %v194
    %v254 = vpack.c.b16 %v197, %v196
    %v255 = vpack.c.b16 %v199, %v198
    %v256 = vpack.c.b16 %v201, %v200
    %v257 = vpack.c.b16 %v203, %v202
    %v258 = vpack.c.b16 %v205, %v204
    %v259 = vpack.c.b16 %v207, %v206
    %v260 = vpack.c.b16 %v209, %v208
    %v261 = vpack.c.b16 %v211, %v210
    %v262 = vpack.c.b16 %v213, %v212
    %v263 = vpack.c.b16 %v215, %v214
    %v264 = vpack.c.b16 %v217, %v216
    %v265 = vpack.c.b16 %v219, %v218
    %v266 = vpack.c.b16 %v221, %v220
    %v267 = vpack.c.b16 %v223, %v222
    %v268 = vpack.c.b16 %v225, %v224
    %v269 = vpack.c.b16 %v227, %v226
    %v270 = vpack.c.b16 %v229, %v228
    %v271 = vpack.c.b16 %v231, %v230
    %v272 = vpack.c.b16 %v233, %v232
    %v273 = vpack.c.b16 %v235, %v234
    %v274 = vpack.c.b16 %v237, %v236
    %v275 = vpack.c.b16 %v239, %v238
    %v276 = vpack.c.b16 %v241, %v240
    %v277 = vpack.c.b16 %v243, %v242
    %v278 = vpack.c.b16 %v245, %v244
    %v279 = vpack.c.b16 %v247, %v246
    %312 = vmatpush.bf16.msra.mxu0 %v255
    %313 = vmatpush.bf16.msra.mxu0 %v254
    %314 = vmatpush.bf16.msra.mxu0 %v253
    %315 = vmatpush.bf16.msra.mxu0 %v252
    %316 = vmatpush.bf16.msra.mxu0 %v251
    %317 = vmatpush.bf16.msra.mxu0 %v250
    %318 = vmatpush.bf16.msra.mxu0 %v249
    %319 = vmatpush.bf16.msra.mxu0 %v248
    %320 = vmatmul.bf16.gmra.mxu0 %v112
    %v321 = vpop.f32.mrf.mxu0
    %v322 = vadd.f32 %v109, %v321
    %v323 = vpop.f32.mrf.mxu0
    %324 = vdwg.mxu0
    %325 = vmatpush.bf16.msra.mxu0 %v263
    %326 = vmatpush.bf16.msra.mxu0 %v262
    %327 = vmatpush.bf16.msra.mxu0 %v261
    %328 = vmatpush.bf16.msra.mxu0 %v260
    %329 = vmatpush.bf16.msra.mxu0 %v259
    %330 = vmatpush.bf16.msra.mxu0 %v258
    %331 = vmatpush.bf16.msra.mxu0 %v257
    %332 = vmatpush.bf16.msra.mxu0 %v256
    %333 = vmatmul.bf16.gmra.mxu0 %v113
    %v334 = vpop.f32.mrf.mxu0
    %v335 = vadd.f32 %v322, %v334
    %v336 = vpop.f32.mrf.mxu0
    %337 = vdwg.mxu0
    %338 = vmatpush.bf16.msra.mxu0 %v271
    %339 = vmatpush.bf16.msra.mxu0 %v270
    %340 = vmatpush.bf16.msra.mxu0 %v269
    %341 = vmatpush.bf16.msra.mxu0 %v268
    %342 = vmatpush.bf16.msra.mxu0 %v267
    %343 = vmatpush.bf16.msra.mxu0 %v266
    %344 = vmatpush.bf16.msra.mxu0 %v265
    %345 = vmatpush.bf16.msra.mxu0 %v264
    %346 = vmatmul.bf16.gmra.mxu0 %v114
    %v347 = vpop.f32.mrf.mxu0
    %v348 = vadd.f32 %v335, %v347
    %v349 = vpop.f32.mrf.mxu0
    %350 = vdwg.mxu0
    %351 = vmatpush.bf16.msra.mxu0 %v279
    %352 = vmatpush.bf16.msra.mxu0 %v278
    %353 = vmatpush.bf16.msra.mxu0 %v277
    %354 = vmatpush.bf16.msra.mxu0 %v276
    %355 = vmatpush.bf16.msra.mxu0 %v275
    %356 = vmatpush.bf16.msra.mxu0 %v274
    %357 = vmatpush.bf16.msra.mxu0 %v273
    %358 = vmatpush.bf16.msra.mxu0 %v272
    %359 = vmatmul.bf16.gmra.mxu0 %v115
    %v360 = vpop.f32.mrf.mxu0
    %v361 = vadd.f32 %v348, %v360
    %v362 = vpop.f32.mrf.mxu0
    %363 = vdwg.mxu0
    %364 = vst [vmem:[%s3] sm:$0x1] %v361
    // Predicated region
    $region22: #{head_forward.3} parent=1 // pred_check
      _
    $region23: #{head_forward.3} parent=1 // pred_check_branch
      %366 = sbr.rel (0) target = $region25
    $region24: #{head_forward.3} parent=1 // pred_region
      _
    $region25: #{head_forward.3} parent=1 // pred_fallthru
      _
    // Predicated region
    $region26: #{head_forward.3} parent=1 // pred_check
      _
    $region27: #{head_forward.3} parent=1 // pred_check_branch
      %368 = sbr.rel (0) target = $region29
    $region28: #{head_forward.3} parent=1 // pred_region
      _
    $region29: #{head_forward.3} parent=1 // pred_fallthru
      _
    %369 = vsyncpa [#allocation3], 1
    %370 = vsyncpa [#allocation5], 1

// kernel: head_forward.2
$region0: #{head_forward.2}
  #allocation0 [shape = 'u32[]', space=smem, size = 0x4, offset = 0x4, fixed_abs, tag = 'smem constant byte address 0x4 - core index']
  #allocation1 [shape = 'u32[72,128]{1,0:T(1,128)}', space=vmem, size = 0x9000, scoped, tag = 'internal scratch']
  %s0 = inlined_call_operand.hbm [shape: f32[1,32], index: 0, kind: input, shape index: {}]
  %s1 = inlined_call_operand.hbm [shape: bf16[32,512], index: 1, kind: input, shape index: {}]
  %s2 = inlined_call_operand.hbm [shape: f32[1,512], index: 2, kind: input, shape index: {}]
  %s3 = inlined_call_operand.hbm [shape: bf16[512,512], index: 3, kind: input, shape index: {}]
  %s4 = inlined_call_operand.hbm [shape: f32[1,512], index: 4, kind: input, shape index: {}]
  %s5 = inlined_call_operand.hbm [shape: bf16[512,1536], index: 5, kind: input, shape index: {}]
  %s6 = inlined_call_operand.hbm [shape: f32[1,1536], index: 6, kind: input, shape index: {}]
  %s7 = inlined_call_operand.hbm [shape: bf16[1024,128], index: 7, kind: input, shape index: {}]
  %s8 = inlined_call_operand.hbm [shape: f32[1,128], index: 8, kind: input, shape index: {}]
  %s9 = inlined_call_operand.vmem [shape: bf16[1,512], index: 9, kind: output, shape index: {0}]
  %s10 = inlined_call_operand.vmem [shape: f32[1,128], index: 10, kind: output, shape index: {1}]
  %11 = xla_tuple %s9, %s10
  %s12 = sld [smem:[#allocation0]]
  $region90: #{head_forward.2} parent=0
    _
  %s14 = ssub.s32 1, %s12
  %s15 = scalar_select 0, %s14, %s12
  $region1: #{head_forward.2} parent=0
    #allocation2 [shape = 'u8[512]{0}', space=vmem, size = 0x400, scoped, tag = 'input window, operand 0, single buffered']
    #allocation3 [shape = 's32[1]{0}', space=sflag, size = 0x4, scoped, tag = 'scoped memory for head_forward.2']
    #allocation4 [shape = 'u8[32768]{0}', space=vmem, size = 0x8000, scoped, tag = 'input window, operand 1, single buffered']
    #allocation5 [shape = 's32[1]{0}', space=sflag, size = 0x4, scoped, tag = 'scoped memory for head_forward.2']
    #allocation6 [shape = 'u8[2048]{0}', space=vmem, size = 0x800, scoped, tag = 'input window, operand 2, single buffered']
    #allocation7 [shape = 'u8[524288]{0}', space=vmem, size = 0x80000, scoped, tag = 'input window, operand 3, single buffered']
    #allocation8 [shape = 's32[1]{0}', space=sflag, size = 0x4, scoped, tag = 'scoped memory for head_forward.2']
    #allocation9 [shape = 'u8[2048]{0}', space=vmem, size = 0x800, scoped, tag = 'input window, operand 4, single buffered']
    #allocation10 [shape = 'u8[1572864]{0}', space=vmem, size = 0x180000, scoped, tag = 'input window, operand 5, single buffered']
    #allocation11 [shape = 's32[1]{0}', space=sflag, size = 0x4, scoped, tag = 'scoped memory for head_forward.2']
    #allocation12 [shape = 'u8[6144]{0}', space=vmem, size = 0x1800, scoped, tag = 'input window, operand 6, single buffered']
    #allocation13 [shape = 'u8[262144]{0}', space=vmem, size = 0x40000, scoped, tag = 'input window, operand 7, single buffered']
    #allocation14 [shape = 's32[1]{0}', space=sflag, size = 0x4, scoped, tag = 'scoped memory for head_forward.2']
    #allocation15 [shape = 'u8[512]{0}', space=vmem, size = 0x400, scoped, tag = 'input window, operand 8, single buffered']
    %16 = vsyncpa [#allocation3], 0
    %17 = vsyncpa [#allocation5], 0
    %18 = vsyncpa [#allocation8], 0
    %19 = vsyncpa [#allocation11], 0
    %20 = vsyncpa [#allocation14], 0
    // Predicated region
    $region2: #{head_forward.2} parent=1 // pred_check
      _
    $region3: #{head_forward.2} parent=1 // pred_check_branch
      %22 = sbr.rel (0) target = $region5
    $region4: #{head_forward.2} parent=1 // pred_region
      %24 = vsyncadd [#allocation3], 0
      %s26 = sshll.u32 %s0, 4
      %s27 = int_to_ptr.hbm [resolvable:$true] %s26
      %s28 = sshll.u32 [#allocation2], 4
      %s29 = int_to_ptr.vmem [resolvable:$true] %s28
      %31 = dma.hbm_to_vmem [thread:$0]  %s27, 16, %s29, [#allocation3]
    $region5: #{head_forward.2} parent=1 // pred_fallthru
      _
    // Predicated region
    $region6: #{head_forward.2} parent=1 // pred_check
      _
    $region7: #{head_forward.2} parent=1 // pred_check_branch
      %33 = sbr.rel (0) target = $region9
    $region8: #{head_forward.2} parent=1 // pred_region
      %35 = vsyncadd [#allocation5], 0
      %s36 = sshll.u32 %s1, 4
      %s37 = int_to_ptr.hbm [resolvable:$true] %s36
      %s38 = sshll.u32 [#allocation4], 4
      %s39 = int_to_ptr.vmem [resolvable:$true] %s38
      %44 = dma.hbm_to_vmem [thread:$0]  %s37, 1024, %s39, [#allocation5], 256, 256, 16
    $region9: #{head_forward.2} parent=1 // pred_fallthru
      _
    // Predicated region
    $region10: #{head_forward.2} parent=1 // pred_check
      _
    $region11: #{head_forward.2} parent=1 // pred_check_branch
      %46 = sbr.rel (0) target = $region13
    $region12: #{head_forward.2} parent=1 // pred_region
      %48 = vsyncadd [#allocation5], 0
      %s50 = sshll.u32 %s2, 4
      %s51 = int_to_ptr.hbm [resolvable:$true] %s50
      %s52 = sshll.u32 [#allocation6], 4
      %s53 = int_to_ptr.vmem [resolvable:$true] %s52
      %55 = dma.hbm_to_vmem [thread:$0]  %s51, 64, %s53, [#allocation5]
    $region13: #{head_forward.2} parent=1 // pred_fallthru
      _
    // Predicated region
    $region14: #{head_forward.2} parent=1 // pred_check
      _
    $region15: #{head_forward.2} parent=1 // pred_check_branch
      %57 = sbr.rel (0) target = $region17
    $region16: #{head_forward.2} parent=1 // pred_region
      %59 = vsyncadd [#allocation8], 0
      %s60 = sshll.u32 %s3, 4
      %s61 = int_to_ptr.hbm [resolvable:$true] %s60
      %s62 = sshll.u32 [#allocation7], 4
      %s63 = int_to_ptr.vmem [resolvable:$true] %s62
      %68 = dma.hbm_to_vmem [thread:$0]  %s61, 16384, %s63, [#allocation8], 256, 256, 16
    $region17: #{head_forward.2} parent=1 // pred_fallthru
      _
    // Predicated region
    $region18: #{head_forward.2} parent=1 // pred_check
      _
    $region19: #{head_forward.2} parent=1 // pred_check_branch
      %70 = sbr.rel (0) target = $region21
    $region20: #{head_forward.2} parent=1 // pred_region
      %72 = vsyncadd [#allocation8], 0
      %s74 = sshll.u32 %s4, 4
      %s75 = int_to_ptr.hbm [resolvable:$true] %s74
      %s76 = sshll.u32 [#allocation9], 4
      %s77 = int_to_ptr.vmem [resolvable:$true] %s76
      %79 = dma.hbm_to_vmem [thread:$0]  %s75, 64, %s77, [#allocation8]
    $region21: #{head_forward.2} parent=1 // pred_fallthru
      _
    // Predicated region
    $region22: #{head_forward.2} parent=1 // pred_check
      _
    $region23: #{head_forward.2} parent=1 // pred_check_branch
      %81 = sbr.rel (0) target = $region25
    $region24: #{head_forward.2} parent=1 // pred_region
      %83 = vsyncadd [#allocation11], 0
      %s84 = sshll.u32 %s5, 4
      %s85 = int_to_ptr.hbm [resolvable:$true] %s84
      %s86 = sshll.u32 [#allocation10], 4
      %s87 = int_to_ptr.vmem [resolvable:$true] %s86
      %92 = dma.hbm_to_vmem [thread:$0]  %s85, 49152, %s87, [#allocation11], 768, 768, 48
    $region25: #{head_forward.2} parent=1 // pred_fallthru
      _
    // Predicated region
    $region26: #{head_forward.2} parent=1 // pred_check
      _
    $region27: #{head_forward.2} parent=1 // pred_check_branch
      %94 = sbr.rel (0) target = $region29
    $region28: #{head_forward.2} parent=1 // pred_region
      %96 = vsyncadd [#allocation11], 0
      %s98 = sshll.u32 %s6, 4
      %s99 = int_to_ptr.hbm [resolvable:$true] %s98
      %s100 = sshll.u32 [#allocation12], 4
      %s101 = int_to_ptr.vmem [resolvable:$true] %s100
      %103 = dma.hbm_to_vmem [thread:$0]  %s99, 192, %s101, [#allocation11]
    $region29: #{head_forward.2} parent=1 // pred_fallthru
      _
    // Predicated region
    $region30: #{head_forward.2} parent=1 // pred_check
      _
    $region31: #{head_forward.2} parent=1 // pred_check_branch
      %105 = sbr.rel (0) target = $region33
    $region32: #{head_forward.2} parent=1 // pred_region
      %107 = vsyncadd [#allocation14], 0
      %s108 = sshll.u32 %s7, 4
      %s109 = int_to_ptr.hbm [resolvable:$true] %s108
      %s110 = sshll.u32 [#allocation13], 4
      %s111 = int_to_ptr.vmem [resolvable:$true] %s110
      %116 = dma.hbm_to_vmem [thread:$0]  %s109, 8192, %s111, [#allocation14], 64, 64, 4
    $region33: #{head_forward.2} parent=1 // pred_fallthru
      _
    // Predicated region
    $region34: #{head_forward.2} parent=1 // pred_check
      _
    $region35: #{head_forward.2} parent=1 // pred_check_branch
      %118 = sbr.rel (0) target = $region37
    $region36: #{head_forward.2} parent=1 // pred_region
      %120 = vsyncadd [#allocation14], 0
      %s122 = sshll.u32 %s8, 4
      %s123 = int_to_ptr.hbm [resolvable:$true] %s122
      %s124 = sshll.u32 [#allocation15], 4
      %s125 = int_to_ptr.vmem [resolvable:$true] %s124
      %127 = dma.hbm_to_vmem [thread:$0]  %s123, 16, %s125, [#allocation14]
    $region37: #{head_forward.2} parent=1 // pred_fallthru
      _
    // Predicated region
    $region38: #{head_forward.2} parent=1 // pred_check
      _
    $region39: #{head_forward.2} parent=1 // pred_check_branch
      %129 = sbr.rel (0) target = $region41
    $region40: #{head_forward.2} parent=1 // pred_region
      %131 = dma.done [#allocation3], 16
    $region41: #{head_forward.2} parent=1 // pred_fallthru
      _
    // Predicated region
    $region42: #{head_forward.2} parent=1 // pred_check
      _
    $region43: #{head_forward.2} parent=1 // pred_check_branch
      %133 = sbr.rel (0) target = $region45
    $region44: #{head_forward.2} parent=1 // pred_region
      %135 = dma.done [#allocation5], 1024
    $region45: #{head_forward.2} parent=1 // pred_fallthru
      _
    // Predicated region
    $region46: #{head_forward.2} parent=1 // pred_check
      _
    $region47: #{head_forward.2} parent=1 // pred_check_branch
      %137 = sbr.rel (0) target = $region49
    $region48: #{head_forward.2} parent=1 // pred_region
      %139 = dma.done [#allocation5], 64
    $region49: #{head_forward.2} parent=1 // pred_fallthru
      _
    // Predicated region
    $region50: #{head_forward.2} parent=1 // pred_check
      _
    $region51: #{head_forward.2} parent=1 // pred_check_branch
      %141 = sbr.rel (0) target = $region53
    $region52: #{head_forward.2} parent=1 // pred_region
      %143 = dma.done [#allocation8], 16384
    $region53: #{head_forward.2} parent=1 // pred_fallthru
      _
    // Predicated region
    $region54: #{head_forward.2} parent=1 // pred_check
      _
    $region55: #{head_forward.2} parent=1 // pred_check_branch
      %145 = sbr.rel (0) target = $region57
    $region56: #{head_forward.2} parent=1 // pred_region
      %147 = dma.done [#allocation8], 64
    $region57: #{head_forward.2} parent=1 // pred_fallthru
      _
    // Predicated region
    $region58: #{head_forward.2} parent=1 // pred_check
      _
    $region59: #{head_forward.2} parent=1 // pred_check_branch
      %149 = sbr.rel (0) target = $region61
    $region60: #{head_forward.2} parent=1 // pred_region
      %151 = dma.done [#allocation11], 49152
    $region61: #{head_forward.2} parent=1 // pred_fallthru
      _
    // Predicated region
    $region62: #{head_forward.2} parent=1 // pred_check
      _
    $region63: #{head_forward.2} parent=1 // pred_check_branch
      %153 = sbr.rel (0) target = $region65
    $region64: #{head_forward.2} parent=1 // pred_region
      %155 = dma.done [#allocation11], 192
    $region65: #{head_forward.2} parent=1 // pred_fallthru
      _
    // Predicated region
    $region66: #{head_forward.2} parent=1 // pred_check
      _
    $region67: #{head_forward.2} parent=1 // pred_check_branch
      %157 = sbr.rel (0) target = $region69
    $region68: #{head_forward.2} parent=1 // pred_region
      %159 = dma.done [#allocation14], 8192
    $region69: #{head_forward.2} parent=1 // pred_fallthru
      _
    // Predicated region
    $region70: #{head_forward.2} parent=1 // pred_check
      _
    $region71: #{head_forward.2} parent=1 // pred_check_branch
      %161 = sbr.rel (0) target = $region73
    $region72: #{head_forward.2} parent=1 // pred_region
      %163 = dma.done [#allocation14], 16
    $region73: #{head_forward.2} parent=1 // pred_fallthru
      _
    %v165 = vld [vmem:[#allocation2] sm:$0x1]
    %v166 = vpack.c.bf16 %v165, %v165
    %v167 = vld [vmem:[#allocation4] sm:$0xff]
    %v168 = vld [vmem:[#allocation4 + $0x8] sm:$0xff]
    %v169 = vld [vmem:[#allocation4 + $0x10] sm:$0xff]
    %v170 = vld [vmem:[#allocation4 + $0x18] sm:$0xff]
    %v171 = vld [vmem:[#allocation4 + $0x20] sm:$0xff]
    %v172 = vld [vmem:[#allocation4 + $0x28] sm:$0xff]
    %v173 = vld [vmem:[#allocation4 + $0x30] sm:$0xff]
    %v174 = vld [vmem:[#allocation4 + $0x38] sm:$0xff]
    %v175 = vld [vmem:[#allocation6] sm:$0xf]
    %v184 = vunpack.c.l.b16 %v167
    %v185 = vunpack.c.h.b16 %v167
    %v186 = vunpack.c.l.b16 %v168
    %v187 = vunpack.c.h.b16 %v168
    %v188 = vunpack.c.l.b16 %v169
    %v189 = vunpack.c.h.b16 %v169
    %v190 = vunpack.c.l.b16 %v170
    %v191 = vunpack.c.h.b16 %v170
    %v192 = vunpack.c.l.b16 %v171
    %v193 = vunpack.c.h.b16 %v171
    %v194 = vunpack.c.l.b16 %v172
    %v195 = vunpack.c.h.b16 %v172
    %v196 = vunpack.c.l.b16 %v173
    %v197 = vunpack.c.h.b16 %v173
    %v198 = vunpack.c.l.b16 %v174
    %v199 = vunpack.c.h.b16 %v174
    %v200 = vpack.c.b16 %v188, %v184
    %v201 = vpack.c.b16 %v189, %v185
    %v202 = vpack.c.b16 %v190, %v186
    %v203 = vpack.c.b16 %v191, %v187
    %v204 = vpack.c.b16 %v196, %v192
    %v205 = vpack.c.b16 %v197, %v193
    %v206 = vpack.c.b16 %v198, %v194
    %v207 = vpack.c.b16 %v199, %v195
    %v217 = vperm.slane %v175, 0
    %v218 = vperm.slane %v175, 1
    %v219 = vperm.slane %v175, 2
    %v220 = vperm.slane %v175, 3
    %vm225 = vcmask 261120
    %v227 = vsel %vm225, %v166, 0
    %229 = vmatpush.bf16.msra.mxu0 0
    %230 = vmatpush.bf16.msra.mxu0 0
    %231 = vmatpush.bf16.msra.mxu0 0
    %232 = vmatpush.bf16.msra.mxu0 0
    %233 = vmatpush.bf16.msra.mxu0 0
    %234 = vmatpush.bf16.msra.mxu0 0
    %235 = vmatpush.bf16.msra.mxu0 %v204
    %236 = vmatpush.bf16.msra.mxu0 %v200
    %237 = vmatmul.bf16.gmra.mxu0 %v227
    %v238 = vpop.f32.mrf.mxu0
    %v239 = vadd.f32 %v217, %v238
    %v240 = vpop.f32.mrf.mxu0
    %241 = vdwg.mxu0
    %242 = vmatpush.bf16.msra.mxu0 0
    %243 = vmatpush.bf16.msra.mxu0 0
    %244 = vmatpush.bf16.msra.mxu0 0
    %245 = vmatpush.bf16.msra.mxu0 0
    %246 = vmatpush.bf16.msra.mxu0 0
    %247 = vmatpush.bf16.msra.mxu0 0
    %248 = vmatpush.bf16.msra.mxu0 %v205
    %249 = vmatpush.bf16.msra.mxu0 %v201
    %250 = vmatmul.bf16.gmra.mxu0 %v227
    %v251 = vpop.f32.mrf.mxu0
    %v252 = vadd.f32 %v218, %v251
    %v253 = vpop.f32.mrf.mxu0
    %254 = vdwg.mxu0
    %255 = vmatpush.bf16.msra.mxu0 0
    %256 = vmatpush.bf16.msra.mxu0 0
    %257 = vmatpush.bf16.msra.mxu0 0
    %258 = vmatpush.bf16.msra.mxu0 0
    %259 = vmatpush.bf16.msra.mxu0 0
    %260 = vmatpush.bf16.msra.mxu0 0
    %261 = vmatpush.bf16.msra.mxu0 %v206
    %262 = vmatpush.bf16.msra.mxu0 %v202
    %263 = vmatmul.bf16.gmra.mxu0 %v227
    %v264 = vpop.f32.mrf.mxu0
    %v265 = vadd.f32 %v219, %v264
    %v266 = vpop.f32.mrf.mxu0
    %267 = vdwg.mxu0
    %268 = vmatpush.bf16.msra.mxu0 0
    %269 = vmatpush.bf16.msra.mxu0 0
    %270 = vmatpush.bf16.msra.mxu0 0
    %271 = vmatpush.bf16.msra.mxu0 0
    %272 = vmatpush.bf16.msra.mxu0 0
    %273 = vmatpush.bf16.msra.mxu0 0
    %274 = vmatpush.bf16.msra.mxu0 %v207
    %275 = vmatpush.bf16.msra.mxu0 %v203
    %276 = vmatmul.bf16.gmra.mxu0 %v227
    %v277 = vpop.f32.mrf.mxu0
    %v278 = vadd.f32 %v220, %v277
    %v279 = vpop.f32.mrf.mxu0
    %280 = vdwg.mxu0
    %vm281 = vcmp.gt.f32.partialorder %v239, 0.0
    %vm282 = vcmp.gt.f32.partialorder %v252, 0.0
    %vm283 = vcmp.gt.f32.partialorder %v265, 0.0
    %vm284 = vcmp.gt.f32.partialorder %v278, 0.0
    %v285 = vmin.f32 %v239, 0.0
    %v286 = vmin.f32 %v252, 0.0
    %v287 = vmin.f32 %v265, 0.0
    %v288 = vmin.f32 %v278, 0.0
    %v289 = vmul.f32 %v285, 1.442695
    %v290 = vpow.pop %v289
    %v291 = vmul.f32 %v286, 1.442695
    %v292 = vpow.pop %v291
    %v293 = vmul.f32 %v287, 1.442695
    %v294 = vpow.pop %v293
    %v295 = vmul.f32 %v288, 1.442695
    %v296 = vpow.pop %v295
    %v297 = vsub.f32 %v290, 1.0
    %v298 = vsub.f32 %v292, 1.0
    %v299 = vsub.f32 %v294, 1.0
    %v300 = vsub.f32 %v296, 1.0
    %v301 = vsel %vm281, %v239, %v297
    %v302 = vsel %vm282, %v252, %v298
    %v303 = vsel %vm283, %v265, %v299
    %v304 = vsel %vm284, %v278, %v300
    %v305 = vpack.c.bf16 %v301, %v301
    %v306 = vpack.c.bf16 %v302, %v302
    %v307 = vpack.c.bf16 %v303, %v303
    %v308 = vpack.c.bf16 %v304, %v304
    %v309 = vld [vmem:[#allocation7] sm:$0xff]
    %v310 = vld [vmem:[#allocation7 + $0x8] sm:$0xff]
    %v311 = vld [vmem:[#allocation7 + $0x10] sm:$0xff]
    %v312 = vld [vmem:[#allocation7 + $0x18] sm:$0xff]
    %v313 = vld [vmem:[#allocation7 + $0x20] sm:$0xff]
    %v314 = vld [vmem:[#allocation7 + $0x28] sm:$0xff]
    %v315 = vld [vmem:[#allocation7 + $0x30] sm:$0xff]
    %v316 = vld [vmem:[#allocation7 + $0x38] sm:$0xff]
    %v317 = vld [vmem:[#allocation7 + $0x40] sm:$0xff]
    %v318 = vld [vmem:[#allocation7 + $0x48] sm:$0xff]
    %v319 = vld [vmem:[#allocation7 + $0x50] sm:$0xff]
    %v320 = vld [vmem:[#allocation7 + $0x58] sm:$0xff]
    %v321 = vld [vmem:[#allocation7 + $0x60] sm:$0xff]
    %v322 = vld [vmem:[#allocation7 + $0x68] sm:$0xff]
    %v323 = vld [vmem:[#allocation7 + $0x70] sm:$0xff]
    %v324 = vld [vmem:[#allocation7 + $0x78] sm:$0xff]
    %v325 = vld [vmem:[#allocation7 + $0x80] sm:$0xff]
    %v326 = vld [vmem:[#allocation7 + $0x88] sm:$0xff]
    %v327 = vld [vmem:[#allocation7 + $0x90] sm:$0xff]
    %v328 = vld [vmem:[#allocation7 + $0x98] sm:$0xff]
    %v329 = vld [vmem:[#allocation7 + $0xa0] sm:$0xff]
    %v330 = vld [vmem:[#allocation7 + $0xa8] sm:$0xff]
    %v331 = vld [vmem:[#allocation7 + $0xb0] sm:$0xff]
    %v332 = vld [vmem:[#allocation7 + $0xb8] sm:$0xff]
    %v333 = vld [vmem:[#allocation7 + $0xc0] sm:$0xff]
    %v334 = vld [vmem:[#allocation7 + $0xc8] sm:$0xff]
    %v335 = vld [vmem:[#allocation7 + $0xd0] sm:$0xff]
    %v336 = vld [vmem:[#allocation7 + $0xd8] sm:$0xff]
    %v337 = vld [vmem:[#allocation7 + $0xe0] sm:$0xff]
    %v338 = vld [vmem:[#allocation7 + $0xe8] sm:$0xff]
    %v339 = vld [vmem:[#allocation7 + $0xf0] sm:$0xff]
    %v340 = vld [vmem:[#allocation7 + $0xf8] sm:$0xff]
    %v341 = vld [vmem:[#allocation7 + $0x100] sm:$0xff]
    %v342 = vld [vmem:[#allocation7 + $0x108] sm:$0xff]
    %v343 = vld [vmem:[#allocation7 + $0x110] sm:$0xff]
    %v344 = vld [vmem:[#allocation7 + $0x118] sm:$0xff]
    %v345 = vld [vmem:[#allocation7 + $0x120] sm:$0xff]
    %v346 = vld [vmem:[#allocation7 + $0x128] sm:$0xff]
    %v347 = vld [vmem:[#allocation7 + $0x130] sm:$0xff]
    %v348 = vld [vmem:[#allocation7 + $0x138] sm:$0xff]
    %v349 = vld [vmem:[#allocation7 + $0x140] sm:$0xff]
    %v350 = vld [vmem:[#allocation7 + $0x148] sm:$0xff]
    %v351 = vld [vmem:[#allocation7 + $0x150] sm:$0xff]
    %v352 = vld [vmem:[#allocation7 + $0x158] sm:$0xff]
    %v353 = vld [vmem:[#allocation7 + $0x160] sm:$0xff]
    %v354 = vld [vmem:[#allocation7 + $0x168] sm:$0xff]
    %v355 = vld [vmem:[#allocation7 + $0x170] sm:$0xff]
    %v356 = vld [vmem:[#allocation7 + $0x178] sm:$0xff]
    %v357 = vld [vmem:[#allocation7 + $0x180] sm:$0xff]
    %v358 = vld [vmem:[#allocation7 + $0x188] sm:$0xff]
    %v359 = vld [vmem:[#allocation7 + $0x190] sm:$0xff]
    %v360 = vld [vmem:[#allocation7 + $0x198] sm:$0xff]
    %v361 = vld [vmem:[#allocation7 + $0x1a0] sm:$0xff]
    %v362 = vld [vmem:[#allocation7 + $0x1a8] sm:$0xff]
    %v363 = vld [vmem:[#allocation7 + $0x1b0] sm:$0xff]
    %v364 = vld [vmem:[#allocation7 + $0x1b8] sm:$0xff]
    %v365 = vld [vmem:[#allocation7 + $0x1c0] sm:$0xff]
    %v366 = vld [vmem:[#allocation7 + $0x1c8] sm:$0xff]
    %v367 = vld [vmem:[#allocation7 + $0x1d0] sm:$0xff]
    %v368 = vld [vmem:[#allocation7 + $0x1d8] sm:$0xff]
    %v369 = vld [vmem:[#allocation7 + $0x1e0] sm:$0xff]
    %v370 = vld [vmem:[#allocation7 + $0x1e8] sm:$0xff]
    %v371 = vld [vmem:[#allocation7 + $0x1f0] sm:$0xff]
    %v372 = vld [vmem:[#allocation7 + $0x1f8] sm:$0xff]
    %v373 = vld [vmem:[#allocation7 + $0x200] sm:$0xff]
    %v374 = vld [vmem:[#allocation7 + $0x208] sm:$0xff]
    %v375 = vld [vmem:[#allocation7 + $0x210] sm:$0xff]
    %v376 = vld [vmem:[#allocation7 + $0x218] sm:$0xff]
    %v377 = vld [vmem:[#allocation7 + $0x220] sm:$0xff]
    %v378 = vld [vmem:[#allocation7 + $0x228] sm:$0xff]
    %v379 = vld [vmem:[#allocation7 + $0x230] sm:$0xff]
    %v380 = vld [vmem:[#allocation7 + $0x238] sm:$0xff]
    %v381 = vld [vmem:[#allocation7 + $0x240] sm:$0xff]
    %v382 = vld [vmem:[#allocation7 + $0x248] sm:$0xff]
    %v383 = vld [vmem:[#allocation7 + $0x250] sm:$0xff]
    %v384 = vld [vmem:[#allocation7 + $0x258] sm:$0xff]
    %v385 = vld [vmem:[#allocation7 + $0x260] sm:$0xff]
    %v386 = vld [vmem:[#allocation7 + $0x268] sm:$0xff]
    %v387 = vld [vmem:[#allocation7 + $0x270] sm:$0xff]
    %v388 = vld [vmem:[#allocation7 + $0x278] sm:$0xff]
    %v389 = vld [vmem:[#allocation7 + $0x280] sm:$0xff]
    %v390 = vld [vmem:[#allocation7 + $0x288] sm:$0xff]
    %v391 = vld [vmem:[#allocation7 + $0x290] sm:$0xff]
    %v392 = vld [vmem:[#allocation7 + $0x298] sm:$0xff]
    %v393 = vld [vmem:[#allocation7 + $0x2a0] sm:$0xff]
    %v394 = vld [vmem:[#allocation7 + $0x2a8] sm:$0xff]
    %v395 = vld [vmem:[#allocation7 + $0x2b0] sm:$0xff]
    %v396 = vld [vmem:[#allocation7 + $0x2b8] sm:$0xff]
    %v397 = vld [vmem:[#allocation7 + $0x2c0] sm:$0xff]
    %v398 = vld [vmem:[#allocation7 + $0x2c8] sm:$0xff]
    %v399 = vld [vmem:[#allocation7 + $0x2d0] sm:$0xff]
    %v400 = vld [vmem:[#allocation7 + $0x2d8] sm:$0xff]
    %v401 = vld [vmem:[#allocation7 + $0x2e0] sm:$0xff]
    %v402 = vld [vmem:[#allocation7 + $0x2e8] sm:$0xff]
    %v403 = vld [vmem:[#allocation7 + $0x2f0] sm:$0xff]
    %v404 = vld [vmem:[#allocation7 + $0x2f8] sm:$0xff]
    %v405 = vld [vmem:[#allocation7 + $0x300] sm:$0xff]
    %v406 = vld [vmem:[#allocation7 + $0x308] sm:$0xff]
    %v407 = vld [vmem:[#allocation7 + $0x310] sm:$0xff]
    %v408 = vld [vmem:[#allocation7 + $0x318] sm:$0xff]
    %v409 = vld [vmem:[#allocation7 + $0x320] sm:$0xff]
    %v410 = vld [vmem:[#allocation7 + $0x328] sm:$0xff]
    %v411 = vld [vmem:[#allocation7 + $0x330] sm:$0xff]
    %v412 = vld [vmem:[#allocation7 + $0x338] sm:$0xff]
    %v413 = vld [vmem:[#allocation7 + $0x340] sm:$0xff]
    %v414 = vld [vmem:[#allocation7 + $0x348] sm:$0xff]
    %v415 = vld [vmem:[#allocation7 + $0x350] sm:$0xff]
    %v416 = vld [vmem:[#allocation7 + $0x358] sm:$0xff]
    %v417 = vld [vmem:[#allocation7 + $0x360] sm:$0xff]
    %v418 = vld [vmem:[#allocation7 + $0x368] sm:$0xff]
    %v419 = vld [vmem:[#allocation7 + $0x370] sm:$0xff]
    %v420 = vld [vmem:[#allocation7 + $0x378] sm:$0xff]
    %v421 = vld [vmem:[#allocation7 + $0x380] sm:$0xff]
    %v422 = vld [vmem:[#allocation7 + $0x388] sm:$0xff]
    %v423 = vld [vmem:[#allocation7 + $0x390] sm:$0xff]
    %v424 = vld [vmem:[#allocation7 + $0x398] sm:$0xff]
    %v425 = vld [vmem:[#allocation7 + $0x3a0] sm:$0xff]
    %v426 = vld [vmem:[#allocation7 + $0x3a8] sm:$0xff]
    %v427 = vld [vmem:[#allocation7 + $0x3b0] sm:$0xff]
    %v428 = vld [vmem:[#allocation7 + $0x3b8] sm:$0xff]
    %v429 = vld [vmem:[#allocation7 + $0x3c0] sm:$0xff]
    %v430 = vld [vmem:[#allocation7 + $0x3c8] sm:$0xff]
    %v431 = vld [vmem:[#allocation7 + $0x3d0] sm:$0xff]
    %v432 = vld [vmem:[#allocation7 + $0x3d8] sm:$0xff]
    %v433 = vld [vmem:[#allocation7 + $0x3e0] sm:$0xff]
    %v434 = vld [vmem:[#allocation7 + $0x3e8] sm:$0xff]
    %v435 = vld [vmem:[#allocation7 + $0x3f0] sm:$0xff]
    %v436 = vld [vmem:[#allocation7 + $0x3f8] sm:$0xff]
    %v437 = vld [vmem:[#allocation9] sm:$0xf]
    %v566 = vunpack.c.l.b16 %v309
    %v567 = vunpack.c.h.b16 %v309
    %v568 = vunpack.c.l.b16 %v310
    %v569 = vunpack.c.h.b16 %v310
    %v570 = vunpack.c.l.b16 %v311
    %v571 = vunpack.c.h.b16 %v311
    %v572 = vunpack.c.l.b16 %v312
    %v573 = vunpack.c.h.b16 %v312
    %v574 = vunpack.c.l.b16 %v313
    %v575 = vunpack.c.h.b16 %v313
    %v576 = vunpack.c.l.b16 %v314
    %v577 = vunpack.c.h.b16 %v314
    %v578 = vunpack.c.l.b16 %v315
    %v579 = vunpack.c.h.b16 %v315
    %v580 = vunpack.c.l.b16 %v316
    %v581 = vunpack.c.h.b16 %v316
    %v582 = vunpack.c.l.b16 %v317
    %v583 = vunpack.c.h.b16 %v317
    %v584 = vunpack.c.l.b16 %v318
    %v585 = vunpack.c.h.b16 %v318
    %v586 = vunpack.c.l.b16 %v319
    %v587 = vunpack.c.h.b16 %v319
    %v588 = vunpack.c.l.b16 %v320
    %v589 = vunpack.c.h.b16 %v320
    %v590 = vunpack.c.l.b16 %v321
    %v591 = vunpack.c.h.b16 %v321
    %v592 = vunpack.c.l.b16 %v322
    %v593 = vunpack.c.h.b16 %v322
    %v594 = vunpack.c.l.b16 %v323
    %v595 = vunpack.c.h.b16 %v323
    %v596 = vunpack.c.l.b16 %v324
    %v597 = vunpack.c.h.b16 %v324
    %v598 = vunpack.c.l.b16 %v325
    %v599 = vunpack.c.h.b16 %v325
    %v600 = vunpack.c.l.b16 %v326
    %v601 = vunpack.c.h.b16 %v326
    %v602 = vunpack.c.l.b16 %v327
    %v603 = vunpack.c.h.b16 %v327
    %v604 = vunpack.c.l.b16 %v328
    %v605 = vunpack.c.h.b16 %v328
    %v606 = vunpack.c.l.b16 %v329
    %v607 = vunpack.c.h.b16 %v329
    %v608 = vunpack.c.l.b16 %v330
    %v609 = vunpack.c.h.b16 %v330
    %v610 = vunpack.c.l.b16 %v331
    %v611 = vunpack.c.h.b16 %v331
    %v612 = vunpack.c.l.b16 %v332
    %v613 = vunpack.c.h.b16 %v332
    %v614 = vunpack.c.l.b16 %v333
    %v615 = vunpack.c.h.b16 %v333
    %v616 = vunpack.c.l.b16 %v334
    %v617 = vunpack.c.h.b16 %v334
    %v618 = vunpack.c.l.b16 %v335
    %v619 = vunpack.c.h.b16 %v335
    %v620 = vunpack.c.l.b16 %v336
    %v621 = vunpack.c.h.b16 %v336
    %v622 = vunpack.c.l.b16 %v337
    %v623 = vunpack.c.h.b16 %v337
    %v624 = vunpack.c.l.b16 %v338
    %v625 = vunpack.c.h.b16 %v338
    %v626 = vunpack.c.l.b16 %v339
    %v627 = vunpack.c.h.b16 %v339
    %v628 = vunpack.c.l.b16 %v340
    %v629 = vunpack.c.h.b16 %v340
    %v630 = vunpack.c.l.b16 %v341
    %v631 = vunpack.c.h.b16 %v341
    %v632 = vunpack.c.l.b16 %v342
    %v633 = vunpack.c.h.b16 %v342
    %v634 = vunpack.c.l.b16 %v343
    %v635 = vunpack.c.h.b16 %v343
    %v636 = vunpack.c.l.b16 %v344
    %v637 = vunpack.c.h.b16 %v344
    %v638 = vunpack.c.l.b16 %v345
    %v639 = vunpack.c.h.b16 %v345
    %v640 = vunpack.c.l.b16 %v346
    %v641 = vunpack.c.h.b16 %v346
    %v642 = vunpack.c.l.b16 %v347
    %v643 = vunpack.c.h.b16 %v347
    %v644 = vunpack.c.l.b16 %v348
    %v645 = vunpack.c.h.b16 %v348
    %v646 = vunpack.c.l.b16 %v349
    %v647 = vunpack.c.h.b16 %v349
    %v648 = vunpack.c.l.b16 %v350
    %v649 = vunpack.c.h.b16 %v350
    %v650 = vunpack.c.l.b16 %v351
    %v651 = vunpack.c.h.b16 %v351
    %v652 = vunpack.c.l.b16 %v352
    %v653 = vunpack.c.h.b16 %v352
    %v654 = vunpack.c.l.b16 %v353
    %v655 = vunpack.c.h.b16 %v353
    %v656 = vunpack.c.l.b16 %v354
    %v657 = vunpack.c.h.b16 %v354
    %v658 = vunpack.c.l.b16 %v355
    %v659 = vunpack.c.h.b16 %v355
    %v660 = vunpack.c.l.b16 %v356
    %v661 = vunpack.c.h.b16 %v356
    %v662 = vunpack.c.l.b16 %v357
    %v663 = vunpack.c.h.b16 %v357
    %v664 = vunpack.c.l.b16 %v358
    %v665 = vunpack.c.h.b16 %v358
    %v666 = vunpack.c.l.b16 %v359
    %v667 = vunpack.c.h.b16 %v359
    %v668 = vunpack.c.l.b16 %v360
    %v669 = vunpack.c.h.b16 %v360
    %v670 = vunpack.c.l.b16 %v361
    %v671 = vunpack.c.h.b16 %v361
    %v672 = vunpack.c.l.b16 %v362
    %v673 = vunpack.c.h.b16 %v362
    %v674 = vunpack.c.l.b16 %v363
    %v675 = vunpack.c.h.b16 %v363
    %v676 = vunpack.c.l.b16 %v364
    %v677 = vunpack.c.h.b16 %v364
    %v678 = vunpack.c.l.b16 %v365
    %v679 = vunpack.c.h.b16 %v365
    %v680 = vunpack.c.l.b16 %v366
    %v681 = vunpack.c.h.b16 %v366
    %v682 = vunpack.c.l.b16 %v367
    %v683 = vunpack.c.h.b16 %v367
    %v684 = vunpack.c.l.b16 %v368
    %v685 = vunpack.c.h.b16 %v368
    %v686 = vunpack.c.l.b16 %v369
    %v687 = vunpack.c.h.b16 %v369
    %v688 = vunpack.c.l.b16 %v370
    %v689 = vunpack.c.h.b16 %v370
    %v690 = vunpack.c.l.b16 %v371
    %v691 = vunpack.c.h.b16 %v371
    %v692 = vunpack.c.l.b16 %v372
    %v693 = vunpack.c.h.b16 %v372
    %v694 = vunpack.c.l.b16 %v373
    %v695 = vunpack.c.h.b16 %v373
    %v696 = vunpack.c.l.b16 %v374
    %v697 = vunpack.c.h.b16 %v374
    %v698 = vunpack.c.l.b16 %v375
    %v699 = vunpack.c.h.b16 %v375
    %v700 = vunpack.c.l.b16 %v376
    %v701 = vunpack.c.h.b16 %v376
    %v702 = vunpack.c.l.b16 %v377
    %v703 = vunpack.c.h.b16 %v377
    %v704 = vunpack.c.l.b16 %v378
    %v705 = vunpack.c.h.b16 %v378
    %v706 = vunpack.c.l.b16 %v379
    %v707 = vunpack.c.h.b16 %v379
    %v708 = vunpack.c.l.b16 %v380
    %v709 = vunpack.c.h.b16 %v380
    %v710 = vunpack.c.l.b16 %v381
    %v711 = vunpack.c.h.b16 %v381
    %v712 = vunpack.c.l.b16 %v382
    %v713 = vunpack.c.h.b16 %v382
    %v714 = vunpack.c.l.b16 %v383
    %v715 = vunpack.c.h.b16 %v383
    %v716 = vunpack.c.l.b16 %v384
    %v717 = vunpack.c.h.b16 %v384
    %v718 = vunpack.c.l.b16 %v385
    %v719 = vunpack.c.h.b16 %v385
    %v720 = vunpack.c.l.b16 %v386
    %v721 = vunpack.c.h.b16 %v386
    %v722 = vunpack.c.l.b16 %v387
    %v723 = vunpack.c.h.b16 %v387
    %v724 = vunpack.c.l.b16 %v388
    %v725 = vunpack.c.h.b16 %v388
    %v726 = vunpack.c.l.b16 %v389
    %v727 = vunpack.c.h.b16 %v389
    %v728 = vunpack.c.l.b16 %v390
    %v729 = vunpack.c.h.b16 %v390
    %v730 = vunpack.c.l.b16 %v391
    %v731 = vunpack.c.h.b16 %v391
    %v732 = vunpack.c.l.b16 %v392
    %v733 = vunpack.c.h.b16 %v392
    %v734 = vunpack.c.l.b16 %v393
    %v735 = vunpack.c.h.b16 %v393
    %v736 = vunpack.c.l.b16 %v394
    %v737 = vunpack.c.h.b16 %v394
    %v738 = vunpack.c.l.b16 %v395
    %v739 = vunpack.c.h.b16 %v395
    %v740 = vunpack.c.l.b16 %v396
    %v741 = vunpack.c.h.b16 %v396
    %v742 = vunpack.c.l.b16 %v397
    %v743 = vunpack.c.h.b16 %v397
    %v744 = vunpack.c.l.b16 %v398
    %v745 = vunpack.c.h.b16 %v398
    %v746 = vunpack.c.l.b16 %v399
    %v747 = vunpack.c.h.b16 %v399
    %v748 = vunpack.c.l.b16 %v400
    %v749 = vunpack.c.h.b16 %v400
    %v750 = vunpack.c.l.b16 %v401
    %v751 = vunpack.c.h.b16 %v401
    %v752 = vunpack.c.l.b16 %v402
    %v753 = vunpack.c.h.b16 %v402
    %v754 = vunpack.c.l.b16 %v403
    %v755 = vunpack.c.h.b16 %v403
    %v756 = vunpack.c.l.b16 %v404
    %v757 = vunpack.c.h.b16 %v404
    %v758 = vunpack.c.l.b16 %v405
    %v759 = vunpack.c.h.b16 %v405
    %v760 = vunpack.c.l.b16 %v406
    %v761 = vunpack.c.h.b16 %v406
    %v762 = vunpack.c.l.b16 %v407
    %v763 = vunpack.c.h.b16 %v407
    %v764 = vunpack.c.l.b16 %v408
    %v765 = vunpack.c.h.b16 %v408
    %v766 = vunpack.c.l.b16 %v409
    %v767 = vunpack.c.h.b16 %v409
    %v768 = vunpack.c.l.b16 %v410
    %v769 = vunpack.c.h.b16 %v410
    %v770 = vunpack.c.l.b16 %v411
    %v771 = vunpack.c.h.b16 %v411
    %v772 = vunpack.c.l.b16 %v412
    %v773 = vunpack.c.h.b16 %v412
    %v774 = vunpack.c.l.b16 %v413
    %v775 = vunpack.c.h.b16 %v413
    %v776 = vunpack.c.l.b16 %v414
    %v777 = vunpack.c.h.b16 %v414
    %v778 = vunpack.c.l.b16 %v415
    %v779 = vunpack.c.h.b16 %v415
    %v780 = vunpack.c.l.b16 %v416
    %v781 = vunpack.c.h.b16 %v416
    %v782 = vunpack.c.l.b16 %v417
    %v783 = vunpack.c.h.b16 %v417
    %v784 = vunpack.c.l.b16 %v418
    %v785 = vunpack.c.h.b16 %v418
    %v786 = vunpack.c.l.b16 %v419
    %v787 = vunpack.c.h.b16 %v419
    %v788 = vunpack.c.l.b16 %v420
    %v789 = vunpack.c.h.b16 %v420
    %v790 = vunpack.c.l.b16 %v421
    %v791 = vunpack.c.h.b16 %v421
    %v792 = vunpack.c.l.b16 %v422
    %v793 = vunpack.c.h.b16 %v422
    %v794 = vunpack.c.l.b16 %v423
    %v795 = vunpack.c.h.b16 %v423
    %v796 = vunpack.c.l.b16 %v424
    %v797 = vunpack.c.h.b16 %v424
    %v798 = vunpack.c.l.b16 %v425
    %v799 = vunpack.c.h.b16 %v425
    %v800 = vunpack.c.l.b16 %v426
    %v801 = vunpack.c.h.b16 %v426
    %v802 = vunpack.c.l.b16 %v427
    %v803 = vunpack.c.h.b16 %v427
    %v804 = vunpack.c.l.b16 %v428
    %v805 = vunpack.c.h.b16 %v428
    %v806 = vunpack.c.l.b16 %v429
    %v807 = vunpack.c.h.b16 %v429
    %v808 = vunpack.c.l.b16 %v430
    %v809 = vunpack.c.h.b16 %v430
    %v810 = vunpack.c.l.b16 %v431
    %v811 = vunpack.c.h.b16 %v431
    %v812 = vunpack.c.l.b16 %v432
    %v813 = vunpack.c.h.b16 %v432
    %v814 = vunpack.c.l.b16 %v433
    %v815 = vunpack.c.h.b16 %v433
    %v816 = vunpack.c.l.b16 %v434
    %v817 = vunpack.c.h.b16 %v434
    %v818 = vunpack.c.l.b16 %v435
    %v819 = vunpack.c.h.b16 %v435
    %v820 = vunpack.c.l.b16 %v436
    %v821 = vunpack.c.h.b16 %v436
    %v822 = vpack.c.b16 %v570, %v566
    %v823 = vpack.c.b16 %v571, %v567
    %v824 = vpack.c.b16 %v572, %v568
    %v825 = vpack.c.b16 %v573, %v569
    %v826 = vpack.c.b16 %v578, %v574
    %v827 = vpack.c.b16 %v579, %v575
    %v828 = vpack.c.b16 %v580, %v576
    %v829 = vpack.c.b16 %v581, %v577
    %v830 = vpack.c.b16 %v586, %v582
    %v831 = vpack.c.b16 %v587, %v583
    %v832 = vpack.c.b16 %v588, %v584
    %v833 = vpack.c.b16 %v589, %v585
    %v834 = vpack.c.b16 %v594, %v590
    %v835 = vpack.c.b16 %v595, %v591
    %v836 = vpack.c.b16 %v596, %v592
    %v837 = vpack.c.b16 %v597, %v593
    %v838 = vpack.c.b16 %v602, %v598
    %v839 = vpack.c.b16 %v603, %v599
    %v840 = vpack.c.b16 %v604, %v600
    %v841 = vpack.c.b16 %v605, %v601
    %v842 = vpack.c.b16 %v610, %v606
    %v843 = vpack.c.b16 %v611, %v607
    %v844 = vpack.c.b16 %v612, %v608
    %v845 = vpack.c.b16 %v613, %v609
    %v846 = vpack.c.b16 %v618, %v614
    %v847 = vpack.c.b16 %v619, %v615
    %v848 = vpack.c.b16 %v620, %v616
    %v849 = vpack.c.b16 %v621, %v617
    %v850 = vpack.c.b16 %v626, %v622
    %v851 = vpack.c.b16 %v627, %v623
    %v852 = vpack.c.b16 %v628, %v624
    %v853 = vpack.c.b16 %v629, %v625
    %v854 = vpack.c.b16 %v634, %v630
    %v855 = vpack.c.b16 %v635, %v631
    %v856 = vpack.c.b16 %v636, %v632
    %v857 = vpack.c.b16 %v637, %v633
    %v858 = vpack.c.b16 %v642, %v638
    %v859 = vpack.c.b16 %v643, %v639
    %v860 = vpack.c.b16 %v644, %v640
    %v861 = vpack.c.b16 %v645, %v641
    %v862 = vpack.c.b16 %v650, %v646
    %v863 = vpack.c.b16 %v651, %v647
    %v864 = vpack.c.b16 %v652, %v648
    %v865 = vpack.c.b16 %v653, %v649
    %v866 = vpack.c.b16 %v658, %v654
    %v867 = vpack.c.b16 %v659, %v655
    %v868 = vpack.c.b16 %v660, %v656
    %v869 = vpack.c.b16 %v661, %v657
    %v870 = vpack.c.b16 %v666, %v662
    %v871 = vpack.c.b16 %v667, %v663
    %v872 = vpack.c.b16 %v668, %v664
    %v873 = vpack.c.b16 %v669, %v665
    %v874 = vpack.c.b16 %v674, %v670
    %v875 = vpack.c.b16 %v675, %v671
    %v876 = vpack.c.b16 %v676, %v672
    %v877 = vpack.c.b16 %v677, %v673
    %v878 = vpack.c.b16 %v682, %v678
    %v879 = vpack.c.b16 %v683, %v679
    %v880 = vpack.c.b16 %v684, %v680
    %v881 = vpack.c.b16 %v685, %v681
    %v882 = vpack.c.b16 %v690, %v686
    %v883 = vpack.c.b16 %v691, %v687
    %v884 = vpack.c.b16 %v692, %v688
    %v885 = vpack.c.b16 %v693, %v689
    %v886 = vpack.c.b16 %v698, %v694
    %v887 = vpack.c.b16 %v699, %v695
    %v888 = vpack.c.b16 %v700, %v696
    %v889 = vpack.c.b16 %v701, %v697
    %v890 = vpack.c.b16 %v706, %v702
    %v891 = vpack.c.b16 %v707, %v703
    %v892 = vpack.c.b16 %v708, %v704
    %v893 = vpack.c.b16 %v709, %v705
    %v894 = vpack.c.b16 %v714, %v710
    %v895 = vpack.c.b16 %v715, %v711
    %v896 = vpack.c.b16 %v716, %v712
    %v897 = vpack.c.b16 %v717, %v713
    %v898 = vpack.c.b16 %v722, %v718
    %v899 = vpack.c.b16 %v723, %v719
    %v900 = vpack.c.b16 %v724, %v720
    %v901 = vpack.c.b16 %v725, %v721
    %v902 = vpack.c.b16 %v730, %v726
    %v903 = vpack.c.b16 %v731, %v727
    %v904 = vpack.c.b16 %v732, %v728
    %v905 = vpack.c.b16 %v733, %v729
    %v906 = vpack.c.b16 %v738, %v734
    %v907 = vpack.c.b16 %v739, %v735
    %v908 = vpack.c.b16 %v740, %v736
    %v909 = vpack.c.b16 %v741, %v737
    %v910 = vpack.c.b16 %v746, %v742
    %v911 = vpack.c.b16 %v747, %v743
    %v912 = vpack.c.b16 %v748, %v744
    %v913 = vpack.c.b16 %v749, %v745
    %v914 = vpack.c.b16 %v754, %v750
    %v915 = vpack.c.b16 %v755, %v751
    %v916 = vpack.c.b16 %v756, %v752
    %v917 = vpack.c.b16 %v757, %v753
    %v918 = vpack.c.b16 %v762, %v758
    %v919 = vpack.c.b16 %v763, %v759
    %v920 = vpack.c.b16 %v764, %v760
    %v921 = vpack.c.b16 %v765, %v761
    %v922 = vpack.c.b16 %v770, %v766
    %v923 = vpack.c.b16 %v771, %v767
    %v924 = vpack.c.b16 %v772, %v768
    %v925 = vpack.c.b16 %v773, %v769
    %v926 = vpack.c.b16 %v778, %v774
    %v927 = vpack.c.b16 %v779, %v775
    %v928 = vpack.c.b16 %v780, %v776
    %v929 = vpack.c.b16 %v781, %v777
    %v930 = vpack.c.b16 %v786, %v782
    %v931 = vpack.c.b16 %v787, %v783
    %v932 = vpack.c.b16 %v788, %v784
    %v933 = vpack.c.b16 %v789, %v785
    %v934 = vpack.c.b16 %v794, %v790
    %v935 = vpack.c.b16 %v795, %v791
    %v936 = vpack.c.b16 %v796, %v792
    %v937 = vpack.c.b16 %v797, %v793
    %v938 = vpack.c.b16 %v802, %v798
    %v939 = vpack.c.b16 %v803, %v799
    %v940 = vpack.c.b16 %v804, %v800
    %v941 = vpack.c.b16 %v805, %v801
    %v942 = vpack.c.b16 %v810, %v806
    %v943 = vpack.c.b16 %v811, %v807
    %v944 = vpack.c.b16 %v812, %v808
    %v945 = vpack.c.b16 %v813, %v809
    %v946 = vpack.c.b16 %v818, %v814
    %v947 = vpack.c.b16 %v819, %v815
    %v948 = vpack.c.b16 %v820, %v816
    %v949 = vpack.c.b16 %v821, %v817
    %v1079 = vperm.slane %v437, 0
    %v1080 = vperm.slane %v437, 1
    %v1081 = vperm.slane %v437, 2
    %v1082 = vperm.slane %v437, 3
    %1087 = vmatpush.bf16.msra.mxu0 %v850
    %1088 = vmatpush.bf16.msra.mxu0 %v846
    %1089 = vmatpush.bf16.msra.mxu0 %v842
    %1090 = vmatpush.bf16.msra.mxu0 %v838
    %1091 = vmatpush.bf16.msra.mxu0 %v834
    %1092 = vmatpush.bf16.msra.mxu0 %v830
    %1093 = vmatpush.bf16.msra.mxu0 %v826
    %1094 = vmatpush.bf16.msra.mxu0 %v822
    %1095 = vmatmul.bf16.gmra.mxu0 %v305
    %v1096 = vpop.f32.mrf.mxu0
    %v1097 = vadd.f32 %v1079, %v1096
    %v1098 = vpop.f32.mrf.mxu0
    %1099 = vdwg.mxu0
    %1100 = vmatpush.bf16.msra.mxu0 %v882
    %1101 = vmatpush.bf16.msra.mxu0 %v878
    %1102 = vmatpush.bf16.msra.mxu0 %v874
    %1103 = vmatpush.bf16.msra.mxu0 %v870
    %1104 = vmatpush.bf16.msra.mxu0 %v866
    %1105 = vmatpush.bf16.msra.mxu0 %v862
    %1106 = vmatpush.bf16.msra.mxu0 %v858
    %1107 = vmatpush.bf16.msra.mxu0 %v854
    %1108 = vmatmul.bf16.gmra.mxu0 %v306
    %v1109 = vpop.f32.mrf.mxu0
    %v1110 = vadd.f32 %v1097, %v1109
    %v1111 = vpop.f32.mrf.mxu0
    %1112 = vdwg.mxu0
    %1113 = vmatpush.bf16.msra.mxu0 %v914
    %1114 = vmatpush.bf16.msra.mxu0 %v910
    %1115 = vmatpush.bf16.msra.mxu0 %v906
    %1116 = vmatpush.bf16.msra.mxu0 %v902
    %1117 = vmatpush.bf16.msra.mxu0 %v898
    %1118 = vmatpush.bf16.msra.mxu0 %v894
    %1119 = vmatpush.bf16.msra.mxu0 %v890
    %1120 = vmatpush.bf16.msra.mxu0 %v886
    %1121 = vmatmul.bf16.gmra.mxu0 %v307
    %v1122 = vpop.f32.mrf.mxu0
    %v1123 = vadd.f32 %v1110, %v1122
    %v1124 = vpop.f32.mrf.mxu0
    %1125 = vdwg.mxu0
    %1126 = vmatpush.bf16.msra.mxu0 %v946
    %1127 = vmatpush.bf16.msra.mxu0 %v942
    %1128 = vmatpush.bf16.msra.mxu0 %v938
    %1129 = vmatpush.bf16.msra.mxu0 %v934
    %1130 = vmatpush.bf16.msra.mxu0 %v930
    %1131 = vmatpush.bf16.msra.mxu0 %v926
    %1132 = vmatpush.bf16.msra.mxu0 %v922
    %1133 = vmatpush.bf16.msra.mxu0 %v918
    %1134 = vmatmul.bf16.gmra.mxu0 %v308
    %v1135 = vpop.f32.mrf.mxu0
    %v1136 = vadd.f32 %v1123, %v1135
    %v1137 = vpop.f32.mrf.mxu0
    %1138 = vdwg.mxu0
    %1139 = vmatpush.bf16.msra.mxu0 %v851
    %1140 = vmatpush.bf16.msra.mxu0 %v847
    %1141 = vmatpush.bf16.msra.mxu0 %v843
    %1142 = vmatpush.bf16.msra.mxu0 %v839
    %1143 = vmatpush.bf16.msra.mxu0 %v835
    %1144 = vmatpush.bf16.msra.mxu0 %v831
    %1145 = vmatpush.bf16.msra.mxu0 %v827
    %1146 = vmatpush.bf16.msra.mxu0 %v823
    %1147 = vmatmul.bf16.gmra.mxu0 %v305
    %v1148 = vpop.f32.mrf.mxu0
    %v1149 = vadd.f32 %v1080, %v1148
    %v1150 = vpop.f32.mrf.mxu0
    %1151 = vdwg.mxu0
    %1152 = vmatpush.bf16.msra.mxu0 %v883
    %1153 = vmatpush.bf16.msra.mxu0 %v879
    %1154 = vmatpush.bf16.msra.mxu0 %v875
    %1155 = vmatpush.bf16.msra.mxu0 %v871
    %1156 = vmatpush.bf16.msra.mxu0 %v867
    %1157 = vmatpush.bf16.msra.mxu0 %v863
    %1158 = vmatpush.bf16.msra.mxu0 %v859
    %1159 = vmatpush.bf16.msra.mxu0 %v855
    %1160 = vmatmul.bf16.gmra.mxu0 %v306
    %v1161 = vpop.f32.mrf.mxu0
    %v1162 = vadd.f32 %v1149, %v1161
    %v1163 = vpop.f32.mrf.mxu0
    %1164 = vdwg.mxu0
    %1165 = vmatpush.bf16.msra.mxu0 %v915
    %1166 = vmatpush.bf16.msra.mxu0 %v911
    %1167 = vmatpush.bf16.msra.mxu0 %v907
    %1168 = vmatpush.bf16.msra.mxu0 %v903
    %1169 = vmatpush.bf16.msra.mxu0 %v899
    %1170 = vmatpush.bf16.msra.mxu0 %v895
    %1171 = vmatpush.bf16.msra.mxu0 %v891
    %1172 = vmatpush.bf16.msra.mxu0 %v887
    %1173 = vmatmul.bf16.gmra.mxu0 %v307
    %v1174 = vpop.f32.mrf.mxu0
    %v1175 = vadd.f32 %v1162, %v1174
    %v1176 = vpop.f32.mrf.mxu0
    %1177 = vdwg.mxu0
    %1178 = vmatpush.bf16.msra.mxu0 %v947
    %1179 = vmatpush.bf16.msra.mxu0 %v943
    %1180 = vmatpush.bf16.msra.mxu0 %v939
    %1181 = vmatpush.bf16.msra.mxu0 %v935
    %1182 = vmatpush.bf16.msra.mxu0 %v931
    %1183 = vmatpush.bf16.msra.mxu0 %v927
    %1184 = vmatpush.bf16.msra.mxu0 %v923
    %1185 = vmatpush.bf16.msra.mxu0 %v919
    %1186 = vmatmul.bf16.gmra.mxu0 %v308
    %v1187 = vpop.f32.mrf.mxu0
    %v1188 = vadd.f32 %v1175, %v1187
    %v1189 = vpop.f32.mrf.mxu0
    %1190 = vdwg.mxu0
    %1191 = vmatpush.bf16.msra.mxu0 %v852
    %1192 = vmatpush.bf16.msra.mxu0 %v848
    %1193 = vmatpush.bf16.msra.mxu0 %v844
    %1194 = vmatpush.bf16.msra.mxu0 %v840
    %1195 = vmatpush.bf16.msra.mxu0 %v836
    %1196 = vmatpush.bf16.msra.mxu0 %v832
    %1197 = vmatpush.bf16.msra.mxu0 %v828
    %1198 = vmatpush.bf16.msra.mxu0 %v824
    %1199 = vmatmul.bf16.gmra.mxu0 %v305
    %v1200 = vpop.f32.mrf.mxu0
    %v1201 = vadd.f32 %v1081, %v1200
    %v1202 = vpop.f32.mrf.mxu0
    %1203 = vdwg.mxu0
    %1204 = vmatpush.bf16.msra.mxu0 %v884
    %1205 = vmatpush.bf16.msra.mxu0 %v880
    %1206 = vmatpush.bf16.msra.mxu0 %v876
    %1207 = vmatpush.bf16.msra.mxu0 %v872
    %1208 = vmatpush.bf16.msra.mxu0 %v868
    %1209 = vmatpush.bf16.msra.mxu0 %v864
    %1210 = vmatpush.bf16.msra.mxu0 %v860
    %1211 = vmatpush.bf16.msra.mxu0 %v856
    %1212 = vmatmul.bf16.gmra.mxu0 %v306
    %v1213 = vpop.f32.mrf.mxu0
    %v1214 = vadd.f32 %v1201, %v1213
    %v1215 = vpop.f32.mrf.mxu0
    %1216 = vdwg.mxu0
    %1217 = vmatpush.bf16.msra.mxu0 %v916
    %1218 = vmatpush.bf16.msra.mxu0 %v912
    %1219 = vmatpush.bf16.msra.mxu0 %v908
    %1220 = vmatpush.bf16.msra.mxu0 %v904
    %1221 = vmatpush.bf16.msra.mxu0 %v900
    %1222 = vmatpush.bf16.msra.mxu0 %v896
    %1223 = vmatpush.bf16.msra.mxu0 %v892
    %1224 = vmatpush.bf16.msra.mxu0 %v888
    %1225 = vmatmul.bf16.gmra.mxu0 %v307
    %v1226 = vpop.f32.mrf.mxu0
    %v1227 = vadd.f32 %v1214, %v1226
    %v1228 = vpop.f32.mrf.mxu0
    %1229 = vdwg.mxu0
    %1230 = vmatpush.bf16.msra.mxu0 %v948
    %1231 = vmatpush.bf16.msra.mxu0 %v944
    %1232 = vmatpush.bf16.msra.mxu0 %v940
    %1233 = vmatpush.bf16.msra.mxu0 %v936
    %1234 = vmatpush.bf16.msra.mxu0 %v932
    %1235 = vmatpush.bf16.msra.mxu0 %v928
    %1236 = vmatpush.bf16.msra.mxu0 %v924
    %1237 = vmatpush.bf16.msra.mxu0 %v920
    %1238 = vmatmul.bf16.gmra.mxu0 %v308
    %v1239 = vpop.f32.mrf.mxu0
    %v1240 = vadd.f32 %v1227, %v1239
    %v1241 = vpop.f32.mrf.mxu0
    %1242 = vdwg.mxu0
    %1243 = vmatpush.bf16.msra.mxu0 %v853
    %1244 = vmatpush.bf16.msra.mxu0 %v849
    %1245 = vmatpush.bf16.msra.mxu0 %v845
    %1246 = vmatpush.bf16.msra.mxu0 %v841
    %1247 = vmatpush.bf16.msra.mxu0 %v837
    %1248 = vmatpush.bf16.msra.mxu0 %v833
    %1249 = vmatpush.bf16.msra.mxu0 %v829
    %1250 = vmatpush.bf16.msra.mxu0 %v825
    %1251 = vmatmul.bf16.gmra.mxu0 %v305
    %v1252 = vpop.f32.mrf.mxu0
    %v1253 = vadd.f32 %v1082, %v1252
    %v1254 = vpop.f32.mrf.mxu0
    %1255 = vdwg.mxu0
    %1256 = vmatpush.bf16.msra.mxu0 %v885
    %1257 = vmatpush.bf16.msra.mxu0 %v881
    %1258 = vmatpush.bf16.msra.mxu0 %v877
    %1259 = vmatpush.bf16.msra.mxu0 %v873
    %1260 = vmatpush.bf16.msra.mxu0 %v869
    %1261 = vmatpush.bf16.msra.mxu0 %v865
    %1262 = vmatpush.bf16.msra.mxu0 %v861
    %1263 = vmatpush.bf16.msra.mxu0 %v857
    %1264 = vmatmul.bf16.gmra.mxu0 %v306
    %v1265 = vpop.f32.mrf.mxu0
    %v1266 = vadd.f32 %v1253, %v1265
    %v1267 = vpop.f32.mrf.mxu0
    %1268 = vdwg.mxu0
    %1269 = vmatpush.bf16.msra.mxu0 %v917
    %1270 = vmatpush.bf16.msra.mxu0 %v913
    %1271 = vmatpush.bf16.msra.mxu0 %v909
    %1272 = vmatpush.bf16.msra.mxu0 %v905
    %1273 = vmatpush.bf16.msra.mxu0 %v901
    %1274 = vmatpush.bf16.msra.mxu0 %v897
    %1275 = vmatpush.bf16.msra.mxu0 %v893
    %1276 = vmatpush.bf16.msra.mxu0 %v889
    %1277 = vmatmul.bf16.gmra.mxu0 %v307
    %v1278 = vpop.f32.mrf.mxu0
    %v1279 = vadd.f32 %v1266, %v1278
    %v1280 = vpop.f32.mrf.mxu0
    %1281 = vdwg.mxu0
    %1282 = vmatpush.bf16.msra.mxu0 %v949
    %1283 = vmatpush.bf16.msra.mxu0 %v945
    %1284 = vmatpush.bf16.msra.mxu0 %v941
    %1285 = vmatpush.bf16.msra.mxu0 %v937
    %1286 = vmatpush.bf16.msra.mxu0 %v933
    %1287 = vmatpush.bf16.msra.mxu0 %v929
    %1288 = vmatpush.bf16.msra.mxu0 %v925
    %1289 = vmatpush.bf16.msra.mxu0 %v921
    %1290 = vmatmul.bf16.gmra.mxu0 %v308
    %v1291 = vpop.f32.mrf.mxu0
    %v1292 = vadd.f32 %v1279, %v1291
    %v1293 = vpop.f32.mrf.mxu0
    %1294 = vdwg.mxu0
    %v1295 = vpack.c.bf16 %v1136, %v1136
    %v1296 = vpack.c.bf16 %v1188, %v1188
    %v1297 = vpack.c.bf16 %v1240, %v1240
    %v1298 = vpack.c.bf16 %v1292, %v1292
    %v1299 = vld [vmem:[#allocation10] sm:$0xff]
    %v1300 = vld [vmem:[#allocation10 + $0x8] sm:$0xff]
    %v1301 = vld [vmem:[#allocation10 + $0x10] sm:$0xff]
    %v1302 = vld [vmem:[#allocation10 + $0x18] sm:$0xff]
    %v1303 = vld [vmem:[#allocation10 + $0x20] sm:$0xff]
    %v1304 = vld [vmem:[#allocation10 + $0x28] sm:$0xff]
    %v1305 = vld [vmem:[#allocation10 + $0x30] sm:$0xff]
    %v1306 = vld [vmem:[#allocation10 + $0x38] sm:$0xff]
    %v1307 = vld [vmem:[#allocation10 + $0x40] sm:$0xff]
    %v1308 = vld [vmem:[#allocation10 + $0x48] sm:$0xff]
    %v1309 = vld [vmem:[#allocation10 + $0x50] sm:$0xff]
    %v1310 = vld [vmem:[#allocation10 + $0x58] sm:$0xff]
    %v1311 = vld [vmem:[#allocation10 + $0x60] sm:$0xff]
    %v1312 = vld [vmem:[#allocation10 + $0x68] sm:$0xff]
    %v1313 = vld [vmem:[#allocation10 + $0x70] sm:$0xff]
    %v1314 = vld [vmem:[#allocation10 + $0x78] sm:$0xff]
    %v1315 = vld [vmem:[#allocation10 + $0x80] sm:$0xff]
    %v1316 = vld [vmem:[#allocation10 + $0x88] sm:$0xff]
    %v1317 = vld [vmem:[#allocation10 + $0x90] sm:$0xff]
    %v1318 = vld [vmem:[#allocation10 + $0x98] sm:$0xff]
    %v1319 = vld [vmem:[#allocation10 + $0xa0] sm:$0xff]
    %v1320 = vld [vmem:[#allocation10 + $0xa8] sm:$0xff]
    %v1321 = vld [vmem:[#allocation10 + $0xb0] sm:$0xff]
    %v1322 = vld [vmem:[#allocation10 + $0xb8] sm:$0xff]
    %v1323 = vld [vmem:[#allocation10 + $0xc0] sm:$0xff]
    %v1324 = vld [vmem:[#allocation10 + $0xc8] sm:$0xff]
    %v1325 = vld [vmem:[#allocation10 + $0xd0] sm:$0xff]
    %v1326 = vld [vmem:[#allocation10 + $0xd8] sm:$0xff]
    %v1327 = vld [vmem:[#allocation10 + $0xe0] sm:$0xff]
    %v1328 = vld [vmem:[#allocation10 + $0xe8] sm:$0xff]
    %v1329 = vld [vmem:[#allocation10 + $0xf0] sm:$0xff]
    %v1330 = vld [vmem:[#allocation10 + $0xf8] sm:$0xff]
    %v1331 = vld [vmem:[#allocation10 + $0x100] sm:$0xff]
    %v1332 = vld [vmem:[#allocation10 + $0x108] sm:$0xff]
    %v1333 = vld [vmem:[#allocation10 + $0x110] sm:$0xff]
    %v1334 = vld [vmem:[#allocation10 + $0x118] sm:$0xff]
    %v1335 = vld [vmem:[#allocation10 + $0x120] sm:$0xff]
    %v1336 = vld [vmem:[#allocation10 + $0x128] sm:$0xff]
    %v1337 = vld [vmem:[#allocation10 + $0x130] sm:$0xff]
    %v1338 = vld [vmem:[#allocation10 + $0x138] sm:$0xff]
    %v1339 = vld [vmem:[#allocation10 + $0x140] sm:$0xff]
    %v1340 = vld [vmem:[#allocation10 + $0x148] sm:$0xff]
    %v1341 = vld [vmem:[#allocation10 + $0x150] sm:$0xff]
    %v1342 = vld [vmem:[#allocation10 + $0x158] sm:$0xff]
    %v1343 = vld [vmem:[#allocation10 + $0x160] sm:$0xff]
    %v1344 = vld [vmem:[#allocation10 + $0x168] sm:$0xff]
    %v1345 = vld [vmem:[#allocation10 + $0x170] sm:$0xff]
    %v1346 = vld [vmem:[#allocation10 + $0x178] sm:$0xff]
    %v1347 = vld [vmem:[#allocation10 + $0x180] sm:$0xff]
    %v1348 = vld [vmem:[#allocation10 + $0x188] sm:$0xff]
    %v1349 = vld [vmem:[#allocation10 + $0x190] sm:$0xff]
    %v1350 = vld [vmem:[#allocation10 + $0x198] sm:$0xff]
    %v1351 = vld [vmem:[#allocation10 + $0x1a0] sm:$0xff]
    %v1352 = vld [vmem:[#allocation10 + $0x1a8] sm:$0xff]
    %v1353 = vld [vmem:[#allocation10 + $0x1b0] sm:$0xff]
    %v1354 = vld [vmem:[#allocation10 + $0x1b8] sm:$0xff]
    %v1355 = vld [vmem:[#allocation10 + $0x1c0] sm:$0xff]
    %v1356 = vld [vmem:[#allocation10 + $0x1c8] sm:$0xff]
    %v1357 = vld [vmem:[#allocation10 + $0x1d0] sm:$0xff]
    %v1358 = vld [vmem:[#allocation10 + $0x1d8] sm:$0xff]
    %v1359 = vld [vmem:[#allocation10 + $0x1e0] sm:$0xff]
    %v1360 = vld [vmem:[#allocation10 + $0x1e8] sm:$0xff]
    %v1361 = vld [vmem:[#allocation10 + $0x1f0] sm:$0xff]
    %v1362 = vld [vmem:[#allocation10 + $0x1f8] sm:$0xff]
    %v1363 = vld [vmem:[#allocation10 + $0x200] sm:$0xff]
    %v1364 = vld [vmem:[#allocation10 + $0x208] sm:$0xff]
    %v1365 = vld [vmem:[#allocation10 + $0x210] sm:$0xff]
    %v1366 = vld [vmem:[#allocation10 + $0x218] sm:$0xff]
    %v1367 = vld [vmem:[#allocation10 + $0x220] sm:$0xff]
    %v1368 = vld [vmem:[#allocation10 + $0x228] sm:$0xff]
    %v1369 = vld [vmem:[#allocation10 + $0x230] sm:$0xff]
    %v1370 = vld [vmem:[#allocation10 + $0x238] sm:$0xff]
    %v1371 = vld [vmem:[#allocation10 + $0x240] sm:$0xff]
    %v1372 = vld [vmem:[#allocation10 + $0x248] sm:$0xff]
    %v1373 = vld [vmem:[#allocation10 + $0x250] sm:$0xff]
    %v1374 = vld [vmem:[#allocation10 + $0x258] sm:$0xff]
    %v1375 = vld [vmem:[#allocation10 + $0x260] sm:$0xff]
    %v1376 = vld [vmem:[#allocation10 + $0x268] sm:$0xff]
    %v1377 = vld [vmem:[#allocation10 + $0x270] sm:$0xff]
    %v1378 = vld [vmem:[#allocation10 + $0x278] sm:$0xff]
    %v1379 = vld [vmem:[#allocation10 + $0x280] sm:$0xff]
    %v1380 = vld [vmem:[#allocation10 + $0x288] sm:$0xff]
    %v1381 = vld [vmem:[#allocation10 + $0x290] sm:$0xff]
    %v1382 = vld [vmem:[#allocation10 + $0x298] sm:$0xff]
    %v1383 = vld [vmem:[#allocation10 + $0x2a0] sm:$0xff]
    %v1384 = vld [vmem:[#allocation10 + $0x2a8] sm:$0xff]
    %v1385 = vld [vmem:[#allocation10 + $0x2b0] sm:$0xff]
    %v1386 = vld [vmem:[#allocation10 + $0x2b8] sm:$0xff]
    %v1387 = vld [vmem:[#allocation10 + $0x2c0] sm:$0xff]
    %v1388 = vld [vmem:[#allocation10 + $0x2c8] sm:$0xff]
    %v1389 = vld [vmem:[#allocation10 + $0x2d0] sm:$0xff]
    %v1390 = vld [vmem:[#allocation10 + $0x2d8] sm:$0xff]
    %v1391 = vld [vmem:[#allocation10 + $0x2e0] sm:$0xff]
    %v1392 = vld [vmem:[#allocation10 + $0x2e8] sm:$0xff]
    %v1393 = vld [vmem:[#allocation10 + $0x2f0] sm:$0xff]
    %v1394 = vld [vmem:[#allocation10 + $0x2f8] sm:$0xff]
    %v1395 = vld [vmem:[#allocation10 + $0x300] sm:$0xff]
    %v1396 = vld [vmem:[#allocation10 + $0x308] sm:$0xff]
    %v1397 = vld [vmem:[#allocation10 + $0x310] sm:$0xff]
    %v1398 = vld [vmem:[#allocation10 + $0x318] sm:$0xff]
    %v1399 = vld [vmem:[#allocation10 + $0x320] sm:$0xff]
    %v1400 = vld [vmem:[#allocation10 + $0x328] sm:$0xff]
    %v1401 = vld [vmem:[#allocation10 + $0x330] sm:$0xff]
    %v1402 = vld [vmem:[#allocation10 + $0x338] sm:$0xff]
    %v1403 = vld [vmem:[#allocation10 + $0x340] sm:$0xff]
    %v1404 = vld [vmem:[#allocation10 + $0x348] sm:$0xff]
    %v1405 = vld [vmem:[#allocation10 + $0x350] sm:$0xff]
    %v1406 = vld [vmem:[#allocation10 + $0x358] sm:$0xff]
    %v1407 = vld [vmem:[#allocation10 + $0x360] sm:$0xff]
    %v1408 = vld [vmem:[#allocation10 + $0x368] sm:$0xff]
    %v1409 = vld [vmem:[#allocation10 + $0x370] sm:$0xff]
    %v1410 = vld [vmem:[#allocation10 + $0x378] sm:$0xff]
    %v1411 = vld [vmem:[#allocation10 + $0x380] sm:$0xff]
    %v1412 = vld [vmem:[#allocation10 + $0x388] sm:$0xff]
    %v1413 = vld [vmem:[#allocation10 + $0x390] sm:$0xff]
    %v1414 = vld [vmem:[#allocation10 + $0x398] sm:$0xff]
    %v1415 = vld [vmem:[#allocation10 + $0x3a0] sm:$0xff]
    %v1416 = vld [vmem:[#allocation10 + $0x3a8] sm:$0xff]
    %v1417 = vld [vmem:[#allocation10 + $0x3b0] sm:$0xff]
    %v1418 = vld [vmem:[#allocation10 + $0x3b8] sm:$0xff]
    %v1419 = vld [vmem:[#allocation10 + $0x3c0] sm:$0xff]
    %v1420 = vld [vmem:[#allocation10 + $0x3c8] sm:$0xff]
    %v1421 = vld [vmem:[#allocation10 + $0x3d0] sm:$0xff]
    %v1422 = vld [vmem:[#allocation10 + $0x3d8] sm:$0xff]
    %v1423 = vld [vmem:[#allocation10 + $0x3e0] sm:$0xff]
    %v1424 = vld [vmem:[#allocation10 + $0x3e8] sm:$0xff]
    %v1425 = vld [vmem:[#allocation10 + $0x3f0] sm:$0xff]
    %v1426 = vld [vmem:[#allocation10 + $0x3f8] sm:$0xff]
    %v1427 = vld [vmem:[#allocation10 + $0x400] sm:$0xff]
    %v1428 = vld [vmem:[#allocation10 + $0x408] sm:$0xff]
    %v1429 = vld [vmem:[#allocation10 + $0x410] sm:$0xff]
    %v1430 = vld [vmem:[#allocation10 + $0x418] sm:$0xff]
    %v1431 = vld [vmem:[#allocation10 + $0x420] sm:$0xff]
    %v1432 = vld [vmem:[#allocation10 + $0x428] sm:$0xff]
    %v1433 = vld [vmem:[#allocation10 + $0x430] sm:$0xff]
    %v1434 = vld [vmem:[#allocation10 + $0x438] sm:$0xff]
    %v1435 = vld [vmem:[#allocation10 + $0x440] sm:$0xff]
    %v1436 = vld [vmem:[#allocation10 + $0x448] sm:$0xff]
    %v1437 = vld [vmem:[#allocation10 + $0x450] sm:$0xff]
    %v1438 = vld [vmem:[#allocation10 + $0x458] sm:$0xff]
    %v1439 = vld [vmem:[#allocation10 + $0x460] sm:$0xff]
    %v1440 = vld [vmem:[#allocation10 + $0x468] sm:$0xff]
    %v1441 = vld [vmem:[#allocation10 + $0x470] sm:$0xff]
    %v1442 = vld [vmem:[#allocation10 + $0x478] sm:$0xff]
    %v1443 = vld [vmem:[#allocation10 + $0x480] sm:$0xff]
    %v1444 = vld [vmem:[#allocation10 + $0x488] sm:$0xff]
    %v1445 = vld [vmem:[#allocation10 + $0x490] sm:$0xff]
    %v1446 = vld [vmem:[#allocation10 + $0x498] sm:$0xff]
    %v1447 = vld [vmem:[#allocation10 + $0x4a0] sm:$0xff]
    %v1448 = vld [vmem:[#allocation10 + $0x4a8] sm:$0xff]
    %v1449 = vld [vmem:[#allocation10 + $0x4b0] sm:$0xff]
    %v1450 = vld [vmem:[#allocation10 + $0x4b8] sm:$0xff]
    %v1451 = vld [vmem:[#allocation10 + $0x4c0] sm:$0xff]
    %v1452 = vld [vmem:[#allocation10 + $0x4c8] sm:$0xff]
    %v1453 = vld [vmem:[#allocation10 + $0x4d0] sm:$0xff]
    %v1454 = vld [vmem:[#allocation10 + $0x4d8] sm:$0xff]
    %v1455 = vld [vmem:[#allocation10 + $0x4e0] sm:$0xff]
    %v1456 = vld [vmem:[#allocation10 + $0x4e8] sm:$0xff]
    %v1457 = vld [vmem:[#allocation10 + $0x4f0] sm:$0xff]
    %v1458 = vld [vmem:[#allocation10 + $0x4f8] sm:$0xff]
    %v1459 = vld [vmem:[#allocation10 + $0x500] sm:$0xff]
    %v1460 = vld [vmem:[#allocation10 + $0x508] sm:$0xff]
    %v1461 = vld [vmem:[#allocation10 + $0x510] sm:$0xff]
    %v1462 = vld [vmem:[#allocation10 + $0x518] sm:$0xff]
    %v1463 = vld [vmem:[#allocation10 + $0x520] sm:$0xff]
    %v1464 = vld [vmem:[#allocation10 + $0x528] sm:$0xff]
    %v1465 = vld [vmem:[#allocation10 + $0x530] sm:$0xff]
    %v1466 = vld [vmem:[#allocation10 + $0x538] sm:$0xff]
    %v1467 = vld [vmem:[#allocation10 + $0x540] sm:$0xff]
    %v1468 = vld [vmem:[#allocation10 + $0x548] sm:$0xff]
    %v1469 = vld [vmem:[#allocation10 + $0x550] sm:$0xff]
    %v1470 = vld [vmem:[#allocation10 + $0x558] sm:$0xff]
    %v1471 = vld [vmem:[#allocation10 + $0x560] sm:$0xff]
    %v1472 = vld [vmem:[#allocation10 + $0x568] sm:$0xff]
    %v1473 = vld [vmem:[#allocation10 + $0x570] sm:$0xff]
    %v1474 = vld [vmem:[#allocation10 + $0x578] sm:$0xff]
    %v1475 = vld [vmem:[#allocation10 + $0x580] sm:$0xff]
    %v1476 = vld [vmem:[#allocation10 + $0x588] sm:$0xff]
    %v1477 = vld [vmem:[#allocation10 + $0x590] sm:$0xff]
    %v1478 = vld [vmem:[#allocation10 + $0x598] sm:$0xff]
    %v1479 = vld [vmem:[#allocation10 + $0x5a0] sm:$0xff]
    %v1480 = vld [vmem:[#allocation10 + $0x5a8] sm:$0xff]
    %v1481 = vld [vmem:[#allocation10 + $0x5b0] sm:$0xff]
    %v1482 = vld [vmem:[#allocation10 + $0x5b8] sm:$0xff]
    %v1483 = vld [vmem:[#allocation10 + $0x5c0] sm:$0xff]
    %v1484 = vld [vmem:[#allocation10 + $0x5c8] sm:$0xff]
    %v1485 = vld [vmem:[#allocation10 + $0x5d0] sm:$0xff]
    %v1486 = vld [vmem:[#allocation10 + $0x5d8] sm:$0xff]
    %v1487 = vld [vmem:[#allocation10 + $0x5e0] sm:$0xff]
    %v1488 = vld [vmem:[#allocation10 + $0x5e8] sm:$0xff]
    %v1489 = vld [vmem:[#allocation10 + $0x5f0] sm:$0xff]
    %v1490 = vld [vmem:[#allocation10 + $0x5f8] sm:$0xff]
    %v1491 = vld [vmem:[#allocation10 + $0x600] sm:$0xff]
    %v1492 = vld [vmem:[#allocation10 + $0x608] sm:$0xff]
    %v1493 = vld [vmem:[#allocation10 + $0x610] sm:$0xff]
    %v1494 = vld [vmem:[#allocation10 + $0x618] sm:$0xff]
    %v1495 = vld [vmem:[#allocation10 + $0x620] sm:$0xff]
    %v1496 = vld [vmem:[#allocation10 + $0x628] sm:$0xff]
    %v1497 = vld [vmem:[#allocation10 + $0x630] sm:$0xff]
    %v1498 = vld [vmem:[#allocation10 + $0x638] sm:$0xff]
    %v1499 = vld [vmem:[#allocation10 + $0x640] sm:$0xff]
    %v1500 = vld [vmem:[#allocation10 + $0x648] sm:$0xff]
    %v1501 = vld [vmem:[#allocation10 + $0x650] sm:$0xff]
    %v1502 = vld [vmem:[#allocation10 + $0x658] sm:$0xff]
    %v1503 = vld [vmem:[#allocation10 + $0x660] sm:$0xff]
    %v1504 = vld [vmem:[#allocation10 + $0x668] sm:$0xff]
    %v1505 = vld [vmem:[#allocation10 + $0x670] sm:$0xff]
    %v1506 = vld [vmem:[#allocation10 + $0x678] sm:$0xff]
    %v1507 = vld [vmem:[#allocation10 + $0x680] sm:$0xff]
    %v1508 = vld [vmem:[#allocation10 + $0x688] sm:$0xff]
    %v1509 = vld [vmem:[#allocation10 + $0x690] sm:$0xff]
    %v1510 = vld [vmem:[#allocation10 + $0x698] sm:$0xff]
    %v1511 = vld [vmem:[#allocation10 + $0x6a0] sm:$0xff]
    %v1512 = vld [vmem:[#allocation10 + $0x6a8] sm:$0xff]
    %v1513 = vld [vmem:[#allocation10 + $0x6b0] sm:$0xff]
    %v1514 = vld [vmem:[#allocation10 + $0x6b8] sm:$0xff]
    %v1515 = vld [vmem:[#allocation10 + $0x6c0] sm:$0xff]
    %v1516 = vld [vmem:[#allocation10 + $0x6c8] sm:$0xff]
    %v1517 = vld [vmem:[#allocation10 + $0x6d0] sm:$0xff]
    %v1518 = vld [vmem:[#allocation10 + $0x6d8] sm:$0xff]
    %v1519 = vld [vmem:[#allocation10 + $0x6e0] sm:$0xff]
    %v1520 = vld [vmem:[#allocation10 + $0x6e8] sm:$0xff]
    %v1521 = vld [vmem:[#allocation10 + $0x6f0] sm:$0xff]
    %v1522 = vld [vmem:[#allocation10 + $0x6f8] sm:$0xff]
    %v1523 = vld [vmem:[#allocation10 + $0x700] sm:$0xff]
    %v1524 = vld [vmem:[#allocation10 + $0x708] sm:$0xff]
    %v1525 = vld [vmem:[#allocation10 + $0x710] sm:$0xff]
    %v1526 = vld [vmem:[#allocation10 + $0x718] sm:$0xff]
    %v1527 = vld [vmem:[#allocation10 + $0x720] sm:$0xff]
    %v1528 = vld [vmem:[#allocation10 + $0x728] sm:$0xff]
    %v1529 = vld [vmem:[#allocation10 + $0x730] sm:$0xff]
    %v1530 = vld [vmem:[#allocation10 + $0x738] sm:$0xff]
    %v1531 = vld [vmem:[#allocation10 + $0x740] sm:$0xff]
    %v1532 = vld [vmem:[#allocation10 + $0x748] sm:$0xff]
    %v1533 = vld [vmem:[#allocation10 + $0x750] sm:$0xff]
    %v1534 = vld [vmem:[#allocation10 + $0x758] sm:$0xff]
    %v1535 = vld [vmem:[#allocation10 + $0x760] sm:$0xff]
    %v1536 = vld [vmem:[#allocation10 + $0x768] sm:$0xff]
    %v1537 = vld [vmem:[#allocation10 + $0x770] sm:$0xff]
    %v1538 = vld [vmem:[#allocation10 + $0x778] sm:$0xff]
    %v1539 = vld [vmem:[#allocation10 + $0x780] sm:$0xff]
    %v1540 = vld [vmem:[#allocation10 + $0x788] sm:$0xff]
    %v1541 = vld [vmem:[#allocation10 + $0x790] sm:$0xff]
    %v1542 = vld [vmem:[#allocation10 + $0x798] sm:$0xff]
    %v1543 = vld [vmem:[#allocation10 + $0x7a0] sm:$0xff]
    %v1544 = vld [vmem:[#allocation10 + $0x7a8] sm:$0xff]
    %v1545 = vld [vmem:[#allocation10 + $0x7b0] sm:$0xff]
    %v1546 = vld [vmem:[#allocation10 + $0x7b8] sm:$0xff]
    %v1547 = vld [vmem:[#allocation10 + $0x7c0] sm:$0xff]
    %v1548 = vld [vmem:[#allocation10 + $0x7c8] sm:$0xff]
    %v1549 = vld [vmem:[#allocation10 + $0x7d0] sm:$0xff]
    %v1550 = vld [vmem:[#allocation10 + $0x7d8] sm:$0xff]
    %v1551 = vld [vmem:[#allocation10 + $0x7e0] sm:$0xff]
    %v1552 = vld [vmem:[#allocation10 + $0x7e8] sm:$0xff]
    %v1553 = vld [vmem:[#allocation10 + $0x7f0] sm:$0xff]
    %v1554 = vld [vmem:[#allocation10 + $0x7f8] sm:$0xff]
    %v1555 = vld [vmem:[#allocation10 + $0x800] sm:$0xff]
    %v1556 = vld [vmem:[#allocation10 + $0x808] sm:$0xff]
    %v1557 = vld [vmem:[#allocation10 + $0x810] sm:$0xff]
    %v1558 = vld [vmem:[#allocation10 + $0x818] sm:$0xff]
    %v1559 = vld [vmem:[#allocation10 + $0x820] sm:$0xff]
    %v1560 = vld [vmem:[#allocation10 + $0x828] sm:$0xff]
    %v1561 = vld [vmem:[#allocation10 + $0x830] sm:$0xff]
    %v1562 = vld [vmem:[#allocation10 + $0x838] sm:$0xff]
    %v1563 = vld [vmem:[#allocation10 + $0x840] sm:$0xff]
    %v1564 = vld [vmem:[#allocation10 + $0x848] sm:$0xff]
    %v1565 = vld [vmem:[#allocation10 + $0x850] sm:$0xff]
    %v1566 = vld [vmem:[#allocation10 + $0x858] sm:$0xff]
    %v1567 = vld [vmem:[#allocation10 + $0x860] sm:$0xff]
    %v1568 = vld [vmem:[#allocation10 + $0x868] sm:$0xff]
    %v1569 = vld [vmem:[#allocation10 + $0x870] sm:$0xff]
    %v1570 = vld [vmem:[#allocation10 + $0x878] sm:$0xff]
    %v1571 = vld [vmem:[#allocation10 + $0x880] sm:$0xff]
    %v1572 = vld [vmem:[#allocation10 + $0x888] sm:$0xff]
    %v1573 = vld [vmem:[#allocation10 + $0x890] sm:$0xff]
    %v1574 = vld [vmem:[#allocation10 + $0x898] sm:$0xff]
    %v1575 = vld [vmem:[#allocation10 + $0x8a0] sm:$0xff]
    %v1576 = vld [vmem:[#allocation10 + $0x8a8] sm:$0xff]
    %v1577 = vld [vmem:[#allocation10 + $0x8b0] sm:$0xff]
    %v1578 = vld [vmem:[#allocation10 + $0x8b8] sm:$0xff]
    %v1579 = vld [vmem:[#allocation10 + $0x8c0] sm:$0xff]
    %v1580 = vld [vmem:[#allocation10 + $0x8c8] sm:$0xff]
    %v1581 = vld [vmem:[#allocation10 + $0x8d0] sm:$0xff]
    %v1582 = vld [vmem:[#allocation10 + $0x8d8] sm:$0xff]
    %v1583 = vld [vmem:[#allocation10 + $0x8e0] sm:$0xff]
    %v1584 = vld [vmem:[#allocation10 + $0x8e8] sm:$0xff]
    %v1585 = vld [vmem:[#allocation10 + $0x8f0] sm:$0xff]
    %v1586 = vld [vmem:[#allocation10 + $0x8f8] sm:$0xff]
    %v1587 = vld [vmem:[#allocation10 + $0x900] sm:$0xff]
    %v1588 = vld [vmem:[#allocation10 + $0x908] sm:$0xff]
    %v1589 = vld [vmem:[#allocation10 + $0x910] sm:$0xff]
    %v1590 = vld [vmem:[#allocation10 + $0x918] sm:$0xff]
    %v1591 = vld [vmem:[#allocation10 + $0x920] sm:$0xff]
    %v1592 = vld [vmem:[#allocation10 + $0x928] sm:$0xff]
    %v1593 = vld [vmem:[#allocation10 + $0x930] sm:$0xff]
    %v1594 = vld [vmem:[#allocation10 + $0x938] sm:$0xff]
    %v1595 = vld [vmem:[#allocation10 + $0x940] sm:$0xff]
    %v1596 = vld [vmem:[#allocation10 + $0x948] sm:$0xff]
    %v1597 = vld [vmem:[#allocation10 + $0x950] sm:$0xff]
    %v1598 = vld [vmem:[#allocation10 + $0x958] sm:$0xff]
    %v1599 = vld [vmem:[#allocation10 + $0x960] sm:$0xff]
    %v1600 = vld [vmem:[#allocation10 + $0x968] sm:$0xff]
    %v1601 = vld [vmem:[#allocation10 + $0x970] sm:$0xff]
    %v1602 = vld [vmem:[#allocation10 + $0x978] sm:$0xff]
    %v1603 = vld [vmem:[#allocation10 + $0x980] sm:$0xff]
    %v1604 = vld [vmem:[#allocation10 + $0x988] sm:$0xff]
    %v1605 = vld [vmem:[#allocation10 + $0x990] sm:$0xff]
    %v1606 = vld [vmem:[#allocation10 + $0x998] sm:$0xff]
    %v1607 = vld [vmem:[#allocation10 + $0x9a0] sm:$0xff]
    %v1608 = vld [vmem:[#allocation10 + $0x9a8] sm:$0xff]
    %v1609 = vld [vmem:[#allocation10 + $0x9b0] sm:$0xff]
    %v1610 = vld [vmem:[#allocation10 + $0x9b8] sm:$0xff]
    %v1611 = vld [vmem:[#allocation10 + $0x9c0] sm:$0xff]
    %v1612 = vld [vmem:[#allocation10 + $0x9c8] sm:$0xff]
    %v1613 = vld [vmem:[#allocation10 + $0x9d0] sm:$0xff]
    %v1614 = vld [vmem:[#allocation10 + $0x9d8] sm:$0xff]
    %v1615 = vld [vmem:[#allocation10 + $0x9e0] sm:$0xff]
    %v1616 = vld [vmem:[#allocation10 + $0x9e8] sm:$0xff]
    %v1617 = vld [vmem:[#allocation10 + $0x9f0] sm:$0xff]
    %v1618 = vld [vmem:[#allocation10 + $0x9f8] sm:$0xff]
    %v1619 = vld [vmem:[#allocation10 + $0xa00] sm:$0xff]
    %v1620 = vld [vmem:[#allocation10 + $0xa08] sm:$0xff]
    %v1621 = vld [vmem:[#allocation10 + $0xa10] sm:$0xff]
    %v1622 = vld [vmem:[#allocation10 + $0xa18] sm:$0xff]
    %v1623 = vld [vmem:[#allocation10 + $0xa20] sm:$0xff]
    %v1624 = vld [vmem:[#allocation10 + $0xa28] sm:$0xff]
    %v1625 = vld [vmem:[#allocation10 + $0xa30] sm:$0xff]
    %v1626 = vld [vmem:[#allocation10 + $0xa38] sm:$0xff]
    %v1627 = vld [vmem:[#allocation10 + $0xa40] sm:$0xff]
    %v1628 = vld [vmem:[#allocation10 + $0xa48] sm:$0xff]
    %v1629 = vld [vmem:[#allocation10 + $0xa50] sm:$0xff]
    %v1630 = vld [vmem:[#allocation10 + $0xa58] sm:$0xff]
    %v1631 = vld [vmem:[#allocation10 + $0xa60] sm:$0xff]
    %v1632 = vld [vmem:[#allocation10 + $0xa68] sm:$0xff]
    %v1633 = vld [vmem:[#allocation10 + $0xa70] sm:$0xff]
    %v1634 = vld [vmem:[#allocation10 + $0xa78] sm:$0xff]
    %v1635 = vld [vmem:[#allocation10 + $0xa80] sm:$0xff]
    %v1636 = vld [vmem:[#allocation10 + $0xa88] sm:$0xff]
    %v1637 = vld [vmem:[#allocation10 + $0xa90] sm:$0xff]
    %v1638 = vld [vmem:[#allocation10 + $0xa98] sm:$0xff]
    %v1639 = vld [vmem:[#allocation10 + $0xaa0] sm:$0xff]
    %v1640 = vld [vmem:[#allocation10 + $0xaa8] sm:$0xff]
    %v1641 = vld [vmem:[#allocation10 + $0xab0] sm:$0xff]
    %v1642 = vld [vmem:[#allocation10 + $0xab8] sm:$0xff]
    %v1643 = vld [vmem:[#allocation10 + $0xac0] sm:$0xff]
    %v1644 = vld [vmem:[#allocation10 + $0xac8] sm:$0xff]
    %v1645 = vld [vmem:[#allocation10 + $0xad0] sm:$0xff]
    %v1646 = vld [vmem:[#allocation10 + $0xad8] sm:$0xff]
    %v1647 = vld [vmem:[#allocation10 + $0xae0] sm:$0xff]
    %v1648 = vld [vmem:[#allocation10 + $0xae8] sm:$0xff]
    %v1649 = vld [vmem:[#allocation10 + $0xaf0] sm:$0xff]
    %v1650 = vld [vmem:[#allocation10 + $0xaf8] sm:$0xff]
    %v1651 = vld [vmem:[#allocation10 + $0xb00] sm:$0xff]
    %v1652 = vld [vmem:[#allocation10 + $0xb08] sm:$0xff]
    %v1653 = vld [vmem:[#allocation10 + $0xb10] sm:$0xff]
    %v1654 = vld [vmem:[#allocation10 + $0xb18] sm:$0xff]
    %v1655 = vld [vmem:[#allocation10 + $0xb20] sm:$0xff]
    %v1656 = vld [vmem:[#allocation10 + $0xb28] sm:$0xff]
    %v1657 = vld [vmem:[#allocation10 + $0xb30] sm:$0xff]
    %v1658 = vld [vmem:[#allocation10 + $0xb38] sm:$0xff]
    %v1659 = vld [vmem:[#allocation10 + $0xb40] sm:$0xff]
    %v1660 = vld [vmem:[#allocation10 + $0xb48] sm:$0xff]
    %v1661 = vld [vmem:[#allocation10 + $0xb50] sm:$0xff]
    %v1662 = vld [vmem:[#allocation10 + $0xb58] sm:$0xff]
    %v1663 = vld [vmem:[#allocation10 + $0xb60] sm:$0xff]
    %v1664 = vld [vmem:[#allocation10 + $0xb68] sm:$0xff]
    %v1665 = vld [vmem:[#allocation10 + $0xb70] sm:$0xff]
    %v1666 = vld [vmem:[#allocation10 + $0xb78] sm:$0xff]
    %v1667 = vld [vmem:[#allocation10 + $0xb80] sm:$0xff]
    %v1668 = vld [vmem:[#allocation10 + $0xb88] sm:$0xff]
    %v1669 = vld [vmem:[#allocation10 + $0xb90] sm:$0xff]
    %v1670 = vld [vmem:[#allocation10 + $0xb98] sm:$0xff]
    %v1671 = vld [vmem:[#allocation10 + $0xba0] sm:$0xff]
    %v1672 = vld [vmem:[#allocation10 + $0xba8] sm:$0xff]
    %v1673 = vld [vmem:[#allocation10 + $0xbb0] sm:$0xff]
    %v1674 = vld [vmem:[#allocation10 + $0xbb8] sm:$0xff]
    %v1675 = vld [vmem:[#allocation10 + $0xbc0] sm:$0xff]
    %v1676 = vld [vmem:[#allocation10 + $0xbc8] sm:$0xff]
    %v1677 = vld [vmem:[#allocation10 + $0xbd0] sm:$0xff]
    %v1678 = vld [vmem:[#allocation10 + $0xbd8] sm:$0xff]
    %v1679 = vld [vmem:[#allocation10 + $0xbe0] sm:$0xff]
    %v1680 = vld [vmem:[#allocation10 + $0xbe8] sm:$0xff]
    %v1681 = vld [vmem:[#allocation10 + $0xbf0] sm:$0xff]
    %v1682 = vld [vmem:[#allocation10 + $0xbf8] sm:$0xff]
    %v1683 = vld [vmem:[#allocation12] sm:$0xff]
    %v1684 = vld [vmem:[#allocation12 + $0x8] sm:$0xf]
    %v2069 = vunpack.c.l.b16 %v1299
    %v2070 = vunpack.c.h.b16 %v1299
    %v2071 = vunpack.c.l.b16 %v1300
    %v2072 = vunpack.c.h.b16 %v1300
    %v2073 = vunpack.c.l.b16 %v1301
    %v2074 = vunpack.c.h.b16 %v1301
    %v2075 = vunpack.c.l.b16 %v1302
    %v2076 = vunpack.c.h.b16 %v1302
    %v2077 = vunpack.c.l.b16 %v1303
    %v2078 = vunpack.c.h.b16 %v1303
    %v2079 = vunpack.c.l.b16 %v1304
    %v2080 = vunpack.c.h.b16 %v1304
    %v2081 = vunpack.c.l.b16 %v1305
    %v2082 = vunpack.c.h.b16 %v1305
    %v2083 = vunpack.c.l.b16 %v1306
    %v2084 = vunpack.c.h.b16 %v1306
    %v2085 = vunpack.c.l.b16 %v1307
    %v2086 = vunpack.c.h.b16 %v1307
    %v2087 = vunpack.c.l.b16 %v1308
    %v2088 = vunpack.c.h.b16 %v1308
    %v2089 = vunpack.c.l.b16 %v1309
    %v2090 = vunpack.c.h.b16 %v1309
    %v2091 = vunpack.c.l.b16 %v1310
    %v2092 = vunpack.c.h.b16 %v1310
    %v2093 = vunpack.c.l.b16 %v1311
    %v2094 = vunpack.c.h.b16 %v1311
    %v2095 = vunpack.c.l.b16 %v1312
    %v2096 = vunpack.c.h.b16 %v1312
    %v2097 = vunpack.c.l.b16 %v1313
    %v2098 = vunpack.c.h.b16 %v1313
    %v2099 = vunpack.c.l.b16 %v1314
    %v2100 = vunpack.c.h.b16 %v1314
    %v2101 = vunpack.c.l.b16 %v1315
    %v2102 = vunpack.c.h.b16 %v1315
    %v2103 = vunpack.c.l.b16 %v1316
    %v2104 = vunpack.c.h.b16 %v1316
    %v2105 = vunpack.c.l.b16 %v1317
    %v2106 = vunpack.c.h.b16 %v1317
    %v2107 = vunpack.c.l.b16 %v1318
    %v2108 = vunpack.c.h.b16 %v1318
    %v2109 = vunpack.c.l.b16 %v1319
    %v2110 = vunpack.c.h.b16 %v1319
    %v2111 = vunpack.c.l.b16 %v1320
    %v2112 = vunpack.c.h.b16 %v1320
    %v2113 = vunpack.c.l.b16 %v1321
    %v2114 = vunpack.c.h.b16 %v1321
    %v2115 = vunpack.c.l.b16 %v1322
    %v2116 = vunpack.c.h.b16 %v1322
    %v2117 = vunpack.c.l.b16 %v1323
    %v2118 = vunpack.c.h.b16 %v1323
    %v2119 = vunpack.c.l.b16 %v1324
    %v2120 = vunpack.c.h.b16 %v1324
    %v2121 = vunpack.c.l.b16 %v1325
    %v2122 = vunpack.c.h.b16 %v1325
    %v2123 = vunpack.c.l.b16 %v1326
    %v2124 = vunpack.c.h.b16 %v1326
    %v2125 = vunpack.c.l.b16 %v1327
    %v2126 = vunpack.c.h.b16 %v1327
    %v2127 = vunpack.c.l.b16 %v1328
    %v2128 = vunpack.c.h.b16 %v1328
    %v2129 = vunpack.c.l.b16 %v1329
    %v2130 = vunpack.c.h.b16 %v1329
    %v2131 = vunpack.c.l.b16 %v1330
    %v2132 = vunpack.c.h.b16 %v1330
    %v2133 = vunpack.c.l.b16 %v1331
    %v2134 = vunpack.c.h.b16 %v1331
    %v2135 = vunpack.c.l.b16 %v1332
    %v2136 = vunpack.c.h.b16 %v1332
    %v2137 = vunpack.c.l.b16 %v1333
    %v2138 = vunpack.c.h.b16 %v1333
    %v2139 = vunpack.c.l.b16 %v1334
    %v2140 = vunpack.c.h.b16 %v1334
    %v2141 = vunpack.c.l.b16 %v1335
    %v2142 = vunpack.c.h.b16 %v1335
    %v2143 = vunpack.c.l.b16 %v1336
    %v2144 = vunpack.c.h.b16 %v1336
    %v2145 = vunpack.c.l.b16 %v1337
    %v2146 = vunpack.c.h.b16 %v1337
    %v2147 = vunpack.c.l.b16 %v1338
    %v2148 = vunpack.c.h.b16 %v1338
    %v2149 = vunpack.c.l.b16 %v1339
    %v2150 = vunpack.c.h.b16 %v1339
    %v2151 = vunpack.c.l.b16 %v1340
    %v2152 = vunpack.c.h.b16 %v1340
    %v2153 = vunpack.c.l.b16 %v1341
    %v2154 = vunpack.c.h.b16 %v1341
    %v2155 = vunpack.c.l.b16 %v1342
    %v2156 = vunpack.c.h.b16 %v1342
    %v2157 = vunpack.c.l.b16 %v1343
    %v2158 = vunpack.c.h.b16 %v1343
    %v2159 = vunpack.c.l.b16 %v1344
    %v2160 = vunpack.c.h.b16 %v1344
    %v2161 = vunpack.c.l.b16 %v1345
    %v2162 = vunpack.c.h.b16 %v1345
    %v2163 = vunpack.c.l.b16 %v1346
    %v2164 = vunpack.c.h.b16 %v1346
    %v2165 = vunpack.c.l.b16 %v1347
    %v2166 = vunpack.c.h.b16 %v1347
    %v2167 = vunpack.c.l.b16 %v1348
    %v2168 = vunpack.c.h.b16 %v1348
    %v2169 = vunpack.c.l.b16 %v1349
    %v2170 = vunpack.c.h.b16 %v1349
    %v2171 = vunpack.c.l.b16 %v1350
    %v2172 = vunpack.c.h.b16 %v1350
    %v2173 = vunpack.c.l.b16 %v1351
    %v2174 = vunpack.c.h.b16 %v1351
    %v2175 = vunpack.c.l.b16 %v1352
    %v2176 = vunpack.c.h.b16 %v1352
    %v2177 = vunpack.c.l.b16 %v1353
    %v2178 = vunpack.c.h.b16 %v1353
    %v2179 = vunpack.c.l.b16 %v1354
    %v2180 = vunpack.c.h.b16 %v1354
    %v2181 = vunpack.c.l.b16 %v1355
    %v2182 = vunpack.c.h.b16 %v1355
    %v2183 = vunpack.c.l.b16 %v1356
    %v2184 = vunpack.c.h.b16 %v1356
    %v2185 = vunpack.c.l.b16 %v1357
    %v2186 = vunpack.c.h.b16 %v1357
    %v2187 = vunpack.c.l.b16 %v1358
    %v2188 = vunpack.c.h.b16 %v1358
    %v2189 = vunpack.c.l.b16 %v1359
    %v2190 = vunpack.c.h.b16 %v1359
    %v2191 = vunpack.c.l.b16 %v1360
    %v2192 = vunpack.c.h.b16 %v1360
    %v2193 = vunpack.c.l.b16 %v1361
    %v2194 = vunpack.c.h.b16 %v1361
    %v2195 = vunpack.c.l.b16 %v1362
    %v2196 = vunpack.c.h.b16 %v1362
    %v2197 = vunpack.c.l.b16 %v1363
    %v2198 = vunpack.c.h.b16 %v1363
    %v2199 = vunpack.c.l.b16 %v1364
    %v2200 = vunpack.c.h.b16 %v1364
    %v2201 = vunpack.c.l.b16 %v1365
    %v2202 = vunpack.c.h.b16 %v1365
    %v2203 = vunpack.c.l.b16 %v1366
    %v2204 = vunpack.c.h.b16 %v1366
    %v2205 = vunpack.c.l.b16 %v1367
    %v2206 = vunpack.c.h.b16 %v1367
    %v2207 = vunpack.c.l.b16 %v1368
    %v2208 = vunpack.c.h.b16 %v1368
    %v2209 = vunpack.c.l.b16 %v1369
    %v2210 = vunpack.c.h.b16 %v1369
    %v2211 = vunpack.c.l.b16 %v1370
    %v2212 = vunpack.c.h.b16 %v1370
    %v2213 = vunpack.c.l.b16 %v1371
    %v2214 = vunpack.c.h.b16 %v1371
    %v2215 = vunpack.c.l.b16 %v1372
    %v2216 = vunpack.c.h.b16 %v1372
    %v2217 = vunpack.c.l.b16 %v1373
    %v2218 = vunpack.c.h.b16 %v1373
    %v2219 = vunpack.c.l.b16 %v1374
    %v2220 = vunpack.c.h.b16 %v1374
    %v2221 = vunpack.c.l.b16 %v1375
    %v2222 = vunpack.c.h.b16 %v1375
    %v2223 = vunpack.c.l.b16 %v1376
    %v2224 = vunpack.c.h.b16 %v1376
    %v2225 = vunpack.c.l.b16 %v1377
    %v2226 = vunpack.c.h.b16 %v1377
    %v2227 = vunpack.c.l.b16 %v1378
    %v2228 = vunpack.c.h.b16 %v1378
    %v2229 = vunpack.c.l.b16 %v1379
    %v2230 = vunpack.c.h.b16 %v1379
    %v2231 = vunpack.c.l.b16 %v1380
    %v2232 = vunpack.c.h.b16 %v1380
    %v2233 = vunpack.c.l.b16 %v1381
    %v2234 = vunpack.c.h.b16 %v1381
    %v2235 = vunpack.c.l.b16 %v1382
    %v2236 = vunpack.c.h.b16 %v1382
    %v2237 = vunpack.c.l.b16 %v1383
    %v2238 = vunpack.c.h.b16 %v1383
    %v2239 = vunpack.c.l.b16 %v1384
    %v2240 = vunpack.c.h.b16 %v1384
    %v2241 = vunpack.c.l.b16 %v1385
    %v2242 = vunpack.c.h.b16 %v1385
    %v2243 = vunpack.c.l.b16 %v1386
    %v2244 = vunpack.c.h.b16 %v1386
    %v2245 = vunpack.c.l.b16 %v1387
    %v2246 = vunpack.c.h.b16 %v1387
    %v2247 = vunpack.c.l.b16 %v1388
    %v2248 = vunpack.c.h.b16 %v1388
    %v2249 = vunpack.c.l.b16 %v1389
    %v2250 = vunpack.c.h.b16 %v1389
    %v2251 = vunpack.c.l.b16 %v1390
    %v2252 = vunpack.c.h.b16 %v1390
    %v2253 = vunpack.c.l.b16 %v1391
    %v2254 = vunpack.c.h.b16 %v1391
    %v2255 = vunpack.c.l.b16 %v1392
    %v2256 = vunpack.c.h.b16 %v1392
    %v2257 = vunpack.c.l.b16 %v1393
    %v2258 = vunpack.c.h.b16 %v1393
    %v2259 = vunpack.c.l.b16 %v1394
    %v2260 = vunpack.c.h.b16 %v1394
    %v2261 = vunpack.c.l.b16 %v1395
    %v2262 = vunpack.c.h.b16 %v1395
    %v2263 = vunpack.c.l.b16 %v1396
    %v2264 = vunpack.c.h.b16 %v1396
    %v2265 = vunpack.c.l.b16 %v1397
    %v2266 = vunpack.c.h.b16 %v1397
    %v2267 = vunpack.c.l.b16 %v1398
    %v2268 = vunpack.c.h.b16 %v1398
    %v2269 = vunpack.c.l.b16 %v1399
    %v2270 = vunpack.c.h.b16 %v1399
    %v2271 = vunpack.c.l.b16 %v1400
    %v2272 = vunpack.c.h.b16 %v1400
    %v2273 = vunpack.c.l.b16 %v1401
    %v2274 = vunpack.c.h.b16 %v1401
    %v2275 = vunpack.c.l.b16 %v1402
    %v2276 = vunpack.c.h.b16 %v1402
    %v2277 = vunpack.c.l.b16 %v1403
    %v2278 = vunpack.c.h.b16 %v1403
    %v2279 = vunpack.c.l.b16 %v1404
    %v2280 = vunpack.c.h.b16 %v1404
    %v2281 = vunpack.c.l.b16 %v1405
    %v2282 = vunpack.c.h.b16 %v1405
    %v2283 = vunpack.c.l.b16 %v1406
    %v2284 = vunpack.c.h.b16 %v1406
    %v2285 = vunpack.c.l.b16 %v1407
    %v2286 = vunpack.c.h.b16 %v1407
    %v2287 = vunpack.c.l.b16 %v1408
    %v2288 = vunpack.c.h.b16 %v1408
    %v2289 = vunpack.c.l.b16 %v1409
    %v2290 = vunpack.c.h.b16 %v1409
    %v2291 = vunpack.c.l.b16 %v1410
    %v2292 = vunpack.c.h.b16 %v1410
    %v2293 = vunpack.c.l.b16 %v1411
    %v2294 = vunpack.c.h.b16 %v1411
    %v2295 = vunpack.c.l.b16 %v1412
    %v2296 = vunpack.c.h.b16 %v1412
    %v2297 = vunpack.c.l.b16 %v1413
    %v2298 = vunpack.c.h.b16 %v1413
    %v2299 = vunpack.c.l.b16 %v1414
    %v2300 = vunpack.c.h.b16 %v1414
    %v2301 = vunpack.c.l.b16 %v1415
    %v2302 = vunpack.c.h.b16 %v1415
    %v2303 = vunpack.c.l.b16 %v1416
    %v2304 = vunpack.c.h.b16 %v1416
    %v2305 = vunpack.c.l.b16 %v1417
    %v2306 = vunpack.c.h.b16 %v1417
    %v2307 = vunpack.c.l.b16 %v1418
    %v2308 = vunpack.c.h.b16 %v1418
    %v2309 = vunpack.c.l.b16 %v1419
    %v2310 = vunpack.c.h.b16 %v1419
    %v2311 = vunpack.c.l.b16 %v1420
    %v2312 = vunpack.c.h.b16 %v1420
    %v2313 = vunpack.c.l.b16 %v1421
    %v2314 = vunpack.c.h.b16 %v1421
    %v2315 = vunpack.c.l.b16 %v1422
    %v2316 = vunpack.c.h.b16 %v1422
    %v2317 = vunpack.c.l.b16 %v1423
    %v2318 = vunpack.c.h.b16 %v1423
    %v2319 = vunpack.c.l.b16 %v1424
    %v2320 = vunpack.c.h.b16 %v1424
    %v2321 = vunpack.c.l.b16 %v1425
    %v2322 = vunpack.c.h.b16 %v1425
    %v2323 = vunpack.c.l.b16 %v1426
    %v2324 = vunpack.c.h.b16 %v1426
    %v2325 = vunpack.c.l.b16 %v1427
    %v2326 = vunpack.c.h.b16 %v1427
    %v2327 = vunpack.c.l.b16 %v1428
    %v2328 = vunpack.c.h.b16 %v1428
    %v2329 = vunpack.c.l.b16 %v1429
    %v2330 = vunpack.c.h.b16 %v1429
    %v2331 = vunpack.c.l.b16 %v1430
    %v2332 = vunpack.c.h.b16 %v1430
    %v2333 = vunpack.c.l.b16 %v1431
    %v2334 = vunpack.c.h.b16 %v1431
    %v2335 = vunpack.c.l.b16 %v1432
    %v2336 = vunpack.c.h.b16 %v1432
    %v2337 = vunpack.c.l.b16 %v1433
    %v2338 = vunpack.c.h.b16 %v1433
    %v2339 = vunpack.c.l.b16 %v1434
    %v2340 = vunpack.c.h.b16 %v1434
    %v2341 = vunpack.c.l.b16 %v1435
    %v2342 = vunpack.c.h.b16 %v1435
    %v2343 = vunpack.c.l.b16 %v1436
    %v2344 = vunpack.c.h.b16 %v1436
    %v2345 = vunpack.c.l.b16 %v1437
    %v2346 = vunpack.c.h.b16 %v1437
    %v2347 = vunpack.c.l.b16 %v1438
    %v2348 = vunpack.c.h.b16 %v1438
    %v2349 = vunpack.c.l.b16 %v1439
    %v2350 = vunpack.c.h.b16 %v1439
    %v2351 = vunpack.c.l.b16 %v1440
    %v2352 = vunpack.c.h.b16 %v1440
    %v2353 = vunpack.c.l.b16 %v1441
    %v2354 = vunpack.c.h.b16 %v1441
    %v2355 = vunpack.c.l.b16 %v1442
    %v2356 = vunpack.c.h.b16 %v1442
    %v2357 = vunpack.c.l.b16 %v1443
    %v2358 = vunpack.c.h.b16 %v1443
    %v2359 = vunpack.c.l.b16 %v1444
    %v2360 = vunpack.c.h.b16 %v1444
    %v2361 = vunpack.c.l.b16 %v1445
    %v2362 = vunpack.c.h.b16 %v1445
    %v2363 = vunpack.c.l.b16 %v1446
    %v2364 = vunpack.c.h.b16 %v1446
    %v2365 = vunpack.c.l.b16 %v1447
    %v2366 = vunpack.c.h.b16 %v1447
    %v2367 = vunpack.c.l.b16 %v1448
    %v2368 = vunpack.c.h.b16 %v1448
    %v2369 = vunpack.c.l.b16 %v1449
    %v2370 = vunpack.c.h.b16 %v1449
    %v2371 = vunpack.c.l.b16 %v1450
    %v2372 = vunpack.c.h.b16 %v1450
    %v2373 = vunpack.c.l.b16 %v1451
    %v2374 = vunpack.c.h.b16 %v1451
    %v2375 = vunpack.c.l.b16 %v1452
    %v2376 = vunpack.c.h.b16 %v1452
    %v2377 = vunpack.c.l.b16 %v1453
    %v2378 = vunpack.c.h.b16 %v1453
    %v2379 = vunpack.c.l.b16 %v1454
    %v2380 = vunpack.c.h.b16 %v1454
    %v2381 = vunpack.c.l.b16 %v1455
    %v2382 = vunpack.c.h.b16 %v1455
    %v2383 = vunpack.c.l.b16 %v1456
    %v2384 = vunpack.c.h.b16 %v1456
    %v2385 = vunpack.c.l.b16 %v1457
    %v2386 = vunpack.c.h.b16 %v1457
    %v2387 = vunpack.c.l.b16 %v1458
    %v2388 = vunpack.c.h.b16 %v1458
    %v2389 = vunpack.c.l.b16 %v1459
    %v2390 = vunpack.c.h.b16 %v1459
    %v2391 = vunpack.c.l.b16 %v1460
    %v2392 = vunpack.c.h.b16 %v1460
    %v2393 = vunpack.c.l.b16 %v1461
    %v2394 = vunpack.c.h.b16 %v1461
    %v2395 = vunpack.c.l.b16 %v1462
    %v2396 = vunpack.c.h.b16 %v1462
    %v2397 = vunpack.c.l.b16 %v1463
    %v2398 = vunpack.c.h.b16 %v1463
    %v2399 = vunpack.c.l.b16 %v1464
    %v2400 = vunpack.c.h.b16 %v1464
    %v2401 = vunpack.c.l.b16 %v1465
    %v2402 = vunpack.c.h.b16 %v1465
    %v2403 = vunpack.c.l.b16 %v1466
    %v2404 = vunpack.c.h.b16 %v1466
    %v2405 = vunpack.c.l.b16 %v1467
    %v2406 = vunpack.c.h.b16 %v1467
    %v2407 = vunpack.c.l.b16 %v1468
    %v2408 = vunpack.c.h.b16 %v1468
    %v2409 = vunpack.c.l.b16 %v1469
    %v2410 = vunpack.c.h.b16 %v1469
    %v2411 = vunpack.c.l.b16 %v1470
    %v2412 = vunpack.c.h.b16 %v1470
    %v2413 = vunpack.c.l.b16 %v1471
    %v2414 = vunpack.c.h.b16 %v1471
    %v2415 = vunpack.c.l.b16 %v1472
    %v2416 = vunpack.c.h.b16 %v1472
    %v2417 = vunpack.c.l.b16 %v1473
    %v2418 = vunpack.c.h.b16 %v1473
    %v2419 = vunpack.c.l.b16 %v1474
    %v2420 = vunpack.c.h.b16 %v1474
    %v2421 = vunpack.c.l.b16 %v1475
    %v2422 = vunpack.c.h.b16 %v1475
    %v2423 = vunpack.c.l.b16 %v1476
    %v2424 = vunpack.c.h.b16 %v1476
    %v2425 = vunpack.c.l.b16 %v1477
    %v2426 = vunpack.c.h.b16 %v1477
    %v2427 = vunpack.c.l.b16 %v1478
    %v2428 = vunpack.c.h.b16 %v1478
    %v2429 = vunpack.c.l.b16 %v1479
    %v2430 = vunpack.c.h.b16 %v1479
    %v2431 = vunpack.c.l.b16 %v1480
    %v2432 = vunpack.c.h.b16 %v1480
    %v2433 = vunpack.c.l.b16 %v1481
    %v2434 = vunpack.c.h.b16 %v1481
    %v2435 = vunpack.c.l.b16 %v1482
    %v2436 = vunpack.c.h.b16 %v1482
    %v2437 = vunpack.c.l.b16 %v1483
    %v2438 = vunpack.c.h.b16 %v1483
    %v2439 = vunpack.c.l.b16 %v1484
    %v2440 = vunpack.c.h.b16 %v1484
    %v2441 = vunpack.c.l.b16 %v1485
    %v2442 = vunpack.c.h.b16 %v1485
    %v2443 = vunpack.c.l.b16 %v1486
    %v2444 = vunpack.c.h.b16 %v1486
    %v2445 = vunpack.c.l.b16 %v1487
    %v2446 = vunpack.c.h.b16 %v1487
    %v2447 = vunpack.c.l.b16 %v1488
    %v2448 = vunpack.c.h.b16 %v1488
    %v2449 = vunpack.c.l.b16 %v1489
    %v2450 = vunpack.c.h.b16 %v1489
    %v2451 = vunpack.c.l.b16 %v1490
    %v2452 = vunpack.c.h.b16 %v1490
    %v2453 = vunpack.c.l.b16 %v1491
    %v2454 = vunpack.c.h.b16 %v1491
    %v2455 = vunpack.c.l.b16 %v1492
    %v2456 = vunpack.c.h.b16 %v1492
    %v2457 = vunpack.c.l.b16 %v1493
    %v2458 = vunpack.c.h.b16 %v1493
    %v2459 = vunpack.c.l.b16 %v1494
    %v2460 = vunpack.c.h.b16 %v1494
    %v2461 = vunpack.c.l.b16 %v1495
    %v2462 = vunpack.c.h.b16 %v1495
    %v2463 = vunpack.c.l.b16 %v1496
    %v2464 = vunpack.c.h.b16 %v1496
    %v2465 = vunpack.c.l.b16 %v1497
    %v2466 = vunpack.c.h.b16 %v1497
    %v2467 = vunpack.c.l.b16 %v1498
    %v2468 = vunpack.c.h.b16 %v1498
    %v2469 = vunpack.c.l.b16 %v1499
    %v2470 = vunpack.c.h.b16 %v1499
    %v2471 = vunpack.c.l.b16 %v1500
    %v2472 = vunpack.c.h.b16 %v1500
    %v2473 = vunpack.c.l.b16 %v1501
    %v2474 = vunpack.c.h.b16 %v1501
    %v2475 = vunpack.c.l.b16 %v1502
    %v2476 = vunpack.c.h.b16 %v1502
    %v2477 = vunpack.c.l.b16 %v1503
    %v2478 = vunpack.c.h.b16 %v1503
    %v2479 = vunpack.c.l.b16 %v1504
    %v2480 = vunpack.c.h.b16 %v1504
    %v2481 = vunpack.c.l.b16 %v1505
    %v2482 = vunpack.c.h.b16 %v1505
    %v2483 = vunpack.c.l.b16 %v1506
    %v2484 = vunpack.c.h.b16 %v1506
    %v2485 = vunpack.c.l.b16 %v1507
    %v2486 = vunpack.c.h.b16 %v1507
    %v2487 = vunpack.c.l.b16 %v1508
    %v2488 = vunpack.c.h.b16 %v1508
    %v2489 = vunpack.c.l.b16 %v1509
    %v2490 = vunpack.c.h.b16 %v1509
    %v2491 = vunpack.c.l.b16 %v1510
    %v2492 = vunpack.c.h.b16 %v1510
    %v2493 = vunpack.c.l.b16 %v1511
    %v2494 = vunpack.c.h.b16 %v1511
    %v2495 = vunpack.c.l.b16 %v1512
    %v2496 = vunpack.c.h.b16 %v1512
    %v2497 = vunpack.c.l.b16 %v1513
    %v2498 = vunpack.c.h.b16 %v1513
    %v2499 = vunpack.c.l.b16 %v1514
    %v2500 = vunpack.c.h.b16 %v1514
    %v2501 = vunpack.c.l.b16 %v1515
    %v2502 = vunpack.c.h.b16 %v1515
    %v2503 = vunpack.c.l.b16 %v1516
    %v2504 = vunpack.c.h.b16 %v1516
    %v2505 = vunpack.c.l.b16 %v1517
    %v2506 = vunpack.c.h.b16 %v1517
    %v2507 = vunpack.c.l.b16 %v1518
    %v2508 = vunpack.c.h.b16 %v1518
    %v2509 = vunpack.c.l.b16 %v1519
    %v2510 = vunpack.c.h.b16 %v1519
    %v2511 = vunpack.c.l.b16 %v1520
    %v2512 = vunpack.c.h.b16 %v1520
    %v2513 = vunpack.c.l.b16 %v1521
    %v2514 = vunpack.c.h.b16 %v1521
    %v2515 = vunpack.c.l.b16 %v1522
    %v2516 = vunpack.c.h.b16 %v1522
    %v2517 = vunpack.c.l.b16 %v1523
    %v2518 = vunpack.c.h.b16 %v1523
    %v2519 = vunpack.c.l.b16 %v1524
    %v2520 = vunpack.c.h.b16 %v1524
    %v2521 = vunpack.c.l.b16 %v1525
    %v2522 = vunpack.c.h.b16 %v1525
    %v2523 = vunpack.c.l.b16 %v1526
    %v2524 = vunpack.c.h.b16 %v1526
    %v2525 = vunpack.c.l.b16 %v1527
    %v2526 = vunpack.c.h.b16 %v1527
    %v2527 = vunpack.c.l.b16 %v1528
    %v2528 = vunpack.c.h.b16 %v1528
    %v2529 = vunpack.c.l.b16 %v1529
    %v2530 = vunpack.c.h.b16 %v1529
    %v2531 = vunpack.c.l.b16 %v1530
    %v2532 = vunpack.c.h.b16 %v1530
    %v2533 = vunpack.c.l.b16 %v1531
    %v2534 = vunpack.c.h.b16 %v1531
    %v2535 = vunpack.c.l.b16 %v1532
    %v2536 = vunpack.c.h.b16 %v1532
    %v2537 = vunpack.c.l.b16 %v1533
    %v2538 = vunpack.c.h.b16 %v1533
    %v2539 = vunpack.c.l.b16 %v1534
    %v2540 = vunpack.c.h.b16 %v1534
    %v2541 = vunpack.c.l.b16 %v1535
    %v2542 = vunpack.c.h.b16 %v1535
    %v2543 = vunpack.c.l.b16 %v1536
    %v2544 = vunpack.c.h.b16 %v1536
    %v2545 = vunpack.c.l.b16 %v1537
    %v2546 = vunpack.c.h.b16 %v1537
    %v2547 = vunpack.c.l.b16 %v1538
    %v2548 = vunpack.c.h.b16 %v1538
    %v2549 = vunpack.c.l.b16 %v1539
    %v2550 = vunpack.c.h.b16 %v1539
    %v2551 = vunpack.c.l.b16 %v1540
    %v2552 = vunpack.c.h.b16 %v1540
    %v2553 = vunpack.c.l.b16 %v1541
    %v2554 = vunpack.c.h.b16 %v1541
    %v2555 = vunpack.c.l.b16 %v1542
    %v2556 = vunpack.c.h.b16 %v1542
    %v2557 = vunpack.c.l.b16 %v1543
    %v2558 = vunpack.c.h.b16 %v1543
    %v2559 = vunpack.c.l.b16 %v1544
    %v2560 = vunpack.c.h.b16 %v1544
    %v2561 = vunpack.c.l.b16 %v1545
    %v2562 = vunpack.c.h.b16 %v1545
    %v2563 = vunpack.c.l.b16 %v1546
    %v2564 = vunpack.c.h.b16 %v1546
    %v2565 = vunpack.c.l.b16 %v1547
    %v2566 = vunpack.c.h.b16 %v1547
    %v2567 = vunpack.c.l.b16 %v1548
    %v2568 = vunpack.c.h.b16 %v1548
    %v2569 = vunpack.c.l.b16 %v1549
    %v2570 = vunpack.c.h.b16 %v1549
    %v2571 = vunpack.c.l.b16 %v1550
    %v2572 = vunpack.c.h.b16 %v1550
    %v2573 = vunpack.c.l.b16 %v1551
    %v2574 = vunpack.c.h.b16 %v1551
    %v2575 = vunpack.c.l.b16 %v1552
    %v2576 = vunpack.c.h.b16 %v1552
    %v2577 = vunpack.c.l.b16 %v1553
    %v2578 = vunpack.c.h.b16 %v1553
    %v2579 = vunpack.c.l.b16 %v1554
    %v2580 = vunpack.c.h.b16 %v1554
    %v2581 = vunpack.c.l.b16 %v1555
    %v2582 = vunpack.c.h.b16 %v1555
    %v2583 = vunpack.c.l.b16 %v1556
    %v2584 = vunpack.c.h.b16 %v1556
    %v2585 = vunpack.c.l.b16 %v1557
    %v2586 = vunpack.c.h.b16 %v1557
    %v2587 = vunpack.c.l.b16 %v1558
    %v2588 = vunpack.c.h.b16 %v1558
    %v2589 = vunpack.c.l.b16 %v1559
    %v2590 = vunpack.c.h.b16 %v1559
    %v2591 = vunpack.c.l.b16 %v1560
    %v2592 = vunpack.c.h.b16 %v1560
    %v2593 = vunpack.c.l.b16 %v1561
    %v2594 = vunpack.c.h.b16 %v1561
    %v2595 = vunpack.c.l.b16 %v1562
    %v2596 = vunpack.c.h.b16 %v1562
    %v2597 = vunpack.c.l.b16 %v1563
    %v2598 = vunpack.c.h.b16 %v1563
    %v2599 = vunpack.c.l.b16 %v1564
    %v2600 = vunpack.c.h.b16 %v1564
    %v2601 = vunpack.c.l.b16 %v1565
    %v2602 = vunpack.c.h.b16 %v1565
    %v2603 = vunpack.c.l.b16 %v1566
    %v2604 = vunpack.c.h.b16 %v1566
    %v2605 = vunpack.c.l.b16 %v1567
    %v2606 = vunpack.c.h.b16 %v1567
    %v2607 = vunpack.c.l.b16 %v1568
    %v2608 = vunpack.c.h.b16 %v1568
    %v2609 = vunpack.c.l.b16 %v1569
    %v2610 = vunpack.c.h.b16 %v1569
    %v2611 = vunpack.c.l.b16 %v1570
    %v2612 = vunpack.c.h.b16 %v1570
    %v2613 = vunpack.c.l.b16 %v1571
    %v2614 = vunpack.c.h.b16 %v1571
    %v2615 = vunpack.c.l.b16 %v1572
    %v2616 = vunpack.c.h.b16 %v1572
    %v2617 = vunpack.c.l.b16 %v1573
    %v2618 = vunpack.c.h.b16 %v1573
    %v2619 = vunpack.c.l.b16 %v1574
    %v2620 = vunpack.c.h.b16 %v1574
    %v2621 = vunpack.c.l.b16 %v1575
    %v2622 = vunpack.c.h.b16 %v1575
    %v2623 = vunpack.c.l.b16 %v1576
    %v2624 = vunpack.c.h.b16 %v1576
    %v2625 = vunpack.c.l.b16 %v1577
    %v2626 = vunpack.c.h.b16 %v1577
    %v2627 = vunpack.c.l.b16 %v1578
    %v2628 = vunpack.c.h.b16 %v1578
    %v2629 = vunpack.c.l.b16 %v1579
    %v2630 = vunpack.c.h.b16 %v1579
    %v2631 = vunpack.c.l.b16 %v1580
    %v2632 = vunpack.c.h.b16 %v1580
    %v2633 = vunpack.c.l.b16 %v1581
    %v2634 = vunpack.c.h.b16 %v1581
    %v2635 = vunpack.c.l.b16 %v1582
    %v2636 = vunpack.c.h.b16 %v1582
    %v2637 = vunpack.c.l.b16 %v1583
    %v2638 = vunpack.c.h.b16 %v1583
    %v2639 = vunpack.c.l.b16 %v1584
    %v2640 = vunpack.c.h.b16 %v1584
    %v2641 = vunpack.c.l.b16 %v1585
    %v2642 = vunpack.c.h.b16 %v1585
    %v2643 = vunpack.c.l.b16 %v1586
    %v2644 = vunpack.c.h.b16 %v1586
    %v2645 = vunpack.c.l.b16 %v1587
    %v2646 = vunpack.c.h.b16 %v1587
    %v2647 = vunpack.c.l.b16 %v1588
    %v2648 = vunpack.c.h.b16 %v1588
    %v2649 = vunpack.c.l.b16 %v1589
    %v2650 = vunpack.c.h.b16 %v1589
    %v2651 = vunpack.c.l.b16 %v1590
    %v2652 = vunpack.c.h.b16 %v1590
    %v2653 = vunpack.c.l.b16 %v1591
    %v2654 = vunpack.c.h.b16 %v1591
    %v2655 = vunpack.c.l.b16 %v1592
    %v2656 = vunpack.c.h.b16 %v1592
    %v2657 = vunpack.c.l.b16 %v1593
    %v2658 = vunpack.c.h.b16 %v1593
    %v2659 = vunpack.c.l.b16 %v1594
    %v2660 = vunpack.c.h.b16 %v1594
    %v2661 = vunpack.c.l.b16 %v1595
    %v2662 = vunpack.c.h.b16 %v1595
    %v2663 = vunpack.c.l.b16 %v1596
    %v2664 = vunpack.c.h.b16 %v1596
    %v2665 = vunpack.c.l.b16 %v1597
    %v2666 = vunpack.c.h.b16 %v1597
    %v2667 = vunpack.c.l.b16 %v1598
    %v2668 = vunpack.c.h.b16 %v1598
    %v2669 = vunpack.c.l.b16 %v1599
    %v2670 = vunpack.c.h.b16 %v1599
    %v2671 = vunpack.c.l.b16 %v1600
    %v2672 = vunpack.c.h.b16 %v1600
    %v2673 = vunpack.c.l.b16 %v1601
    %v2674 = vunpack.c.h.b16 %v1601
    %v2675 = vunpack.c.l.b16 %v1602
    %v2676 = vunpack.c.h.b16 %v1602
    %v2677 = vunpack.c.l.b16 %v1603
    %v2678 = vunpack.c.h.b16 %v1603
    %v2679 = vunpack.c.l.b16 %v1604
    %v2680 = vunpack.c.h.b16 %v1604
    %v2681 = vunpack.c.l.b16 %v1605
    %v2682 = vunpack.c.h.b16 %v1605
    %v2683 = vunpack.c.l.b16 %v1606
    %v2684 = vunpack.c.h.b16 %v1606
    %v2685 = vunpack.c.l.b16 %v1607
    %v2686 = vunpack.c.h.b16 %v1607
    %v2687 = vunpack.c.l.b16 %v1608
    %v2688 = vunpack.c.h.b16 %v1608
    %v2689 = vunpack.c.l.b16 %v1609
    %v2690 = vunpack.c.h.b16 %v1609
    %v2691 = vunpack.c.l.b16 %v1610
    %v2692 = vunpack.c.h.b16 %v1610
    %v2693 = vunpack.c.l.b16 %v1611
    %v2694 = vunpack.c.h.b16 %v1611
    %v2695 = vunpack.c.l.b16 %v1612
    %v2696 = vunpack.c.h.b16 %v1612
    %v2697 = vunpack.c.l.b16 %v1613
    %v2698 = vunpack.c.h.b16 %v1613
    %v2699 = vunpack.c.l.b16 %v1614
    %v2700 = vunpack.c.h.b16 %v1614
    %v2701 = vunpack.c.l.b16 %v1615
    %v2702 = vunpack.c.h.b16 %v1615
    %v2703 = vunpack.c.l.b16 %v1616
    %v2704 = vunpack.c.h.b16 %v1616
    %v2705 = vunpack.c.l.b16 %v1617
    %v2706 = vunpack.c.h.b16 %v1617
    %v2707 = vunpack.c.l.b16 %v1618
    %v2708 = vunpack.c.h.b16 %v1618
    %v2709 = vunpack.c.l.b16 %v1619
    %v2710 = vunpack.c.h.b16 %v1619
    %v2711 = vunpack.c.l.b16 %v1620
    %v2712 = vunpack.c.h.b16 %v1620
    %v2713 = vunpack.c.l.b16 %v1621
    %v2714 = vunpack.c.h.b16 %v1621
    %v2715 = vunpack.c.l.b16 %v1622
    %v2716 = vunpack.c.h.b16 %v1622
    %v2717 = vunpack.c.l.b16 %v1623
    %v2718 = vunpack.c.h.b16 %v1623
    %v2719 = vunpack.c.l.b16 %v1624
    %v2720 = vunpack.c.h.b16 %v1624
    %v2721 = vunpack.c.l.b16 %v1625
    %v2722 = vunpack.c.h.b16 %v1625
    %v2723 = vunpack.c.l.b16 %v1626
    %v2724 = vunpack.c.h.b16 %v1626
    %v2725 = vunpack.c.l.b16 %v1627
    %v2726 = vunpack.c.h.b16 %v1627
    %v2727 = vunpack.c.l.b16 %v1628
    %v2728 = vunpack.c.h.b16 %v1628
    %v2729 = vunpack.c.l.b16 %v1629
    %v2730 = vunpack.c.h.b16 %v1629
    %v2731 = vunpack.c.l.b16 %v1630
    %v2732 = vunpack.c.h.b16 %v1630
    %v2733 = vunpack.c.l.b16 %v1631
    %v2734 = vunpack.c.h.b16 %v1631
    %v2735 = vunpack.c.l.b16 %v1632
    %v2736 = vunpack.c.h.b16 %v1632
    %v2737 = vunpack.c.l.b16 %v1633
    %v2738 = vunpack.c.h.b16 %v1633
    %v2739 = vunpack.c.l.b16 %v1634
    %v2740 = vunpack.c.h.b16 %v1634
    %v2741 = vunpack.c.l.b16 %v1635
    %v2742 = vunpack.c.h.b16 %v1635
    %v2743 = vunpack.c.l.b16 %v1636
    %v2744 = vunpack.c.h.b16 %v1636
    %v2745 = vunpack.c.l.b16 %v1637
    %v2746 = vunpack.c.h.b16 %v1637
    %v2747 = vunpack.c.l.b16 %v1638
    %v2748 = vunpack.c.h.b16 %v1638
    %v2749 = vunpack.c.l.b16 %v1639
    %v2750 = vunpack.c.h.b16 %v1639
    %v2751 = vunpack.c.l.b16 %v1640
    %v2752 = vunpack.c.h.b16 %v1640
    %v2753 = vunpack.c.l.b16 %v1641
    %v2754 = vunpack.c.h.b16 %v1641
    %v2755 = vunpack.c.l.b16 %v1642
    %v2756 = vunpack.c.h.b16 %v1642
    %v2757 = vunpack.c.l.b16 %v1643
    %v2758 = vunpack.c.h.b16 %v1643
    %v2759 = vunpack.c.l.b16 %v1644
    %v2760 = vunpack.c.h.b16 %v1644
    %v2761 = vunpack.c.l.b16 %v1645
    %v2762 = vunpack.c.h.b16 %v1645
    %v2763 = vunpack.c.l.b16 %v1646
    %v2764 = vunpack.c.h.b16 %v1646
    %v2765 = vunpack.c.l.b16 %v1647
    %v2766 = vunpack.c.h.b16 %v1647
    %v2767 = vunpack.c.l.b16 %v1648
    %v2768 = vunpack.c.h.b16 %v1648
    %v2769 = vunpack.c.l.b16 %v1649
    %v2770 = vunpack.c.h.b16 %v1649
    %v2771 = vunpack.c.l.b16 %v1650
    %v2772 = vunpack.c.h.b16 %v1650
    %v2773 = vunpack.c.l.b16 %v1651
    %v2774 = vunpack.c.h.b16 %v1651
    %v2775 = vunpack.c.l.b16 %v1652
    %v2776 = vunpack.c.h.b16 %v1652
    %v2777 = vunpack.c.l.b16 %v1653
    %v2778 = vunpack.c.h.b16 %v1653
    %v2779 = vunpack.c.l.b16 %v1654
    %v2780 = vunpack.c.h.b16 %v1654
    %v2781 = vunpack.c.l.b16 %v1655
    %v2782 = vunpack.c.h.b16 %v1655
    %v2783 = vunpack.c.l.b16 %v1656
    %v2784 = vunpack.c.h.b16 %v1656
    %v2785 = vunpack.c.l.b16 %v1657
    %v2786 = vunpack.c.h.b16 %v1657
    %v2787 = vunpack.c.l.b16 %v1658
    %v2788 = vunpack.c.h.b16 %v1658
    %v2789 = vunpack.c.l.b16 %v1659
    %v2790 = vunpack.c.h.b16 %v1659
    %v2791 = vunpack.c.l.b16 %v1660
    %v2792 = vunpack.c.h.b16 %v1660
    %v2793 = vunpack.c.l.b16 %v1661
    %v2794 = vunpack.c.h.b16 %v1661
    %v2795 = vunpack.c.l.b16 %v1662
    %v2796 = vunpack.c.h.b16 %v1662
    %v2797 = vunpack.c.l.b16 %v1663
    %v2798 = vunpack.c.h.b16 %v1663
    %v2799 = vunpack.c.l.b16 %v1664
    %v2800 = vunpack.c.h.b16 %v1664
    %v2801 = vunpack.c.l.b16 %v1665
    %v2802 = vunpack.c.h.b16 %v1665
    %v2803 = vunpack.c.l.b16 %v1666
    %v2804 = vunpack.c.h.b16 %v1666
    %v2805 = vunpack.c.l.b16 %v1667
    %v2806 = vunpack.c.h.b16 %v1667
    %v2807 = vunpack.c.l.b16 %v1668
    %v2808 = vunpack.c.h.b16 %v1668
    %v2809 = vunpack.c.l.b16 %v1669
    %v2810 = vunpack.c.h.b16 %v1669
    %v2811 = vunpack.c.l.b16 %v1670
    %v2812 = vunpack.c.h.b16 %v1670
    %v2813 = vunpack.c.l.b16 %v1671
    %v2814 = vunpack.c.h.b16 %v1671
    %v2815 = vunpack.c.l.b16 %v1672
    %v2816 = vunpack.c.h.b16 %v1672
    %v2817 = vunpack.c.l.b16 %v1673
    %v2818 = vunpack.c.h.b16 %v1673
    %v2819 = vunpack.c.l.b16 %v1674
    %v2820 = vunpack.c.h.b16 %v1674
    %v2821 = vunpack.c.l.b16 %v1675
    %v2822 = vunpack.c.h.b16 %v1675
    %v2823 = vunpack.c.l.b16 %v1676
    %v2824 = vunpack.c.h.b16 %v1676
    %v2825 = vunpack.c.l.b16 %v1677
    %v2826 = vunpack.c.h.b16 %v1677
    %v2827 = vunpack.c.l.b16 %v1678
    %v2828 = vunpack.c.h.b16 %v1678
    %v2829 = vunpack.c.l.b16 %v1679
    %v2830 = vunpack.c.h.b16 %v1679
    %v2831 = vunpack.c.l.b16 %v1680
    %v2832 = vunpack.c.h.b16 %v1680
    %v2833 = vunpack.c.l.b16 %v1681
    %v2834 = vunpack.c.h.b16 %v1681
    %v2835 = vunpack.c.l.b16 %v1682
    %v2836 = vunpack.c.h.b16 %v1682
    %v2837 = vpack.c.b16 %v2081, %v2069
    %v2838 = vpack.c.b16 %v2082, %v2070
    %v2839 = vpack.c.b16 %v2083, %v2071
    %v2840 = vpack.c.b16 %v2084, %v2072
    %v2841 = vpack.c.b16 %v2085, %v2073
    %v2842 = vpack.c.b16 %v2086, %v2074
    %v2843 = vpack.c.b16 %v2087, %v2075
    %v2844 = vpack.c.b16 %v2088, %v2076
    %v2845 = vpack.c.b16 %v2089, %v2077
    %v2846 = vpack.c.b16 %v2090, %v2078
    %v2847 = vpack.c.b16 %v2091, %v2079
    %v2848 = vpack.c.b16 %v2092, %v2080
    %v2849 = vpack.c.b16 %v2105, %v2093
    %v2850 = vpack.c.b16 %v2106, %v2094
    %v2851 = vpack.c.b16 %v2107, %v2095
    %v2852 = vpack.c.b16 %v2108, %v2096
    %v2853 = vpack.c.b16 %v2109, %v2097
    %v2854 = vpack.c.b16 %v2110, %v2098
    %v2855 = vpack.c.b16 %v2111, %v2099
    %v2856 = vpack.c.b16 %v2112, %v2100
    %v2857 = vpack.c.b16 %v2113, %v2101
    %v2858 = vpack.c.b16 %v2114, %v2102
    %v2859 = vpack.c.b16 %v2115, %v2103
    %v2860 = vpack.c.b16 %v2116, %v2104
    %v2861 = vpack.c.b16 %v2129, %v2117
    %v2862 = vpack.c.b16 %v2130, %v2118
    %v2863 = vpack.c.b16 %v2131, %v2119
    %v2864 = vpack.c.b16 %v2132, %v2120
    %v2865 = vpack.c.b16 %v2133, %v2121
    %v2866 = vpack.c.b16 %v2134, %v2122
    %v2867 = vpack.c.b16 %v2135, %v2123
    %v2868 = vpack.c.b16 %v2136, %v2124
    %v2869 = vpack.c.b16 %v2137, %v2125
    %v2870 = vpack.c.b16 %v2138, %v2126
    %v2871 = vpack.c.b16 %v2139, %v2127
    %v2872 = vpack.c.b16 %v2140, %v2128
    %v2873 = vpack.c.b16 %v2153, %v2141
    %v2874 = vpack.c.b16 %v2154, %v2142
    %v2875 = vpack.c.b16 %v2155, %v2143
    %v2876 = vpack.c.b16 %v2156, %v2144
    %v2877 = vpack.c.b16 %v2157, %v2145
    %v2878 = vpack.c.b16 %v2158, %v2146
    %v2879 = vpack.c.b16 %v2159, %v2147
    %v2880 = vpack.c.b16 %v2160, %v2148
    %v2881 = vpack.c.b16 %v2161, %v2149
    %v2882 = vpack.c.b16 %v2162, %v2150
    %v2883 = vpack.c.b16 %v2163, %v2151
    %v2884 = vpack.c.b16 %v2164, %v2152
    %v2885 = vpack.c.b16 %v2177, %v2165
    %v2886 = vpack.c.b16 %v2178, %v2166
    %v2887 = vpack.c.b16 %v2179, %v2167
    %v2888 = vpack.c.b16 %v2180, %v2168
    %v2889 = vpack.c.b16 %v2181, %v2169
    %v2890 = vpack.c.b16 %v2182, %v2170
    %v2891 = vpack.c.b16 %v2183, %v2171
    %v2892 = vpack.c.b16 %v2184, %v2172
    %v2893 = vpack.c.b16 %v2185, %v2173
    %v2894 = vpack.c.b16 %v2186, %v2174
    %v2895 = vpack.c.b16 %v2187, %v2175
    %v2896 = vpack.c.b16 %v2188, %v2176
    %v2897 = vpack.c.b16 %v2201, %v2189
    %v2898 = vpack.c.b16 %v2202, %v2190
    %v2899 = vpack.c.b16 %v2203, %v2191
    %v2900 = vpack.c.b16 %v2204, %v2192
    %v2901 = vpack.c.b16 %v2205, %v2193
    %v2902 = vpack.c.b16 %v2206, %v2194
    %v2903 = vpack.c.b16 %v2207, %v2195
    %v2904 = vpack.c.b16 %v2208, %v2196
    %v2905 = vpack.c.b16 %v2209, %v2197
    %v2906 = vpack.c.b16 %v2210, %v2198
    %v2907 = vpack.c.b16 %v2211, %v2199
    %v2908 = vpack.c.b16 %v2212, %v2200
    %v2909 = vpack.c.b16 %v2225, %v2213
    %v2910 = vpack.c.b16 %v2226, %v2214
    %v2911 = vpack.c.b16 %v2227, %v2215
    %v2912 = vpack.c.b16 %v2228, %v2216
    %v2913 = vpack.c.b16 %v2229, %v2217
    %v2914 = vpack.c.b16 %v2230, %v2218
    %v2915 = vpack.c.b16 %v2231, %v2219
    %v2916 = vpack.c.b16 %v2232, %v2220
    %v2917 = vpack.c.b16 %v2233, %v2221
    %v2918 = vpack.c.b16 %v2234, %v2222
    %v2919 = vpack.c.b16 %v2235, %v2223
    %v2920 = vpack.c.b16 %v2236, %v2224
    %v2921 = vpack.c.b16 %v2249, %v2237
    %v2922 = vpack.c.b16 %v2250, %v2238
    %v2923 = vpack.c.b16 %v2251, %v2239
    %v2924 = vpack.c.b16 %v2252, %v2240
    %v2925 = vpack.c.b16 %v2253, %v2241
    %v2926 = vpack.c.b16 %v2254, %v2242
    %v2927 = vpack.c.b16 %v2255, %v2243
    %v2928 = vpack.c.b16 %v2256, %v2244
    %v2929 = vpack.c.b16 %v2257, %v2245
    %v2930 = vpack.c.b16 %v2258, %v2246
    %v2931 = vpack.c.b16 %v2259, %v2247
    %v2932 = vpack.c.b16 %v2260, %v2248
    %v2933 = vpack.c.b16 %v2273, %v2261
    %v2934 = vpack.c.b16 %v2274, %v2262
    %v2935 = vpack.c.b16 %v2275, %v2263
    %v2936 = vpack.c.b16 %v2276, %v2264
    %v2937 = vpack.c.b16 %v2277, %v2265
    %v2938 = vpack.c.b16 %v2278, %v2266
    %v2939 = vpack.c.b16 %v2279, %v2267
    %v2940 = vpack.c.b16 %v2280, %v2268
    %v2941 = vpack.c.b16 %v2281, %v2269
    %v2942 = vpack.c.b16 %v2282, %v2270
    %v2943 = vpack.c.b16 %v2283, %v2271
    %v2944 = vpack.c.b16 %v2284, %v2272
    %v2945 = vpack.c.b16 %v2297, %v2285
    %v2946 = vpack.c.b16 %v2298, %v2286
    %v2947 = vpack.c.b16 %v2299, %v2287
    %v2948 = vpack.c.b16 %v2300, %v2288
    %v2949 = vpack.c.b16 %v2301, %v2289
    %v2950 = vpack.c.b16 %v2302, %v2290
    %v2951 = vpack.c.b16 %v2303, %v2291
    %v2952 = vpack.c.b16 %v2304, %v2292
    %v2953 = vpack.c.b16 %v2305, %v2293
    %v2954 = vpack.c.b16 %v2306, %v2294
    %v2955 = vpack.c.b16 %v2307, %v2295
    %v2956 = vpack.c.b16 %v2308, %v2296
    %v2957 = vpack.c.b16 %v2321, %v2309
    %v2958 = vpack.c.b16 %v2322, %v2310
    %v2959 = vpack.c.b16 %v2323, %v2311
    %v2960 = vpack.c.b16 %v2324, %v2312
    %v2961 = vpack.c.b16 %v2325, %v2313
    %v2962 = vpack.c.b16 %v2326, %v2314
    %v2963 = vpack.c.b16 %v2327, %v2315
    %v2964 = vpack.c.b16 %v2328, %v2316
    %v2965 = vpack.c.b16 %v2329, %v2317
    %v2966 = vpack.c.b16 %v2330, %v2318
    %v2967 = vpack.c.b16 %v2331, %v2319
    %v2968 = vpack.c.b16 %v2332, %v2320
    %v2969 = vpack.c.b16 %v2345, %v2333
    %v2970 = vpack.c.b16 %v2346, %v2334
    %v2971 = vpack.c.b16 %v2347, %v2335
    %v2972 = vpack.c.b16 %v2348, %v2336
    %v2973 = vpack.c.b16 %v2349, %v2337
    %v2974 = vpack.c.b16 %v2350, %v2338
    %v2975 = vpack.c.b16 %v2351, %v2339
    %v2976 = vpack.c.b16 %v2352, %v2340
    %v2977 = vpack.c.b16 %v2353, %v2341
    %v2978 = vpack.c.b16 %v2354, %v2342
    %v2979 = vpack.c.b16 %v2355, %v2343
    %v2980 = vpack.c.b16 %v2356, %v2344
    %v2981 = vpack.c.b16 %v2369, %v2357
    %v2982 = vpack.c.b16 %v2370, %v2358
    %v2983 = vpack.c.b16 %v2371, %v2359
    %v2984 = vpack.c.b16 %v2372, %v2360
    %v2985 = vpack.c.b16 %v2373, %v2361
    %v2986 = vpack.c.b16 %v2374, %v2362
    %v2987 = vpack.c.b16 %v2375, %v2363
    %v2988 = vpack.c.b16 %v2376, %v2364
    %v2989 = vpack.c.b16 %v2377, %v2365
    %v2990 = vpack.c.b16 %v2378, %v2366
    %v2991 = vpack.c.b16 %v2379, %v2367
    %v2992 = vpack.c.b16 %v2380, %v2368
    %v2993 = vpack.c.b16 %v2393, %v2381
    %v2994 = vpack.c.b16 %v2394, %v2382
    %v2995 = vpack.c.b16 %v2395, %v2383
    %v2996 = vpack.c.b16 %v2396, %v2384
    %v2997 = vpack.c.b16 %v2397, %v2385
    %v2998 = vpack.c.b16 %v2398, %v2386
    %v2999 = vpack.c.b16 %v2399, %v2387
    %v3000 = vpack.c.b16 %v2400, %v2388
    %v3001 = vpack.c.b16 %v2401, %v2389
    %v3002 = vpack.c.b16 %v2402, %v2390
    %v3003 = vpack.c.b16 %v2403, %v2391
    %v3004 = vpack.c.b16 %v2404, %v2392
    %v3005 = vpack.c.b16 %v2417, %v2405
    %v3006 = vpack.c.b16 %v2418, %v2406
    %v3007 = vpack.c.b16 %v2419, %v2407
    %v3008 = vpack.c.b16 %v2420, %v2408
    %v3009 = vpack.c.b16 %v2421, %v2409
    %v3010 = vpack.c.b16 %v2422, %v2410
    %v3011 = vpack.c.b16 %v2423, %v2411
    %v3012 = vpack.c.b16 %v2424, %v2412
    %v3013 = vpack.c.b16 %v2425, %v2413
    %v3014 = vpack.c.b16 %v2426, %v2414
    %v3015 = vpack.c.b16 %v2427, %v2415
    %v3016 = vpack.c.b16 %v2428, %v2416
    %v3017 = vpack.c.b16 %v2441, %v2429
    %v3018 = vpack.c.b16 %v2442, %v2430
    %v3019 = vpack.c.b16 %v2443, %v2431
    %v3020 = vpack.c.b16 %v2444, %v2432
    %v3021 = vpack.c.b16 %v2445, %v2433
    %v3022 = vpack.c.b16 %v2446, %v2434
    %v3023 = vpack.c.b16 %v2447, %v2435
    %v3024 = vpack.c.b16 %v2448, %v2436
    %v3025 = vpack.c.b16 %v2449, %v2437
    %v3026 = vpack.c.b16 %v2450, %v2438
    %v3027 = vpack.c.b16 %v2451, %v2439
    %v3028 = vpack.c.b16 %v2452, %v2440
    %v3029 = vpack.c.b16 %v2465, %v2453
    %v3030 = vpack.c.b16 %v2466, %v2454
    %v3031 = vpack.c.b16 %v2467, %v2455
    %v3032 = vpack.c.b16 %v2468, %v2456
    %v3033 = vpack.c.b16 %v2469, %v2457
    %v3034 = vpack.c.b16 %v2470, %v2458
    %v3035 = vpack.c.b16 %v2471, %v2459
    %v3036 = vpack.c.b16 %v2472, %v2460
    %v3037 = vpack.c.b16 %v2473, %v2461
    %v3038 = vpack.c.b16 %v2474, %v2462
    %v3039 = vpack.c.b16 %v2475, %v2463
    %v3040 = vpack.c.b16 %v2476, %v2464
    %v3041 = vpack.c.b16 %v2489, %v2477
    %v3042 = vpack.c.b16 %v2490, %v2478
    %v3043 = vpack.c.b16 %v2491, %v2479
    %v3044 = vpack.c.b16 %v2492, %v2480
    %v3045 = vpack.c.b16 %v2493, %v2481
    %v3046 = vpack.c.b16 %v2494, %v2482
    %v3047 = vpack.c.b16 %v2495, %v2483
    %v3048 = vpack.c.b16 %v2496, %v2484
    %v3049 = vpack.c.b16 %v2497, %v2485
    %v3050 = vpack.c.b16 %v2498, %v2486
    %v3051 = vpack.c.b16 %v2499, %v2487
    %v3052 = vpack.c.b16 %v2500, %v2488
    %v3053 = vpack.c.b16 %v2513, %v2501
    %v3054 = vpack.c.b16 %v2514, %v2502
    %v3055 = vpack.c.b16 %v2515, %v2503
    %v3056 = vpack.c.b16 %v2516, %v2504
    %v3057 = vpack.c.b16 %v2517, %v2505
    %v3058 = vpack.c.b16 %v2518, %v2506
    %v3059 = vpack.c.b16 %v2519, %v2507
    %v3060 = vpack.c.b16 %v2520, %v2508
    %v3061 = vpack.c.b16 %v2521, %v2509
    %v3062 = vpack.c.b16 %v2522, %v2510
    %v3063 = vpack.c.b16 %v2523, %v2511
    %v3064 = vpack.c.b16 %v2524, %v2512
    %v3065 = vpack.c.b16 %v2537, %v2525
    %v3066 = vpack.c.b16 %v2538, %v2526
    %v3067 = vpack.c.b16 %v2539, %v2527
    %v3068 = vpack.c.b16 %v2540, %v2528
    %v3069 = vpack.c.b16 %v2541, %v2529
    %v3070 = vpack.c.b16 %v2542, %v2530
    %v3071 = vpack.c.b16 %v2543, %v2531
    %v3072 = vpack.c.b16 %v2544, %v2532
    %v3073 = vpack.c.b16 %v2545, %v2533
    %v3074 = vpack.c.b16 %v2546, %v2534
    %v3075 = vpack.c.b16 %v2547, %v2535
    %v3076 = vpack.c.b16 %v2548, %v2536
    %v3077 = vpack.c.b16 %v2561, %v2549
    %v3078 = vpack.c.b16 %v2562, %v2550
    %v3079 = vpack.c.b16 %v2563, %v2551
    %v3080 = vpack.c.b16 %v2564, %v2552
    %v3081 = vpack.c.b16 %v2565, %v2553
    %v3082 = vpack.c.b16 %v2566, %v2554
    %v3083 = vpack.c.b16 %v2567, %v2555
    %v3084 = vpack.c.b16 %v2568, %v2556
    %v3085 = vpack.c.b16 %v2569, %v2557
    %v3086 = vpack.c.b16 %v2570, %v2558
    %v3087 = vpack.c.b16 %v2571, %v2559
    %v3088 = vpack.c.b16 %v2572, %v2560
    %v3089 = vpack.c.b16 %v2585, %v2573
    %v3090 = vpack.c.b16 %v2586, %v2574
    %v3091 = vpack.c.b16 %v2587, %v2575
    %v3092 = vpack.c.b16 %v2588, %v2576
    %v3093 = vpack.c.b16 %v2589, %v2577
    %v3094 = vpack.c.b16 %v2590, %v2578
    %v3095 = vpack.c.b16 %v2591, %v2579
    %v3096 = vpack.c.b16 %v2592, %v2580
    %v3097 = vpack.c.b16 %v2593, %v2581
    %v3098 = vpack.c.b16 %v2594, %v2582
    %v3099 = vpack.c.b16 %v2595, %v2583
    %v3100 = vpack.c.b16 %v2596, %v2584
    %v3101 = vpack.c.b16 %v2609, %v2597
    %v3102 = vpack.c.b16 %v2610, %v2598
    %v3103 = vpack.c.b16 %v2611, %v2599
    %v3104 = vpack.c.b16 %v2612, %v2600
    %v3105 = vpack.c.b16 %v2613, %v2601
    %v3106 = vpack.c.b16 %v2614, %v2602
    %v3107 = vpack.c.b16 %v2615, %v2603
    %v3108 = vpack.c.b16 %v2616, %v2604
    %v3109 = vpack.c.b16 %v2617, %v2605
    %v3110 = vpack.c.b16 %v2618, %v2606
    %v3111 = vpack.c.b16 %v2619, %v2607
    %v3112 = vpack.c.b16 %v2620, %v2608
    %v3113 = vpack.c.b16 %v2633, %v2621
    %v3114 = vpack.c.b16 %v2634, %v2622
    %v3115 = vpack.c.b16 %v2635, %v2623
    %v3116 = vpack.c.b16 %v2636, %v2624
    %v3117 = vpack.c.b16 %v2637, %v2625
    %v3118 = vpack.c.b16 %v2638, %v2626
    %v3119 = vpack.c.b16 %v2639, %v2627
    %v3120 = vpack.c.b16 %v2640, %v2628
    %v3121 = vpack.c.b16 %v2641, %v2629
    %v3122 = vpack.c.b16 %v2642, %v2630
    %v3123 = vpack.c.b16 %v2643, %v2631
    %v3124 = vpack.c.b16 %v2644, %v2632
    %v3125 = vpack.c.b16 %v2657, %v2645
    %v3126 = vpack.c.b16 %v2658, %v2646
    %v3127 = vpack.c.b16 %v2659, %v2647
    %v3128 = vpack.c.b16 %v2660, %v2648
    %v3129 = vpack.c.b16 %v2661, %v2649
    %v3130 = vpack.c.b16 %v2662, %v2650
    %v3131 = vpack.c.b16 %v2663, %v2651
    %v3132 = vpack.c.b16 %v2664, %v2652
    %v3133 = vpack.c.b16 %v2665, %v2653
    %v3134 = vpack.c.b16 %v2666, %v2654
    %v3135 = vpack.c.b16 %v2667, %v2655
    %v3136 = vpack.c.b16 %v2668, %v2656
    %v3137 = vpack.c.b16 %v2681, %v2669
    %v3138 = vpack.c.b16 %v2682, %v2670
    %v3139 = vpack.c.b16 %v2683, %v2671
    %v3140 = vpack.c.b16 %v2684, %v2672
    %v3141 = vpack.c.b16 %v2685, %v2673
    %v3142 = vpack.c.b16 %v2686, %v2674
    %v3143 = vpack.c.b16 %v2687, %v2675
    %v3144 = vpack.c.b16 %v2688, %v2676
    %v3145 = vpack.c.b16 %v2689, %v2677
    %v3146 = vpack.c.b16 %v2690, %v2678
    %v3147 = vpack.c.b16 %v2691, %v2679
    %v3148 = vpack.c.b16 %v2692, %v2680
    %v3149 = vpack.c.b16 %v2705, %v2693
    %v3150 = vpack.c.b16 %v2706, %v2694
    %v3151 = vpack.c.b16 %v2707, %v2695
    %v3152 = vpack.c.b16 %v2708, %v2696
    %v3153 = vpack.c.b16 %v2709, %v2697
    %v3154 = vpack.c.b16 %v2710, %v2698
    %v3155 = vpack.c.b16 %v2711, %v2699
    %v3156 = vpack.c.b16 %v2712, %v2700
    %v3157 = vpack.c.b16 %v2713, %v2701
    %v3158 = vpack.c.b16 %v2714, %v2702
    %v3159 = vpack.c.b16 %v2715, %v2703
    %v3160 = vpack.c.b16 %v2716, %v2704
    %v3161 = vpack.c.b16 %v2729, %v2717
    %v3162 = vpack.c.b16 %v2730, %v2718
    %v3163 = vpack.c.b16 %v2731, %v2719
    %v3164 = vpack.c.b16 %v2732, %v2720
    %v3165 = vpack.c.b16 %v2733, %v2721
    %v3166 = vpack.c.b16 %v2734, %v2722
    %v3167 = vpack.c.b16 %v2735, %v2723
    %v3168 = vpack.c.b16 %v2736, %v2724
    %v3169 = vpack.c.b16 %v2737, %v2725
    %v3170 = vpack.c.b16 %v2738, %v2726
    %v3171 = vpack.c.b16 %v2739, %v2727
    %v3172 = vpack.c.b16 %v2740, %v2728
    %v3173 = vpack.c.b16 %v2753, %v2741
    %v3174 = vpack.c.b16 %v2754, %v2742
    %v3175 = vpack.c.b16 %v2755, %v2743
    %v3176 = vpack.c.b16 %v2756, %v2744
    %v3177 = vpack.c.b16 %v2757, %v2745
    %v3178 = vpack.c.b16 %v2758, %v2746
    %v3179 = vpack.c.b16 %v2759, %v2747
    %v3180 = vpack.c.b16 %v2760, %v2748
    %v3181 = vpack.c.b16 %v2761, %v2749
    %v3182 = vpack.c.b16 %v2762, %v2750
    %v3183 = vpack.c.b16 %v2763, %v2751
    %v3184 = vpack.c.b16 %v2764, %v2752
    %v3185 = vpack.c.b16 %v2777, %v2765
    %v3186 = vpack.c.b16 %v2778, %v2766
    %v3187 = vpack.c.b16 %v2779, %v2767
    %v3188 = vpack.c.b16 %v2780, %v2768
    %v3189 = vpack.c.b16 %v2781, %v2769
    %v3190 = vpack.c.b16 %v2782, %v2770
    %v3191 = vpack.c.b16 %v2783, %v2771
    %v3192 = vpack.c.b16 %v2784, %v2772
    %v3193 = vpack.c.b16 %v2785, %v2773
    %v3194 = vpack.c.b16 %v2786, %v2774
    %v3195 = vpack.c.b16 %v2787, %v2775
    %v3196 = vpack.c.b16 %v2788, %v2776
    %v3197 = vpack.c.b16 %v2801, %v2789
    %v3198 = vpack.c.b16 %v2802, %v2790
    %v3199 = vpack.c.b16 %v2803, %v2791
    %v3200 = vpack.c.b16 %v2804, %v2792
    %v3201 = vpack.c.b16 %v2805, %v2793
    %v3202 = vpack.c.b16 %v2806, %v2794
    %v3203 = vpack.c.b16 %v2807, %v2795
    %v3204 = vpack.c.b16 %v2808, %v2796
    %v3205 = vpack.c.b16 %v2809, %v2797
    %v3206 = vpack.c.b16 %v2810, %v2798
    %v3207 = vpack.c.b16 %v2811, %v2799
    %v3208 = vpack.c.b16 %v2812, %v2800
    %v3209 = vpack.c.b16 %v2825, %v2813
    %v3210 = vpack.c.b16 %v2826, %v2814
    %v3211 = vpack.c.b16 %v2827, %v2815
    %v3212 = vpack.c.b16 %v2828, %v2816
    %v3213 = vpack.c.b16 %v2829, %v2817
    %v3214 = vpack.c.b16 %v2830, %v2818
    %v3215 = vpack.c.b16 %v2831, %v2819
    %v3216 = vpack.c.b16 %v2832, %v2820
    %v3217 = vpack.c.b16 %v2833, %v2821
    %v3218 = vpack.c.b16 %v2834, %v2822
    %v3219 = vpack.c.b16 %v2835, %v2823
    %v3220 = vpack.c.b16 %v2836, %v2824
    %v3607 = vperm.slane %v1683, 0
    %v3608 = vperm.slane %v1683, 1
    %v3609 = vperm.slane %v1683, 2
    %v3610 = vperm.slane %v1683, 3
    %v3611 = vperm.slane %v1683, 4
    %v3612 = vperm.slane %v1683, 5
    %v3613 = vperm.slane %v1683, 6
    %v3614 = vperm.slane %v1683, 7
    %v3615 = vperm.slane %v1684, 0
    %v3616 = vperm.slane %v1684, 1
    %v3617 = vperm.slane %v1684, 2
    %v3618 = vperm.slane %v1684, 3
    %3631 = vmatpush.bf16.msra.mxu0 %v2921
    %3632 = vmatpush.bf16.msra.mxu0 %v2909
    %3633 = vmatpush.bf16.msra.mxu0 %v2897
    %3634 = vmatpush.bf16.msra.mxu0 %v2885
    %3635 = vmatpush.bf16.msra.mxu0 %v2873
    %3636 = vmatpush.bf16.msra.mxu0 %v2861
    %3637 = vmatpush.bf16.msra.mxu0 %v2849
    %3638 = vmatpush.bf16.msra.mxu0 %v2837
    %3639 = vmatmul.bf16.gmra.mxu0 %v1295
    %v3640 = vpop.f32.mrf.mxu0
    %v3641 = vadd.f32 %v3607, %v3640
    %v3642 = vpop.f32.mrf.mxu0
    %3643 = vdwg.mxu0
    %3644 = vmatpush.bf16.msra.mxu0 %v3017
    %3645 = vmatpush.bf16.msra.mxu0 %v3005
    %3646 = vmatpush.bf16.msra.mxu0 %v2993
    %3647 = vmatpush.bf16.msra.mxu0 %v2981
    %3648 = vmatpush.bf16.msra.mxu0 %v2969
    %3649 = vmatpush.bf16.msra.mxu0 %v2957
    %3650 = vmatpush.bf16.msra.mxu0 %v2945
    %3651 = vmatpush.bf16.msra.mxu0 %v2933
    %3652 = vmatmul.bf16.gmra.mxu0 %v1296
    %v3653 = vpop.f32.mrf.mxu0
    %v3654 = vadd.f32 %v3641, %v3653
    %v3655 = vpop.f32.mrf.mxu0
    %3656 = vdwg.mxu0
    %3657 = vmatpush.bf16.msra.mxu0 %v3113
    %3658 = vmatpush.bf16.msra.mxu0 %v3101
    %3659 = vmatpush.bf16.msra.mxu0 %v3089
    %3660 = vmatpush.bf16.msra.mxu0 %v3077
    %3661 = vmatpush.bf16.msra.mxu0 %v3065
    %3662 = vmatpush.bf16.msra.mxu0 %v3053
    %3663 = vmatpush.bf16.msra.mxu0 %v3041
    %3664 = vmatpush.bf16.msra.mxu0 %v3029
    %3665 = vmatmul.bf16.gmra.mxu0 %v1297
    %v3666 = vpop.f32.mrf.mxu0
    %v3667 = vadd.f32 %v3654, %v3666
    %v3668 = vpop.f32.mrf.mxu0
    %3669 = vdwg.mxu0
    %3670 = vmatpush.bf16.msra.mxu0 %v3209
    %3671 = vmatpush.bf16.msra.mxu0 %v3197
    %3672 = vmatpush.bf16.msra.mxu0 %v3185
    %3673 = vmatpush.bf16.msra.mxu0 %v3173
    %3674 = vmatpush.bf16.msra.mxu0 %v3161
    %3675 = vmatpush.bf16.msra.mxu0 %v3149
    %3676 = vmatpush.bf16.msra.mxu0 %v3137
    %3677 = vmatpush.bf16.msra.mxu0 %v3125
    %3678 = vmatmul.bf16.gmra.mxu0 %v1298
    %v3679 = vpop.f32.mrf.mxu0
    %v3680 = vadd.f32 %v3667, %v3679
    %v3681 = vpop.f32.mrf.mxu0
    %3682 = vdwg.mxu0
    %3683 = vmatpush.bf16.msra.mxu0 %v2922
    %3684 = vmatpush.bf16.msra.mxu0 %v2910
    %3685 = vmatpush.bf16.msra.mxu0 %v2898
    %3686 = vmatpush.bf16.msra.mxu0 %v2886
    %3687 = vmatpush.bf16.msra.mxu0 %v2874
    %3688 = vmatpush.bf16.msra.mxu0 %v2862
    %3689 = vmatpush.bf16.msra.mxu0 %v2850
    %3690 = vmatpush.bf16.msra.mxu0 %v2838
    %3691 = vmatmul.bf16.gmra.mxu0 %v1295
    %v3692 = vpop.f32.mrf.mxu0
    %v3693 = vadd.f32 %v3608, %v3692
    %v3694 = vpop.f32.mrf.mxu0
    %3695 = vdwg.mxu0
    %3696 = vmatpush.bf16.msra.mxu0 %v3018
    %3697 = vmatpush.bf16.msra.mxu0 %v3006
    %3698 = vmatpush.bf16.msra.mxu0 %v2994
    %3699 = vmatpush.bf16.msra.mxu0 %v2982
    %3700 = vmatpush.bf16.msra.mxu0 %v2970
    %3701 = vmatpush.bf16.msra.mxu0 %v2958
    %3702 = vmatpush.bf16.msra.mxu0 %v2946
    %3703 = vmatpush.bf16.msra.mxu0 %v2934
    %3704 = vmatmul.bf16.gmra.mxu0 %v1296
    %v3705 = vpop.f32.mrf.mxu0
    %v3706 = vadd.f32 %v3693, %v3705
    %v3707 = vpop.f32.mrf.mxu0
    %3708 = vdwg.mxu0
    %3709 = vmatpush.bf16.msra.mxu0 %v3114
    %3710 = vmatpush.bf16.msra.mxu0 %v3102
    %3711 = vmatpush.bf16.msra.mxu0 %v3090
    %3712 = vmatpush.bf16.msra.mxu0 %v3078
    %3713 = vmatpush.bf16.msra.mxu0 %v3066
    %3714 = vmatpush.bf16.msra.mxu0 %v3054
    %3715 = vmatpush.bf16.msra.mxu0 %v3042
    %3716 = vmatpush.bf16.msra.mxu0 %v3030
    %3717 = vmatmul.bf16.gmra.mxu0 %v1297
    %v3718 = vpop.f32.mrf.mxu0
    %v3719 = vadd.f32 %v3706, %v3718
    %v3720 = vpop.f32.mrf.mxu0
    %3721 = vdwg.mxu0
    %3722 = vmatpush.bf16.msra.mxu0 %v3210
    %3723 = vmatpush.bf16.msra.mxu0 %v3198
    %3724 = vmatpush.bf16.msra.mxu0 %v3186
    %3725 = vmatpush.bf16.msra.mxu0 %v3174
    %3726 = vmatpush.bf16.msra.mxu0 %v3162
    %3727 = vmatpush.bf16.msra.mxu0 %v3150
    %3728 = vmatpush.bf16.msra.mxu0 %v3138
    %3729 = vmatpush.bf16.msra.mxu0 %v3126
    %3730 = vmatmul.bf16.gmra.mxu0 %v1298
    %v3731 = vpop.f32.mrf.mxu0
    %v3732 = vadd.f32 %v3719, %v3731
    %v3733 = vpop.f32.mrf.mxu0
    %3734 = vdwg.mxu0
    %3735 = vmatpush.bf16.msra.mxu0 %v2923
    %3736 = vmatpush.bf16.msra.mxu0 %v2911
    %3737 = vmatpush.bf16.msra.mxu0 %v2899
    %3738 = vmatpush.bf16.msra.mxu0 %v2887
    %3739 = vmatpush.bf16.msra.mxu0 %v2875
    %3740 = vmatpush.bf16.msra.mxu0 %v2863
    %3741 = vmatpush.bf16.msra.mxu0 %v2851
    %3742 = vmatpush.bf16.msra.mxu0 %v2839
    %3743 = vmatmul.bf16.gmra.mxu0 %v1295
    %v3744 = vpop.f32.mrf.mxu0
    %v3745 = vadd.f32 %v3609, %v3744
    %v3746 = vpop.f32.mrf.mxu0
    %3747 = vdwg.mxu0
    %3748 = vmatpush.bf16.msra.mxu0 %v3019
    %3749 = vmatpush.bf16.msra.mxu0 %v3007
    %3750 = vmatpush.bf16.msra.mxu0 %v2995
    %3751 = vmatpush.bf16.msra.mxu0 %v2983
    %3752 = vmatpush.bf16.msra.mxu0 %v2971
    %3753 = vmatpush.bf16.msra.mxu0 %v2959
    %3754 = vmatpush.bf16.msra.mxu0 %v2947
    %3755 = vmatpush.bf16.msra.mxu0 %v2935
    %3756 = vmatmul.bf16.gmra.mxu0 %v1296
    %v3757 = vpop.f32.mrf.mxu0
    %v3758 = vadd.f32 %v3745, %v3757
    %v3759 = vpop.f32.mrf.mxu0
    %3760 = vdwg.mxu0
    %3761 = vmatpush.bf16.msra.mxu0 %v3115
    %3762 = vmatpush.bf16.msra.mxu0 %v3103
    %3763 = vmatpush.bf16.msra.mxu0 %v3091
    %3764 = vmatpush.bf16.msra.mxu0 %v3079
    %3765 = vmatpush.bf16.msra.mxu0 %v3067
    %3766 = vmatpush.bf16.msra.mxu0 %v3055
    %3767 = vmatpush.bf16.msra.mxu0 %v3043
    %3768 = vmatpush.bf16.msra.mxu0 %v3031
    %3769 = vmatmul.bf16.gmra.mxu0 %v1297
    %v3770 = vpop.f32.mrf.mxu0
    %v3771 = vadd.f32 %v3758, %v3770
    %v3772 = vpop.f32.mrf.mxu0
    %3773 = vdwg.mxu0
    %3774 = vmatpush.bf16.msra.mxu0 %v3211
    %3775 = vmatpush.bf16.msra.mxu0 %v3199
    %3776 = vmatpush.bf16.msra.mxu0 %v3187
    %3777 = vmatpush.bf16.msra.mxu0 %v3175
    %3778 = vmatpush.bf16.msra.mxu0 %v3163
    %3779 = vmatpush.bf16.msra.mxu0 %v3151
    %3780 = vmatpush.bf16.msra.mxu0 %v3139
    %3781 = vmatpush.bf16.msra.mxu0 %v3127
    %3782 = vmatmul.bf16.gmra.mxu0 %v1298
    %v3783 = vpop.f32.mrf.mxu0
    %v3784 = vadd.f32 %v3771, %v3783
    %v3785 = vpop.f32.mrf.mxu0
    %3786 = vdwg.mxu0
    %3787 = vmatpush.bf16.msra.mxu0 %v2924
    %3788 = vmatpush.bf16.msra.mxu0 %v2912
    %3789 = vmatpush.bf16.msra.mxu0 %v2900
    %3790 = vmatpush.bf16.msra.mxu0 %v2888
    %3791 = vmatpush.bf16.msra.mxu0 %v2876
    %3792 = vmatpush.bf16.msra.mxu0 %v2864
    %3793 = vmatpush.bf16.msra.mxu0 %v2852
    %3794 = vmatpush.bf16.msra.mxu0 %v2840
    %3795 = vmatmul.bf16.gmra.mxu0 %v1295
    %v3796 = vpop.f32.mrf.mxu0
    %v3797 = vadd.f32 %v3610, %v3796
    %v3798 = vpop.f32.mrf.mxu0
    %3799 = vdwg.mxu0
    %3800 = vmatpush.bf16.msra.mxu0 %v3020
    %3801 = vmatpush.bf16.msra.mxu0 %v3008
    %3802 = vmatpush.bf16.msra.mxu0 %v2996
    %3803 = vmatpush.bf16.msra.mxu0 %v2984
    %3804 = vmatpush.bf16.msra.mxu0 %v2972
    %3805 = vmatpush.bf16.msra.mxu0 %v2960
    %3806 = vmatpush.bf16.msra.mxu0 %v2948
    %3807 = vmatpush.bf16.msra.mxu0 %v2936
    %3808 = vmatmul.bf16.gmra.mxu0 %v1296
    %v3809 = vpop.f32.mrf.mxu0
    %v3810 = vadd.f32 %v3797, %v3809
    %v3811 = vpop.f32.mrf.mxu0
    %3812 = vdwg.mxu0
    %3813 = vmatpush.bf16.msra.mxu0 %v3116
    %3814 = vmatpush.bf16.msra.mxu0 %v3104
    %3815 = vmatpush.bf16.msra.mxu0 %v3092
    %3816 = vmatpush.bf16.msra.mxu0 %v3080
    %3817 = vmatpush.bf16.msra.mxu0 %v3068
    %3818 = vmatpush.bf16.msra.mxu0 %v3056
    %3819 = vmatpush.bf16.msra.mxu0 %v3044
    %3820 = vmatpush.bf16.msra.mxu0 %v3032
    %3821 = vmatmul.bf16.gmra.mxu0 %v1297
    %v3822 = vpop.f32.mrf.mxu0
    %v3823 = vadd.f32 %v3810, %v3822
    %v3824 = vpop.f32.mrf.mxu0
    %3825 = vdwg.mxu0
    %3826 = vmatpush.bf16.msra.mxu0 %v3212
    %3827 = vmatpush.bf16.msra.mxu0 %v3200
    %3828 = vmatpush.bf16.msra.mxu0 %v3188
    %3829 = vmatpush.bf16.msra.mxu0 %v3176
    %3830 = vmatpush.bf16.msra.mxu0 %v3164
    %3831 = vmatpush.bf16.msra.mxu0 %v3152
    %3832 = vmatpush.bf16.msra.mxu0 %v3140
    %3833 = vmatpush.bf16.msra.mxu0 %v3128
    %3834 = vmatmul.bf16.gmra.mxu0 %v1298
    %v3835 = vpop.f32.mrf.mxu0
    %v3836 = vadd.f32 %v3823, %v3835
    %v3837 = vpop.f32.mrf.mxu0
    %3838 = vdwg.mxu0
    %3839 = vmatpush.bf16.msra.mxu0 %v2925
    %3840 = vmatpush.bf16.msra.mxu0 %v2913
    %3841 = vmatpush.bf16.msra.mxu0 %v2901
    %3842 = vmatpush.bf16.msra.mxu0 %v2889
    %3843 = vmatpush.bf16.msra.mxu0 %v2877
    %3844 = vmatpush.bf16.msra.mxu0 %v2865
    %3845 = vmatpush.bf16.msra.mxu0 %v2853
    %3846 = vmatpush.bf16.msra.mxu0 %v2841
    %3847 = vmatmul.bf16.gmra.mxu0 %v1295
    %v3848 = vpop.f32.mrf.mxu0
    %v3849 = vadd.f32 %v3611, %v3848
    %v3850 = vpop.f32.mrf.mxu0
    %3851 = vdwg.mxu0
    %3852 = vmatpush.bf16.msra.mxu0 %v3021
    %3853 = vmatpush.bf16.msra.mxu0 %v3009
    %3854 = vmatpush.bf16.msra.mxu0 %v2997
    %3855 = vmatpush.bf16.msra.mxu0 %v2985
    %3856 = vmatpush.bf16.msra.mxu0 %v2973
    %3857 = vmatpush.bf16.msra.mxu0 %v2961
    %3858 = vmatpush.bf16.msra.mxu0 %v2949
    %3859 = vmatpush.bf16.msra.mxu0 %v2937
    %3860 = vmatmul.bf16.gmra.mxu0 %v1296
    %v3861 = vpop.f32.mrf.mxu0
    %v3862 = vadd.f32 %v3849, %v3861
    %v3863 = vpop.f32.mrf.mxu0
    %3864 = vdwg.mxu0
    %3865 = vmatpush.bf16.msra.mxu0 %v3117
    %3866 = vmatpush.bf16.msra.mxu0 %v3105
    %3867 = vmatpush.bf16.msra.mxu0 %v3093
    %3868 = vmatpush.bf16.msra.mxu0 %v3081
    %3869 = vmatpush.bf16.msra.mxu0 %v3069
    %3870 = vmatpush.bf16.msra.mxu0 %v3057
    %3871 = vmatpush.bf16.msra.mxu0 %v3045
    %3872 = vmatpush.bf16.msra.mxu0 %v3033
    %3873 = vmatmul.bf16.gmra.mxu0 %v1297
    %v3874 = vpop.f32.mrf.mxu0
    %v3875 = vadd.f32 %v3862, %v3874
    %v3876 = vpop.f32.mrf.mxu0
    %3877 = vdwg.mxu0
    %3878 = vmatpush.bf16.msra.mxu0 %v3213
    %3879 = vmatpush.bf16.msra.mxu0 %v3201
    %3880 = vmatpush.bf16.msra.mxu0 %v3189
    %3881 = vmatpush.bf16.msra.mxu0 %v3177
    %3882 = vmatpush.bf16.msra.mxu0 %v3165
    %3883 = vmatpush.bf16.msra.mxu0 %v3153
    %3884 = vmatpush.bf16.msra.mxu0 %v3141
    %3885 = vmatpush.bf16.msra.mxu0 %v3129
    %3886 = vmatmul.bf16.gmra.mxu0 %v1298
    %v3887 = vpop.f32.mrf.mxu0
    %v3888 = vadd.f32 %v3875, %v3887
    %v3889 = vpop.f32.mrf.mxu0
    %3890 = vdwg.mxu0
    %3891 = vmatpush.bf16.msra.mxu0 %v2926
    %3892 = vmatpush.bf16.msra.mxu0 %v2914
    %3893 = vmatpush.bf16.msra.mxu0 %v2902
    %3894 = vmatpush.bf16.msra.mxu0 %v2890
    %3895 = vmatpush.bf16.msra.mxu0 %v2878
    %3896 = vmatpush.bf16.msra.mxu0 %v2866
    %3897 = vmatpush.bf16.msra.mxu0 %v2854
    %3898 = vmatpush.bf16.msra.mxu0 %v2842
    %3899 = vmatmul.bf16.gmra.mxu0 %v1295
    %v3900 = vpop.f32.mrf.mxu0
    %v3901 = vadd.f32 %v3612, %v3900
    %v3902 = vpop.f32.mrf.mxu0
    %3903 = vdwg.mxu0
    %3904 = vmatpush.bf16.msra.mxu0 %v3022
    %3905 = vmatpush.bf16.msra.mxu0 %v3010
    %3906 = vmatpush.bf16.msra.mxu0 %v2998
    %3907 = vmatpush.bf16.msra.mxu0 %v2986
    %3908 = vmatpush.bf16.msra.mxu0 %v2974
    %3909 = vmatpush.bf16.msra.mxu0 %v2962
    %3910 = vmatpush.bf16.msra.mxu0 %v2950
    %3911 = vmatpush.bf16.msra.mxu0 %v2938
    %3912 = vmatmul.bf16.gmra.mxu0 %v1296
    %v3913 = vpop.f32.mrf.mxu0
    %v3914 = vadd.f32 %v3901, %v3913
    %v3915 = vpop.f32.mrf.mxu0
    %3916 = vdwg.mxu0
    %3917 = vmatpush.bf16.msra.mxu0 %v3118
    %3918 = vmatpush.bf16.msra.mxu0 %v3106
    %3919 = vmatpush.bf16.msra.mxu0 %v3094
    %3920 = vmatpush.bf16.msra.mxu0 %v3082
    %3921 = vmatpush.bf16.msra.mxu0 %v3070
    %3922 = vmatpush.bf16.msra.mxu0 %v3058
    %3923 = vmatpush.bf16.msra.mxu0 %v3046
    %3924 = vmatpush.bf16.msra.mxu0 %v3034
    %3925 = vmatmul.bf16.gmra.mxu0 %v1297
    %v3926 = vpop.f32.mrf.mxu0
    %v3927 = vadd.f32 %v3914, %v3926
    %v3928 = vpop.f32.mrf.mxu0
    %3929 = vdwg.mxu0
    %3930 = vmatpush.bf16.msra.mxu0 %v3214
    %3931 = vmatpush.bf16.msra.mxu0 %v3202
    %3932 = vmatpush.bf16.msra.mxu0 %v3190
    %3933 = vmatpush.bf16.msra.mxu0 %v3178
    %3934 = vmatpush.bf16.msra.mxu0 %v3166
    %3935 = vmatpush.bf16.msra.mxu0 %v3154
    %3936 = vmatpush.bf16.msra.mxu0 %v3142
    %3937 = vmatpush.bf16.msra.mxu0 %v3130
    %3938 = vmatmul.bf16.gmra.mxu0 %v1298
    %v3939 = vpop.f32.mrf.mxu0
    %v3940 = vadd.f32 %v3927, %v3939
    %v3941 = vpop.f32.mrf.mxu0
    %3942 = vdwg.mxu0
    %3943 = vmatpush.bf16.msra.mxu0 %v2927
    %3944 = vmatpush.bf16.msra.mxu0 %v2915
    %3945 = vmatpush.bf16.msra.mxu0 %v2903
    %3946 = vmatpush.bf16.msra.mxu0 %v2891
    %3947 = vmatpush.bf16.msra.mxu0 %v2879
    %3948 = vmatpush.bf16.msra.mxu0 %v2867
    %3949 = vmatpush.bf16.msra.mxu0 %v2855
    %3950 = vmatpush.bf16.msra.mxu0 %v2843
    %3951 = vmatmul.bf16.gmra.mxu0 %v1295
    %v3952 = vpop.f32.mrf.mxu0
    %v3953 = vadd.f32 %v3613, %v3952
    %v3954 = vpop.f32.mrf.mxu0
    %3955 = vdwg.mxu0
    %3956 = vmatpush.bf16.msra.mxu0 %v3023
    %3957 = vmatpush.bf16.msra.mxu0 %v3011
    %3958 = vmatpush.bf16.msra.mxu0 %v2999
    %3959 = vmatpush.bf16.msra.mxu0 %v2987
    %3960 = vmatpush.bf16.msra.mxu0 %v2975
    %3961 = vmatpush.bf16.msra.mxu0 %v2963
    %3962 = vmatpush.bf16.msra.mxu0 %v2951
    %3963 = vmatpush.bf16.msra.mxu0 %v2939
    %3964 = vmatmul.bf16.gmra.mxu0 %v1296
    %v3965 = vpop.f32.mrf.mxu0
    %v3966 = vadd.f32 %v3953, %v3965
    %v3967 = vpop.f32.mrf.mxu0
    %3968 = vdwg.mxu0
    %3969 = vmatpush.bf16.msra.mxu0 %v3119
    %3970 = vmatpush.bf16.msra.mxu0 %v3107
    %3971 = vmatpush.bf16.msra.mxu0 %v3095
    %3972 = vmatpush.bf16.msra.mxu0 %v3083
    %3973 = vmatpush.bf16.msra.mxu0 %v3071
    %3974 = vmatpush.bf16.msra.mxu0 %v3059
    %3975 = vmatpush.bf16.msra.mxu0 %v3047
    %3976 = vmatpush.bf16.msra.mxu0 %v3035
    %3977 = vmatmul.bf16.gmra.mxu0 %v1297
    %v3978 = vpop.f32.mrf.mxu0
    %v3979 = vadd.f32 %v3966, %v3978
    %v3980 = vpop.f32.mrf.mxu0
    %3981 = vdwg.mxu0
    %3982 = vmatpush.bf16.msra.mxu0 %v3215
    %3983 = vmatpush.bf16.msra.mxu0 %v3203
    %3984 = vmatpush.bf16.msra.mxu0 %v3191
    %3985 = vmatpush.bf16.msra.mxu0 %v3179
    %3986 = vmatpush.bf16.msra.mxu0 %v3167
    %3987 = vmatpush.bf16.msra.mxu0 %v3155
    %3988 = vmatpush.bf16.msra.mxu0 %v3143
    %3989 = vmatpush.bf16.msra.mxu0 %v3131
    %3990 = vmatmul.bf16.gmra.mxu0 %v1298
    %v3991 = vpop.f32.mrf.mxu0
    %v3992 = vadd.f32 %v3979, %v3991
    %v3993 = vpop.f32.mrf.mxu0
    %3994 = vdwg.mxu0
    %3995 = vmatpush.bf16.msra.mxu0 %v2928
    %3996 = vmatpush.bf16.msra.mxu0 %v2916
    %3997 = vmatpush.bf16.msra.mxu0 %v2904
    %3998 = vmatpush.bf16.msra.mxu0 %v2892
    %3999 = vmatpush.bf16.msra.mxu0 %v2880
    %4000 = vmatpush.bf16.msra.mxu0 %v2868
    %4001 = vmatpush.bf16.msra.mxu0 %v2856
    %4002 = vmatpush.bf16.msra.mxu0 %v2844
    %4003 = vmatmul.bf16.gmra.mxu0 %v1295
    %v4004 = vpop.f32.mrf.mxu0
    %v4005 = vadd.f32 %v3614, %v4004
    %v4006 = vpop.f32.mrf.mxu0
    %4007 = vdwg.mxu0
    %4008 = vmatpush.bf16.msra.mxu0 %v3024
    %4009 = vmatpush.bf16.msra.mxu0 %v3012
    %4010 = vmatpush.bf16.msra.mxu0 %v3000
    %4011 = vmatpush.bf16.msra.mxu0 %v2988
    %4012 = vmatpush.bf16.msra.mxu0 %v2976
    %4013 = vmatpush.bf16.msra.mxu0 %v2964
    %4014 = vmatpush.bf16.msra.mxu0 %v2952
    %4015 = vmatpush.bf16.msra.mxu0 %v2940
    %4016 = vmatmul.bf16.gmra.mxu0 %v1296
    %v4017 = vpop.f32.mrf.mxu0
    %v4018 = vadd.f32 %v4005, %v4017
    %v4019 = vpop.f32.mrf.mxu0
    %4020 = vdwg.mxu0
    %4021 = vmatpush.bf16.msra.mxu0 %v3120
    %4022 = vmatpush.bf16.msra.mxu0 %v3108
    %4023 = vmatpush.bf16.msra.mxu0 %v3096
    %4024 = vmatpush.bf16.msra.mxu0 %v3084
    %4025 = vmatpush.bf16.msra.mxu0 %v3072
    %4026 = vmatpush.bf16.msra.mxu0 %v3060
    %4027 = vmatpush.bf16.msra.mxu0 %v3048
    %4028 = vmatpush.bf16.msra.mxu0 %v3036
    %4029 = vmatmul.bf16.gmra.mxu0 %v1297
    %v4030 = vpop.f32.mrf.mxu0
    %v4031 = vadd.f32 %v4018, %v4030
    %v4032 = vpop.f32.mrf.mxu0
    %4033 = vdwg.mxu0
    %4034 = vmatpush.bf16.msra.mxu0 %v3216
    %4035 = vmatpush.bf16.msra.mxu0 %v3204
    %4036 = vmatpush.bf16.msra.mxu0 %v3192
    %4037 = vmatpush.bf16.msra.mxu0 %v3180
    %4038 = vmatpush.bf16.msra.mxu0 %v3168
    %4039 = vmatpush.bf16.msra.mxu0 %v3156
    %4040 = vmatpush.bf16.msra.mxu0 %v3144
    %4041 = vmatpush.bf16.msra.mxu0 %v3132
    %4042 = vmatmul.bf16.gmra.mxu0 %v1298
    %v4043 = vpop.f32.mrf.mxu0
    %v4044 = vadd.f32 %v4031, %v4043
    %v4045 = vpop.f32.mrf.mxu0
    %4046 = vdwg.mxu0
    %4047 = vmatpush.bf16.msra.mxu0 %v2929
    %4048 = vmatpush.bf16.msra.mxu0 %v2917
    %4049 = vmatpush.bf16.msra.mxu0 %v2905
    %4050 = vmatpush.bf16.msra.mxu0 %v2893
    %4051 = vmatpush.bf16.msra.mxu0 %v2881
    %4052 = vmatpush.bf16.msra.mxu0 %v2869
    %4053 = vmatpush.bf16.msra.mxu0 %v2857
    %4054 = vmatpush.bf16.msra.mxu0 %v2845
    %4055 = vmatmul.bf16.gmra.mxu0 %v1295
    %v4056 = vpop.f32.mrf.mxu0
    %v4057 = vadd.f32 %v3615, %v4056
    %v4058 = vpop.f32.mrf.mxu0
    %4059 = vdwg.mxu0
    %4060 = vmatpush.bf16.msra.mxu0 %v3025
    %4061 = vmatpush.bf16.msra.mxu0 %v3013
    %4062 = vmatpush.bf16.msra.mxu0 %v3001
    %4063 = vmatpush.bf16.msra.mxu0 %v2989
    %4064 = vmatpush.bf16.msra.mxu0 %v2977
    %4065 = vmatpush.bf16.msra.mxu0 %v2965
    %4066 = vmatpush.bf16.msra.mxu0 %v2953
    %4067 = vmatpush.bf16.msra.mxu0 %v2941
    %4068 = vmatmul.bf16.gmra.mxu0 %v1296
    %v4069 = vpop.f32.mrf.mxu0
    %v4070 = vadd.f32 %v4057, %v4069
    %v4071 = vpop.f32.mrf.mxu0
    %4072 = vdwg.mxu0
    %4073 = vmatpush.bf16.msra.mxu0 %v3121
    %4074 = vmatpush.bf16.msra.mxu0 %v3109
    %4075 = vmatpush.bf16.msra.mxu0 %v3097
    %4076 = vmatpush.bf16.msra.mxu0 %v3085
    %4077 = vmatpush.bf16.msra.mxu0 %v3073
    %4078 = vmatpush.bf16.msra.mxu0 %v3061
    %4079 = vmatpush.bf16.msra.mxu0 %v3049
    %4080 = vmatpush.bf16.msra.mxu0 %v3037
    %4081 = vmatmul.bf16.gmra.mxu0 %v1297
    %v4082 = vpop.f32.mrf.mxu0
    %v4083 = vadd.f32 %v4070, %v4082
    %v4084 = vpop.f32.mrf.mxu0
    %4085 = vdwg.mxu0
    %4086 = vmatpush.bf16.msra.mxu0 %v3217
    %4087 = vmatpush.bf16.msra.mxu0 %v3205
    %4088 = vmatpush.bf16.msra.mxu0 %v3193
    %4089 = vmatpush.bf16.msra.mxu0 %v3181
    %4090 = vmatpush.bf16.msra.mxu0 %v3169
    %4091 = vmatpush.bf16.msra.mxu0 %v3157
    %4092 = vmatpush.bf16.msra.mxu0 %v3145
    %4093 = vmatpush.bf16.msra.mxu0 %v3133
    %4094 = vmatmul.bf16.gmra.mxu0 %v1298
    %v4095 = vpop.f32.mrf.mxu0
    %v4096 = vadd.f32 %v4083, %v4095
    %v4097 = vpop.f32.mrf.mxu0
    %4098 = vdwg.mxu0
    %4099 = vmatpush.bf16.msra.mxu0 %v2930
    %4100 = vmatpush.bf16.msra.mxu0 %v2918
    %4101 = vmatpush.bf16.msra.mxu0 %v2906
    %4102 = vmatpush.bf16.msra.mxu0 %v2894
    %4103 = vmatpush.bf16.msra.mxu0 %v2882
    %4104 = vmatpush.bf16.msra.mxu0 %v2870
    %4105 = vmatpush.bf16.msra.mxu0 %v2858
    %4106 = vmatpush.bf16.msra.mxu0 %v2846
    %4107 = vmatmul.bf16.gmra.mxu0 %v1295
    %v4108 = vpop.f32.mrf.mxu0
    %v4109 = vadd.f32 %v3616, %v4108
    %v4110 = vpop.f32.mrf.mxu0
    %4111 = vdwg.mxu0
    %4112 = vmatpush.bf16.msra.mxu0 %v3026
    %4113 = vmatpush.bf16.msra.mxu0 %v3014
    %4114 = vmatpush.bf16.msra.mxu0 %v3002
    %4115 = vmatpush.bf16.msra.mxu0 %v2990
    %4116 = vmatpush.bf16.msra.mxu0 %v2978
    %4117 = vmatpush.bf16.msra.mxu0 %v2966
    %4118 = vmatpush.bf16.msra.mxu0 %v2954
    %4119 = vmatpush.bf16.msra.mxu0 %v2942
    %4120 = vmatmul.bf16.gmra.mxu0 %v1296
    %v4121 = vpop.f32.mrf.mxu0
    %v4122 = vadd.f32 %v4109, %v4121
    %v4123 = vpop.f32.mrf.mxu0
    %4124 = vdwg.mxu0
    %4125 = vmatpush.bf16.msra.mxu0 %v3122
    %4126 = vmatpush.bf16.msra.mxu0 %v3110
    %4127 = vmatpush.bf16.msra.mxu0 %v3098
    %4128 = vmatpush.bf16.msra.mxu0 %v3086
    %4129 = vmatpush.bf16.msra.mxu0 %v3074
    %4130 = vmatpush.bf16.msra.mxu0 %v3062
    %4131 = vmatpush.bf16.msra.mxu0 %v3050
    %4132 = vmatpush.bf16.msra.mxu0 %v3038
    %4133 = vmatmul.bf16.gmra.mxu0 %v1297
    %v4134 = vpop.f32.mrf.mxu0
    %v4135 = vadd.f32 %v4122, %v4134
    %v4136 = vpop.f32.mrf.mxu0
    %4137 = vdwg.mxu0
    %4138 = vmatpush.bf16.msra.mxu0 %v3218
    %4139 = vmatpush.bf16.msra.mxu0 %v3206
    %4140 = vmatpush.bf16.msra.mxu0 %v3194
    %4141 = vmatpush.bf16.msra.mxu0 %v3182
    %4142 = vmatpush.bf16.msra.mxu0 %v3170
    %4143 = vmatpush.bf16.msra.mxu0 %v3158
    %4144 = vmatpush.bf16.msra.mxu0 %v3146
    %4145 = vmatpush.bf16.msra.mxu0 %v3134
    %4146 = vmatmul.bf16.gmra.mxu0 %v1298
    %v4147 = vpop.f32.mrf.mxu0
    %v4148 = vadd.f32 %v4135, %v4147
    %v4149 = vpop.f32.mrf.mxu0
    %4150 = vdwg.mxu0
    %4151 = vmatpush.bf16.msra.mxu0 %v2931
    %4152 = vmatpush.bf16.msra.mxu0 %v2919
    %4153 = vmatpush.bf16.msra.mxu0 %v2907
    %4154 = vmatpush.bf16.msra.mxu0 %v2895
    %4155 = vmatpush.bf16.msra.mxu0 %v2883
    %4156 = vmatpush.bf16.msra.mxu0 %v2871
    %4157 = vmatpush.bf16.msra.mxu0 %v2859
    %4158 = vmatpush.bf16.msra.mxu0 %v2847
    %4159 = vmatmul.bf16.gmra.mxu0 %v1295
    %v4160 = vpop.f32.mrf.mxu0
    %v4161 = vadd.f32 %v3617, %v4160
    %v4162 = vpop.f32.mrf.mxu0
    %4163 = vdwg.mxu0
    %4164 = vmatpush.bf16.msra.mxu0 %v3027
    %4165 = vmatpush.bf16.msra.mxu0 %v3015
    %4166 = vmatpush.bf16.msra.mxu0 %v3003
    %4167 = vmatpush.bf16.msra.mxu0 %v2991
    %4168 = vmatpush.bf16.msra.mxu0 %v2979
    %4169 = vmatpush.bf16.msra.mxu0 %v2967
    %4170 = vmatpush.bf16.msra.mxu0 %v2955
    %4171 = vmatpush.bf16.msra.mxu0 %v2943
    %4172 = vmatmul.bf16.gmra.mxu0 %v1296
    %v4173 = vpop.f32.mrf.mxu0
    %v4174 = vadd.f32 %v4161, %v4173
    %v4175 = vpop.f32.mrf.mxu0
    %4176 = vdwg.mxu0
    %4177 = vmatpush.bf16.msra.mxu0 %v3123
    %4178 = vmatpush.bf16.msra.mxu0 %v3111
    %4179 = vmatpush.bf16.msra.mxu0 %v3099
    %4180 = vmatpush.bf16.msra.mxu0 %v3087
    %4181 = vmatpush.bf16.msra.mxu0 %v3075
    %4182 = vmatpush.bf16.msra.mxu0 %v3063
    %4183 = vmatpush.bf16.msra.mxu0 %v3051
    %4184 = vmatpush.bf16.msra.mxu0 %v3039
    %4185 = vmatmul.bf16.gmra.mxu0 %v1297
    %v4186 = vpop.f32.mrf.mxu0
    %v4187 = vadd.f32 %v4174, %v4186
    %v4188 = vpop.f32.mrf.mxu0
    %4189 = vdwg.mxu0
    %4190 = vmatpush.bf16.msra.mxu0 %v3219
    %4191 = vmatpush.bf16.msra.mxu0 %v3207
    %4192 = vmatpush.bf16.msra.mxu0 %v3195
    %4193 = vmatpush.bf16.msra.mxu0 %v3183
    %4194 = vmatpush.bf16.msra.mxu0 %v3171
    %4195 = vmatpush.bf16.msra.mxu0 %v3159
    %4196 = vmatpush.bf16.msra.mxu0 %v3147
    %4197 = vmatpush.bf16.msra.mxu0 %v3135
    %4198 = vmatmul.bf16.gmra.mxu0 %v1298
    %v4199 = vpop.f32.mrf.mxu0
    %v4200 = vadd.f32 %v4187, %v4199
    %v4201 = vpop.f32.mrf.mxu0
    %4202 = vdwg.mxu0
    %4203 = vmatpush.bf16.msra.mxu0 %v2932
    %4204 = vmatpush.bf16.msra.mxu0 %v2920
    %4205 = vmatpush.bf16.msra.mxu0 %v2908
    %4206 = vmatpush.bf16.msra.mxu0 %v2896
    %4207 = vmatpush.bf16.msra.mxu0 %v2884
    %4208 = vmatpush.bf16.msra.mxu0 %v2872
    %4209 = vmatpush.bf16.msra.mxu0 %v2860
    %4210 = vmatpush.bf16.msra.mxu0 %v2848
    %4211 = vmatmul.bf16.gmra.mxu0 %v1295
    %v4212 = vpop.f32.mrf.mxu0
    %v4213 = vadd.f32 %v3618, %v4212
    %v4214 = vpop.f32.mrf.mxu0
    %4215 = vdwg.mxu0
    %4216 = vmatpush.bf16.msra.mxu0 %v3028
    %4217 = vmatpush.bf16.msra.mxu0 %v3016
    %4218 = vmatpush.bf16.msra.mxu0 %v3004
    %4219 = vmatpush.bf16.msra.mxu0 %v2992
    %4220 = vmatpush.bf16.msra.mxu0 %v2980
    %4221 = vmatpush.bf16.msra.mxu0 %v2968
    %4222 = vmatpush.bf16.msra.mxu0 %v2956
    %4223 = vmatpush.bf16.msra.mxu0 %v2944
    %4224 = vmatmul.bf16.gmra.mxu0 %v1296
    %v4225 = vpop.f32.mrf.mxu0
    %v4226 = vadd.f32 %v4213, %v4225
    %v4227 = vpop.f32.mrf.mxu0
    %4228 = vdwg.mxu0
    %4229 = vmatpush.bf16.msra.mxu0 %v3124
    %4230 = vmatpush.bf16.msra.mxu0 %v3112
    %4231 = vmatpush.bf16.msra.mxu0 %v3100
    %4232 = vmatpush.bf16.msra.mxu0 %v3088
    %4233 = vmatpush.bf16.msra.mxu0 %v3076
    %4234 = vmatpush.bf16.msra.mxu0 %v3064
    %4235 = vmatpush.bf16.msra.mxu0 %v3052
    %4236 = vmatpush.bf16.msra.mxu0 %v3040
    %4237 = vmatmul.bf16.gmra.mxu0 %v1297
    %v4238 = vpop.f32.mrf.mxu0
    %v4239 = vadd.f32 %v4226, %v4238
    %v4240 = vpop.f32.mrf.mxu0
    %4241 = vdwg.mxu0
    %4242 = vmatpush.bf16.msra.mxu0 %v3220
    %4243 = vmatpush.bf16.msra.mxu0 %v3208
    %4244 = vmatpush.bf16.msra.mxu0 %v3196
    %4245 = vmatpush.bf16.msra.mxu0 %v3184
    %4246 = vmatpush.bf16.msra.mxu0 %v3172
    %4247 = vmatpush.bf16.msra.mxu0 %v3160
    %4248 = vmatpush.bf16.msra.mxu0 %v3148
    %4249 = vmatpush.bf16.msra.mxu0 %v3136
    %4250 = vmatmul.bf16.gmra.mxu0 %v1298
    %v4251 = vpop.f32.mrf.mxu0
    %v4252 = vadd.f32 %v4239, %v4251
    %v4253 = vpop.f32.mrf.mxu0
    %4254 = vdwg.mxu0
    %vm4255 = vcmp.gt.f32.partialorder %v3680, 0.0
    %vm4256 = vcmp.gt.f32.partialorder %v3732, 0.0
    %vm4257 = vcmp.gt.f32.partialorder %v3784, 0.0
    %vm4258 = vcmp.gt.f32.partialorder %v3836, 0.0
    %vm4259 = vcmp.gt.f32.partialorder %v3888, 0.0
    %vm4260 = vcmp.gt.f32.partialorder %v3940, 0.0
    %vm4261 = vcmp.gt.f32.partialorder %v3992, 0.0
    %vm4262 = vcmp.gt.f32.partialorder %v4044, 0.0
    %vm4263 = vcmp.gt.f32.partialorder %v4096, 0.0
    %vm4264 = vcmp.gt.f32.partialorder %v4148, 0.0
    %vm4265 = vcmp.gt.f32.partialorder %v4200, 0.0
    %vm4266 = vcmp.gt.f32.partialorder %v4252, 0.0
    %v4267 = vmin.f32 %v3680, 0.0
    %v4268 = vmin.f32 %v3732, 0.0
    %v4269 = vmin.f32 %v3784, 0.0
    %v4270 = vmin.f32 %v3836, 0.0
    %v4271 = vmin.f32 %v3888, 0.0
    %v4272 = vmin.f32 %v3940, 0.0
    %v4273 = vmin.f32 %v3992, 0.0
    %v4274 = vmin.f32 %v4044, 0.0
    %v4275 = vmin.f32 %v4096, 0.0
    %v4276 = vmin.f32 %v4148, 0.0
    %v4277 = vmin.f32 %v4200, 0.0
    %v4278 = vmin.f32 %v4252, 0.0
    %v4279 = vmul.f32 %v4267, 1.442695
    %v4280 = vpow.pop %v4279
    %v4281 = vmul.f32 %v4268, 1.442695
    %v4282 = vpow.pop %v4281
    %v4283 = vmul.f32 %v4269, 1.442695
    %v4284 = vpow.pop %v4283
    %v4285 = vmul.f32 %v4270, 1.442695
    %v4286 = vpow.pop %v4285
    %v4287 = vmul.f32 %v4271, 1.442695
    %v4288 = vpow.pop %v4287
    %v4289 = vmul.f32 %v4272, 1.442695
    %v4290 = vpow.pop %v4289
    %v4291 = vmul.f32 %v4273, 1.442695
    %v4292 = vpow.pop %v4291
    %v4293 = vmul.f32 %v4274, 1.442695
    %v4294 = vpow.pop %v4293
    %v4295 = vmul.f32 %v4275, 1.442695
    %v4296 = vpow.pop %v4295
    %v4297 = vmul.f32 %v4276, 1.442695
    %v4298 = vpow.pop %v4297
    %v4299 = vmul.f32 %v4277, 1.442695
    %v4300 = vpow.pop %v4299
    %v4301 = vmul.f32 %v4278, 1.442695
    %v4302 = vpow.pop %v4301
    %v4303 = vsub.f32 %v4280, 1.0
    %v4304 = vsub.f32 %v4282, 1.0
    %v4305 = vsub.f32 %v4284, 1.0
    %v4306 = vsub.f32 %v4286, 1.0
    %v4307 = vsub.f32 %v4288, 1.0
    %v4308 = vsub.f32 %v4290, 1.0
    %v4309 = vsub.f32 %v4292, 1.0
    %v4310 = vsub.f32 %v4294, 1.0
    %v4311 = vsub.f32 %v4296, 1.0
    %v4312 = vsub.f32 %v4298, 1.0
    %v4313 = vsub.f32 %v4300, 1.0
    %v4314 = vsub.f32 %v4302, 1.0
    %v4315 = vsel %vm4255, %v3680, %v4303
    %v4316 = vsel %vm4256, %v3732, %v4304
    %v4317 = vsel %vm4257, %v3784, %v4305
    %v4318 = vsel %vm4258, %v3836, %v4306
    %v4319 = vsel %vm4259, %v3888, %v4307
    %v4320 = vsel %vm4260, %v3940, %v4308
    %v4321 = vsel %vm4261, %v3992, %v4309
    %v4322 = vsel %vm4262, %v4044, %v4310
    %v4323 = vsel %vm4263, %v4096, %v4311
    %v4324 = vsel %vm4264, %v4148, %v4312
    %v4325 = vsel %vm4265, %v4200, %v4313
    %v4326 = vsel %vm4266, %v4252, %v4314
    %v4327 = vpack.c.bf16 %v4316, %v4315
    %v4328 = vpack.c.bf16 %v4318, %v4317
    %v4331 = vrot.slane %v4327, 3
    %v4332 = vrot.slane %v4328, 6
    %v4333 = vrot.slane %v4328, 1
    %vm4334 = vcmask 1040384
    %v4337 = vsel %vm4334, %v4327, %v4331
    %vm4338 = vcmask 1042434
    %v4341 = vsel %vm4338, %v4332, %v4333
    %vm4342 = vcmask 1041408
    %v4343 = vsel %vm4342, %v4337, %v4341
    %vm4345 = vcmask 1040384
    %vm4346 = vsmask.f32 256
    %vm4347 = vmand %vm4345, %vm4346
    %vm4348 = vcmask 1041409
    %vm4349 = vsmask.f32 1280
    %vm4350 = vmand %vm4348, %vm4349
    %vm4351 = vmor %vm4350, %vm4347
    %vm4352 = vcmask 1042434
    %vm4353 = vsmask.f32 2304
    %vm4354 = vmand %vm4352, %vm4353
    %vm4355 = vmor %vm4354, %vm4351
    %vm4356 = vcmask 1043459
    %vm4357 = vsmask.f32 3328
    %vm4358 = vmand %vm4356, %vm4357
    %vm4359 = vmor %vm4358, %vm4355
    %v4360 = vld [vmem:[%s9] sm:$0xf]
    %v4361 = vsel %vm4359, %v4343, %v4360
    %4362 = vst [vmem:[%s9] sm:$0xf] %v4361
    %v4363 = vpack.c.bf16 %v4319, %v4319
    %v4364 = vpack.c.bf16 %v4320, %v4320
    %v4365 = vpack.c.bf16 %v4321, %v4321
    %v4366 = vpack.c.bf16 %v4322, %v4322
    %v4367 = vpack.c.bf16 %v4323, %v4323
    %v4368 = vpack.c.bf16 %v4324, %v4324
    %v4369 = vpack.c.bf16 %v4325, %v4325
    %v4370 = vpack.c.bf16 %v4326, %v4326
    %v4371 = vld [vmem:[#allocation13] sm:$0xf]
    %v4372 = vld [vmem:[#allocation13 + $0x4] sm:$0xf]
    %v4373 = vld [vmem:[#allocation13 + $0x8] sm:$0xf]
    %v4374 = vld [vmem:[#allocation13 + $0xc] sm:$0xf]
    %v4375 = vld [vmem:[#allocation13 + $0x10] sm:$0xf]
    %v4376 = vld [vmem:[#allocation13 + $0x14] sm:$0xf]
    %v4377 = vld [vmem:[#allocation13 + $0x18] sm:$0xf]
    %v4378 = vld [vmem:[#allocation13 + $0x1c] sm:$0xf]
    %v4379 = vld [vmem:[#allocation13 + $0x20] sm:$0xf]
    %v4380 = vld [vmem:[#allocation13 + $0x24] sm:$0xf]
    %v4381 = vld [vmem:[#allocation13 + $0x28] sm:$0xf]
    %v4382 = vld [vmem:[#allocation13 + $0x2c] sm:$0xf]
    %v4383 = vld [vmem:[#allocation13 + $0x30] sm:$0xf]
    %v4384 = vld [vmem:[#allocation13 + $0x34] sm:$0xf]
    %v4385 = vld [vmem:[#allocation13 + $0x38] sm:$0xf]
    %v4386 = vld [vmem:[#allocation13 + $0x3c] sm:$0xf]
    %v4387 = vld [vmem:[#allocation13 + $0x40] sm:$0xf]
    %v4388 = vld [vmem:[#allocation13 + $0x44] sm:$0xf]
    %v4389 = vld [vmem:[#allocation13 + $0x48] sm:$0xf]
    %v4390 = vld [vmem:[#allocation13 + $0x4c] sm:$0xf]
    %v4391 = vld [vmem:[#allocation13 + $0x50] sm:$0xf]
    %v4392 = vld [vmem:[#allocation13 + $0x54] sm:$0xf]
    %v4393 = vld [vmem:[#allocation13 + $0x58] sm:$0xf]
    %v4394 = vld [vmem:[#allocation13 + $0x5c] sm:$0xf]
    %v4395 = vld [vmem:[#allocation13 + $0x60] sm:$0xf]
    %v4396 = vld [vmem:[#allocation13 + $0x64] sm:$0xf]
    %v4397 = vld [vmem:[#allocation13 + $0x68] sm:$0xf]
    %v4398 = vld [vmem:[#allocation13 + $0x6c] sm:$0xf]
    %v4399 = vld [vmem:[#allocation13 + $0x70] sm:$0xf]
    %v4400 = vld [vmem:[#allocation13 + $0x74] sm:$0xf]
    %v4401 = vld [vmem:[#allocation13 + $0x78] sm:$0xf]
    %v4402 = vld [vmem:[#allocation13 + $0x7c] sm:$0xf]
    %v4403 = vld [vmem:[#allocation13 + $0x80] sm:$0xf]
    %v4404 = vld [vmem:[#allocation13 + $0x84] sm:$0xf]
    %v4405 = vld [vmem:[#allocation13 + $0x88] sm:$0xf]
    %v4406 = vld [vmem:[#allocation13 + $0x8c] sm:$0xf]
    %v4407 = vld [vmem:[#allocation13 + $0x90] sm:$0xf]
    %v4408 = vld [vmem:[#allocation13 + $0x94] sm:$0xf]
    %v4409 = vld [vmem:[#allocation13 + $0x98] sm:$0xf]
    %v4410 = vld [vmem:[#allocation13 + $0x9c] sm:$0xf]
    %v4411 = vld [vmem:[#allocation13 + $0xa0] sm:$0xf]
    %v4412 = vld [vmem:[#allocation13 + $0xa4] sm:$0xf]
    %v4413 = vld [vmem:[#allocation13 + $0xa8] sm:$0xf]
    %v4414 = vld [vmem:[#allocation13 + $0xac] sm:$0xf]
    %v4415 = vld [vmem:[#allocation13 + $0xb0] sm:$0xf]
    %v4416 = vld [vmem:[#allocation13 + $0xb4] sm:$0xf]
    %v4417 = vld [vmem:[#allocation13 + $0xb8] sm:$0xf]
    %v4418 = vld [vmem:[#allocation13 + $0xbc] sm:$0xf]
    %v4419 = vld [vmem:[#allocation13 + $0xc0] sm:$0xf]
    %v4420 = vld [vmem:[#allocation13 + $0xc4] sm:$0xf]
    %v4421 = vld [vmem:[#allocation13 + $0xc8] sm:$0xf]
    %v4422 = vld [vmem:[#allocation13 + $0xcc] sm:$0xf]
    %v4423 = vld [vmem:[#allocation13 + $0xd0] sm:$0xf]
    %v4424 = vld [vmem:[#allocation13 + $0xd4] sm:$0xf]
    %v4425 = vld [vmem:[#allocation13 + $0xd8] sm:$0xf]
    %v4426 = vld [vmem:[#allocation13 + $0xdc] sm:$0xf]
    %v4427 = vld [vmem:[#allocation13 + $0xe0] sm:$0xf]
    %v4428 = vld [vmem:[#allocation13 + $0xe4] sm:$0xf]
    %v4429 = vld [vmem:[#allocation13 + $0xe8] sm:$0xf]
    %v4430 = vld [vmem:[#allocation13 + $0xec] sm:$0xf]
    %v4431 = vld [vmem:[#allocation13 + $0xf0] sm:$0xf]
    %v4432 = vld [vmem:[#allocation13 + $0xf4] sm:$0xf]
    %v4433 = vld [vmem:[#allocation13 + $0xf8] sm:$0xf]
    %v4434 = vld [vmem:[#allocation13 + $0xfc] sm:$0xf]
    %v4435 = vld [vmem:[#allocation13 + $0x100] sm:$0xf]
    %v4436 = vld [vmem:[#allocation13 + $0x104] sm:$0xf]
    %v4437 = vld [vmem:[#allocation13 + $0x108] sm:$0xf]
    %v4438 = vld [vmem:[#allocation13 + $0x10c] sm:$0xf]
    %v4439 = vld [vmem:[#allocation13 + $0x110] sm:$0xf]
    %v4440 = vld [vmem:[#allocation13 + $0x114] sm:$0xf]
    %v4441 = vld [vmem:[#allocation13 + $0x118] sm:$0xf]
    %v4442 = vld [vmem:[#allocation13 + $0x11c] sm:$0xf]
    %v4443 = vld [vmem:[#allocation13 + $0x120] sm:$0xf]
    %v4444 = vld [vmem:[#allocation13 + $0x124] sm:$0xf]
    %v4445 = vld [vmem:[#allocation13 + $0x128] sm:$0xf]
    %v4446 = vld [vmem:[#allocation13 + $0x12c] sm:$0xf]
    %v4447 = vld [vmem:[#allocation13 + $0x130] sm:$0xf]
    %v4448 = vld [vmem:[#allocation13 + $0x134] sm:$0xf]
    %v4449 = vld [vmem:[#allocation13 + $0x138] sm:$0xf]
    %v4450 = vld [vmem:[#allocation13 + $0x13c] sm:$0xf]
    %v4451 = vld [vmem:[#allocation13 + $0x140] sm:$0xf]
    %v4452 = vld [vmem:[#allocation13 + $0x144] sm:$0xf]
    %v4453 = vld [vmem:[#allocation13 + $0x148] sm:$0xf]
    %v4454 = vld [vmem:[#allocation13 + $0x14c] sm:$0xf]
    %v4455 = vld [vmem:[#allocation13 + $0x150] sm:$0xf]
    %v4456 = vld [vmem:[#allocation13 + $0x154] sm:$0xf]
    %v4457 = vld [vmem:[#allocation13 + $0x158] sm:$0xf]
    %v4458 = vld [vmem:[#allocation13 + $0x15c] sm:$0xf]
    %v4459 = vld [vmem:[#allocation13 + $0x160] sm:$0xf]
    %v4460 = vld [vmem:[#allocation13 + $0x164] sm:$0xf]
    %v4461 = vld [vmem:[#allocation13 + $0x168] sm:$0xf]
    %v4462 = vld [vmem:[#allocation13 + $0x16c] sm:$0xf]
    %v4463 = vld [vmem:[#allocation13 + $0x170] sm:$0xf]
    %v4464 = vld [vmem:[#allocation13 + $0x174] sm:$0xf]
    %v4465 = vld [vmem:[#allocation13 + $0x178] sm:$0xf]
    %v4466 = vld [vmem:[#allocation13 + $0x17c] sm:$0xf]
    %v4467 = vld [vmem:[#allocation13 + $0x180] sm:$0xf]
    %v4468 = vld [vmem:[#allocation13 + $0x184] sm:$0xf]
    %v4469 = vld [vmem:[#allocation13 + $0x188] sm:$0xf]
    %v4470 = vld [vmem:[#allocation13 + $0x18c] sm:$0xf]
    %v4471 = vld [vmem:[#allocation13 + $0x190] sm:$0xf]
    %v4472 = vld [vmem:[#allocation13 + $0x194] sm:$0xf]
    %v4473 = vld [vmem:[#allocation13 + $0x198] sm:$0xf]
    %v4474 = vld [vmem:[#allocation13 + $0x19c] sm:$0xf]
    %v4475 = vld [vmem:[#allocation13 + $0x1a0] sm:$0xf]
    %v4476 = vld [vmem:[#allocation13 + $0x1a4] sm:$0xf]
    %v4477 = vld [vmem:[#allocation13 + $0x1a8] sm:$0xf]
    %v4478 = vld [vmem:[#allocation13 + $0x1ac] sm:$0xf]
    %v4479 = vld [vmem:[#allocation13 + $0x1b0] sm:$0xf]
    %v4480 = vld [vmem:[#allocation13 + $0x1b4] sm:$0xf]
    %v4481 = vld [vmem:[#allocation13 + $0x1b8] sm:$0xf]
    %v4482 = vld [vmem:[#allocation13 + $0x1bc] sm:$0xf]
    %v4483 = vld [vmem:[#allocation13 + $0x1c0] sm:$0xf]
    %v4484 = vld [vmem:[#allocation13 + $0x1c4] sm:$0xf]
    %v4485 = vld [vmem:[#allocation13 + $0x1c8] sm:$0xf]
    %v4486 = vld [vmem:[#allocation13 + $0x1cc] sm:$0xf]
    %v4487 = vld [vmem:[#allocation13 + $0x1d0] sm:$0xf]
    %v4488 = vld [vmem:[#allocation13 + $0x1d4] sm:$0xf]
    %v4489 = vld [vmem:[#allocation13 + $0x1d8] sm:$0xf]
    %v4490 = vld [vmem:[#allocation13 + $0x1dc] sm:$0xf]
    %v4491 = vld [vmem:[#allocation13 + $0x1e0] sm:$0xf]
    %v4492 = vld [vmem:[#allocation13 + $0x1e4] sm:$0xf]
    %v4493 = vld [vmem:[#allocation13 + $0x1e8] sm:$0xf]
    %v4494 = vld [vmem:[#allocation13 + $0x1ec] sm:$0xf]
    %v4495 = vld [vmem:[#allocation13 + $0x1f0] sm:$0xf]
    %v4496 = vld [vmem:[#allocation13 + $0x1f4] sm:$0xf]
    %v4497 = vld [vmem:[#allocation13 + $0x1f8] sm:$0xf]
    %v4498 = vld [vmem:[#allocation13 + $0x1fc] sm:$0xf]
    %v4499 = vld [vmem:[#allocation15] sm:$0x1]
    %v4628 = vunpack.c.l.b16 %v4371
    %v4629 = vunpack.c.l.b16 %v4372
    %v4630 = vunpack.c.l.b16 %v4373
    %v4631 = vunpack.c.l.b16 %v4374
    %v4632 = vunpack.c.l.b16 %v4375
    %v4633 = vunpack.c.l.b16 %v4376
    %v4634 = vunpack.c.l.b16 %v4377
    %v4635 = vunpack.c.l.b16 %v4378
    %v4636 = vunpack.c.l.b16 %v4379
    %v4637 = vunpack.c.l.b16 %v4380
    %v4638 = vunpack.c.l.b16 %v4381
    %v4639 = vunpack.c.l.b16 %v4382
    %v4640 = vunpack.c.l.b16 %v4383
    %v4641 = vunpack.c.l.b16 %v4384
    %v4642 = vunpack.c.l.b16 %v4385
    %v4643 = vunpack.c.l.b16 %v4386
    %v4644 = vunpack.c.l.b16 %v4387
    %v4645 = vunpack.c.l.b16 %v4388
    %v4646 = vunpack.c.l.b16 %v4389
    %v4647 = vunpack.c.l.b16 %v4390
    %v4648 = vunpack.c.l.b16 %v4391
    %v4649 = vunpack.c.l.b16 %v4392
    %v4650 = vunpack.c.l.b16 %v4393
    %v4651 = vunpack.c.l.b16 %v4394
    %v4652 = vunpack.c.l.b16 %v4395
    %v4653 = vunpack.c.l.b16 %v4396
    %v4654 = vunpack.c.l.b16 %v4397
    %v4655 = vunpack.c.l.b16 %v4398
    %v4656 = vunpack.c.l.b16 %v4399
    %v4657 = vunpack.c.l.b16 %v4400
    %v4658 = vunpack.c.l.b16 %v4401
    %v4659 = vunpack.c.l.b16 %v4402
    %v4660 = vunpack.c.l.b16 %v4403
    %v4661 = vunpack.c.l.b16 %v4404
    %v4662 = vunpack.c.l.b16 %v4405
    %v4663 = vunpack.c.l.b16 %v4406
    %v4664 = vunpack.c.l.b16 %v4407
    %v4665 = vunpack.c.l.b16 %v4408
    %v4666 = vunpack.c.l.b16 %v4409
    %v4667 = vunpack.c.l.b16 %v4410
    %v4668 = vunpack.c.l.b16 %v4411
    %v4669 = vunpack.c.l.b16 %v4412
    %v4670 = vunpack.c.l.b16 %v4413
    %v4671 = vunpack.c.l.b16 %v4414
    %v4672 = vunpack.c.l.b16 %v4415
    %v4673 = vunpack.c.l.b16 %v4416
    %v4674 = vunpack.c.l.b16 %v4417
    %v4675 = vunpack.c.l.b16 %v4418
    %v4676 = vunpack.c.l.b16 %v4419
    %v4677 = vunpack.c.l.b16 %v4420
    %v4678 = vunpack.c.l.b16 %v4421
    %v4679 = vunpack.c.l.b16 %v4422
    %v4680 = vunpack.c.l.b16 %v4423
    %v4681 = vunpack.c.l.b16 %v4424
    %v4682 = vunpack.c.l.b16 %v4425
    %v4683 = vunpack.c.l.b16 %v4426
    %v4684 = vunpack.c.l.b16 %v4427
    %v4685 = vunpack.c.l.b16 %v4428
    %v4686 = vunpack.c.l.b16 %v4429
    %v4687 = vunpack.c.l.b16 %v4430
    %v4688 = vunpack.c.l.b16 %v4431
    %v4689 = vunpack.c.l.b16 %v4432
    %v4690 = vunpack.c.l.b16 %v4433
    %v4691 = vunpack.c.l.b16 %v4434
    %v4692 = vunpack.c.l.b16 %v4435
    %v4693 = vunpack.c.l.b16 %v4436
    %v4694 = vunpack.c.l.b16 %v4437
    %v4695 = vunpack.c.l.b16 %v4438
    %v4696 = vunpack.c.l.b16 %v4439
    %v4697 = vunpack.c.l.b16 %v4440
    %v4698 = vunpack.c.l.b16 %v4441
    %v4699 = vunpack.c.l.b16 %v4442
    %v4700 = vunpack.c.l.b16 %v4443
    %v4701 = vunpack.c.l.b16 %v4444
    %v4702 = vunpack.c.l.b16 %v4445
    %v4703 = vunpack.c.l.b16 %v4446
    %v4704 = vunpack.c.l.b16 %v4447
    %v4705 = vunpack.c.l.b16 %v4448
    %v4706 = vunpack.c.l.b16 %v4449
    %v4707 = vunpack.c.l.b16 %v4450
    %v4708 = vunpack.c.l.b16 %v4451
    %v4709 = vunpack.c.l.b16 %v4452
    %v4710 = vunpack.c.l.b16 %v4453
    %v4711 = vunpack.c.l.b16 %v4454
    %v4712 = vunpack.c.l.b16 %v4455
    %v4713 = vunpack.c.l.b16 %v4456
    %v4714 = vunpack.c.l.b16 %v4457
    %v4715 = vunpack.c.l.b16 %v4458
    %v4716 = vunpack.c.l.b16 %v4459
    %v4717 = vunpack.c.l.b16 %v4460
    %v4718 = vunpack.c.l.b16 %v4461
    %v4719 = vunpack.c.l.b16 %v4462
    %v4720 = vunpack.c.l.b16 %v4463
    %v4721 = vunpack.c.l.b16 %v4464
    %v4722 = vunpack.c.l.b16 %v4465
    %v4723 = vunpack.c.l.b16 %v4466
    %v4724 = vunpack.c.l.b16 %v4467
    %v4725 = vunpack.c.l.b16 %v4468
    %v4726 = vunpack.c.l.b16 %v4469
    %v4727 = vunpack.c.l.b16 %v4470
    %v4728 = vunpack.c.l.b16 %v4471
    %v4729 = vunpack.c.l.b16 %v4472
    %v4730 = vunpack.c.l.b16 %v4473
    %v4731 = vunpack.c.l.b16 %v4474
    %v4732 = vunpack.c.l.b16 %v4475
    %v4733 = vunpack.c.l.b16 %v4476
    %v4734 = vunpack.c.l.b16 %v4477
    %v4735 = vunpack.c.l.b16 %v4478
    %v4736 = vunpack.c.l.b16 %v4479
    %v4737 = vunpack.c.l.b16 %v4480
    %v4738 = vunpack.c.l.b16 %v4481
    %v4739 = vunpack.c.l.b16 %v4482
    %v4740 = vunpack.c.l.b16 %v4483
    %v4741 = vunpack.c.l.b16 %v4484
    %v4742 = vunpack.c.l.b16 %v4485
    %v4743 = vunpack.c.l.b16 %v4486
    %v4744 = vunpack.c.l.b16 %v4487
    %v4745 = vunpack.c.l.b16 %v4488
    %v4746 = vunpack.c.l.b16 %v4489
    %v4747 = vunpack.c.l.b16 %v4490
    %v4748 = vunpack.c.l.b16 %v4491
    %v4749 = vunpack.c.l.b16 %v4492
    %v4750 = vunpack.c.l.b16 %v4493
    %v4751 = vunpack.c.l.b16 %v4494
    %v4752 = vunpack.c.l.b16 %v4495
    %v4753 = vunpack.c.l.b16 %v4496
    %v4754 = vunpack.c.l.b16 %v4497
    %v4755 = vunpack.c.l.b16 %v4498
    %v4756 = vpack.c.b16 %v4629, %v4628
    %v4757 = vpack.c.b16 %v4631, %v4630
    %v4758 = vpack.c.b16 %v4633, %v4632
    %v4759 = vpack.c.b16 %v4635, %v4634
    %v4760 = vpack.c.b16 %v4637, %v4636
    %v4761 = vpack.c.b16 %v4639, %v4638
    %v4762 = vpack.c.b16 %v4641, %v4640
    %v4763 = vpack.c.b16 %v4643, %v4642
    %v4764 = vpack.c.b16 %v4645, %v4644
    %v4765 = vpack.c.b16 %v4647, %v4646
    %v4766 = vpack.c.b16 %v4649, %v4648
    %v4767 = vpack.c.b16 %v4651, %v4650
    %v4768 = vpack.c.b16 %v4653, %v4652
    %v4769 = vpack.c.b16 %v4655, %v4654
    %v4770 = vpack.c.b16 %v4657, %v4656
    %v4771 = vpack.c.b16 %v4659, %v4658
    %v4772 = vpack.c.b16 %v4661, %v4660
    %v4773 = vpack.c.b16 %v4663, %v4662
    %v4774 = vpack.c.b16 %v4665, %v4664
    %v4775 = vpack.c.b16 %v4667, %v4666
    %v4776 = vpack.c.b16 %v4669, %v4668
    %v4777 = vpack.c.b16 %v4671, %v4670
    %v4778 = vpack.c.b16 %v4673, %v4672
    %v4779 = vpack.c.b16 %v4675, %v4674
    %v4780 = vpack.c.b16 %v4677, %v4676
    %v4781 = vpack.c.b16 %v4679, %v4678
    %v4782 = vpack.c.b16 %v4681, %v4680
    %v4783 = vpack.c.b16 %v4683, %v4682
    %v4784 = vpack.c.b16 %v4685, %v4684
    %v4785 = vpack.c.b16 %v4687, %v4686
    %v4786 = vpack.c.b16 %v4689, %v4688
    %v4787 = vpack.c.b16 %v4691, %v4690
    %v4788 = vpack.c.b16 %v4693, %v4692
    %v4789 = vpack.c.b16 %v4695, %v4694
    %v4790 = vpack.c.b16 %v4697, %v4696
    %v4791 = vpack.c.b16 %v4699, %v4698
    %v4792 = vpack.c.b16 %v4701, %v4700
    %v4793 = vpack.c.b16 %v4703, %v4702
    %v4794 = vpack.c.b16 %v4705, %v4704
    %v4795 = vpack.c.b16 %v4707, %v4706
    %v4796 = vpack.c.b16 %v4709, %v4708
    %v4797 = vpack.c.b16 %v4711, %v4710
    %v4798 = vpack.c.b16 %v4713, %v4712
    %v4799 = vpack.c.b16 %v4715, %v4714
    %v4800 = vpack.c.b16 %v4717, %v4716
    %v4801 = vpack.c.b16 %v4719, %v4718
    %v4802 = vpack.c.b16 %v4721, %v4720
    %v4803 = vpack.c.b16 %v4723, %v4722
    %v4804 = vpack.c.b16 %v4725, %v4724
    %v4805 = vpack.c.b16 %v4727, %v4726
    %v4806 = vpack.c.b16 %v4729, %v4728
    %v4807 = vpack.c.b16 %v4731, %v4730
    %v4808 = vpack.c.b16 %v4733, %v4732
    %v4809 = vpack.c.b16 %v4735, %v4734
    %v4810 = vpack.c.b16 %v4737, %v4736
    %v4811 = vpack.c.b16 %v4739, %v4738
    %v4812 = vpack.c.b16 %v4741, %v4740
    %v4813 = vpack.c.b16 %v4743, %v4742
    %v4814 = vpack.c.b16 %v4745, %v4744
    %v4815 = vpack.c.b16 %v4747, %v4746
    %v4816 = vpack.c.b16 %v4749, %v4748
    %v4817 = vpack.c.b16 %v4751, %v4750
    %v4818 = vpack.c.b16 %v4753, %v4752
    %v4819 = vpack.c.b16 %v4755, %v4754
    %4884 = vmatpush.bf16.msra.mxu0 %v4763
    %4885 = vmatpush.bf16.msra.mxu0 %v4762
    %4886 = vmatpush.bf16.msra.mxu0 %v4761
    %4887 = vmatpush.bf16.msra.mxu0 %v4760
    %4888 = vmatpush.bf16.msra.mxu0 %v4759
    %4889 = vmatpush.bf16.msra.mxu0 %v4758
    %4890 = vmatpush.bf16.msra.mxu0 %v4757
    %4891 = vmatpush.bf16.msra.mxu0 %v4756
    %4892 = vmatmul.bf16.gmra.mxu0 %v4363
    %v4893 = vpop.f32.mrf.mxu0
    %v4894 = vadd.f32 %v4499, %v4893
    %v4895 = vpop.f32.mrf.mxu0
    %4896 = vdwg.mxu0
    %4897 = vmatpush.bf16.msra.mxu0 %v4771
    %4898 = vmatpush.bf16.msra.mxu0 %v4770
    %4899 = vmatpush.bf16.msra.mxu0 %v4769
    %4900 = vmatpush.bf16.msra.mxu0 %v4768
    %4901 = vmatpush.bf16.msra.mxu0 %v4767
    %4902 = vmatpush.bf16.msra.mxu0 %v4766
    %4903 = vmatpush.bf16.msra.mxu0 %v4765
    %4904 = vmatpush.bf16.msra.mxu0 %v4764
    %4905 = vmatmul.bf16.gmra.mxu0 %v4364
    %v4906 = vpop.f32.mrf.mxu0
    %v4907 = vadd.f32 %v4894, %v4906
    %v4908 = vpop.f32.mrf.mxu0
    %4909 = vdwg.mxu0
    %4910 = vmatpush.bf16.msra.mxu0 %v4779
    %4911 = vmatpush.bf16.msra.mxu0 %v4778
    %4912 = vmatpush.bf16.msra.mxu0 %v4777
    %4913 = vmatpush.bf16.msra.mxu0 %v4776
    %4914 = vmatpush.bf16.msra.mxu0 %v4775
    %4915 = vmatpush.bf16.msra.mxu0 %v4774
    %4916 = vmatpush.bf16.msra.mxu0 %v4773
    %4917 = vmatpush.bf16.msra.mxu0 %v4772
    %4918 = vmatmul.bf16.gmra.mxu0 %v4365
    %v4919 = vpop.f32.mrf.mxu0
    %v4920 = vadd.f32 %v4907, %v4919
    %v4921 = vpop.f32.mrf.mxu0
    %4922 = vdwg.mxu0
    %4923 = vmatpush.bf16.msra.mxu0 %v4787
    %4924 = vmatpush.bf16.msra.mxu0 %v4786
    %4925 = vmatpush.bf16.msra.mxu0 %v4785
    %4926 = vmatpush.bf16.msra.mxu0 %v4784
    %4927 = vmatpush.bf16.msra.mxu0 %v4783
    %4928 = vmatpush.bf16.msra.mxu0 %v4782
    %4929 = vmatpush.bf16.msra.mxu0 %v4781
    %4930 = vmatpush.bf16.msra.mxu0 %v4780
    %4931 = vmatmul.bf16.gmra.mxu0 %v4366
    %v4932 = vpop.f32.mrf.mxu0
    %v4933 = vadd.f32 %v4920, %v4932
    %v4934 = vpop.f32.mrf.mxu0
    %4935 = vdwg.mxu0
    %4936 = vmatpush.bf16.msra.mxu0 %v4795
    %4937 = vmatpush.bf16.msra.mxu0 %v4794
    %4938 = vmatpush.bf16.msra.mxu0 %v4793
    %4939 = vmatpush.bf16.msra.mxu0 %v4792
    %4940 = vmatpush.bf16.msra.mxu0 %v4791
    %4941 = vmatpush.bf16.msra.mxu0 %v4790
    %4942 = vmatpush.bf16.msra.mxu0 %v4789
    %4943 = vmatpush.bf16.msra.mxu0 %v4788
    %4944 = vmatmul.bf16.gmra.mxu0 %v4367
    %v4945 = vpop.f32.mrf.mxu0
    %v4946 = vadd.f32 %v4933, %v4945
    %v4947 = vpop.f32.mrf.mxu0
    %4948 = vdwg.mxu0
    %4949 = vmatpush.bf16.msra.mxu0 %v4803
    %4950 = vmatpush.bf16.msra.mxu0 %v4802
    %4951 = vmatpush.bf16.msra.mxu0 %v4801
    %4952 = vmatpush.bf16.msra.mxu0 %v4800
    %4953 = vmatpush.bf16.msra.mxu0 %v4799
    %4954 = vmatpush.bf16.msra.mxu0 %v4798
    %4955 = vmatpush.bf16.msra.mxu0 %v4797
    %4956 = vmatpush.bf16.msra.mxu0 %v4796
    %4957 = vmatmul.bf16.gmra.mxu0 %v4368
    %v4958 = vpop.f32.mrf.mxu0
    %v4959 = vadd.f32 %v4946, %v4958
    %v4960 = vpop.f32.mrf.mxu0
    %4961 = vdwg.mxu0
    %4962 = vmatpush.bf16.msra.mxu0 %v4811
    %4963 = vmatpush.bf16.msra.mxu0 %v4810
    %4964 = vmatpush.bf16.msra.mxu0 %v4809
    %4965 = vmatpush.bf16.msra.mxu0 %v4808
    %4966 = vmatpush.bf16.msra.mxu0 %v4807
    %4967 = vmatpush.bf16.msra.mxu0 %v4806
    %4968 = vmatpush.bf16.msra.mxu0 %v4805
    %4969 = vmatpush.bf16.msra.mxu0 %v4804
    %4970 = vmatmul.bf16.gmra.mxu0 %v4369
    %v4971 = vpop.f32.mrf.mxu0
    %v4972 = vadd.f32 %v4959, %v4971
    %v4973 = vpop.f32.mrf.mxu0
    %4974 = vdwg.mxu0
    %4975 = vmatpush.bf16.msra.mxu0 %v4819
    %4976 = vmatpush.bf16.msra.mxu0 %v4818
    %4977 = vmatpush.bf16.msra.mxu0 %v4817
    %4978 = vmatpush.bf16.msra.mxu0 %v4816
    %4979 = vmatpush.bf16.msra.mxu0 %v4815
    %4980 = vmatpush.bf16.msra.mxu0 %v4814
    %4981 = vmatpush.bf16.msra.mxu0 %v4813
    %4982 = vmatpush.bf16.msra.mxu0 %v4812
    %4983 = vmatmul.bf16.gmra.mxu0 %v4370
    %v4984 = vpop.f32.mrf.mxu0
    %v4985 = vadd.f32 %v4972, %v4984
    %v4986 = vpop.f32.mrf.mxu0
    %4987 = vdwg.mxu0
    %4988 = vst [vmem:[%s10] sm:$0x1] %v4985
    // Predicated region
    $region74: #{head_forward.2} parent=1 // pred_check
      _
    $region75: #{head_forward.2} parent=1 // pred_check_branch
      %4990 = sbr.rel (0) target = $region77
    $region76: #{head_forward.2} parent=1 // pred_region
      _
    $region77: #{head_forward.2} parent=1 // pred_fallthru
      _
    // Predicated region
    $region78: #{head_forward.2} parent=1 // pred_check
      _
    $region79: #{head_forward.2} parent=1 // pred_check_branch
      %4992 = sbr.rel (0) target = $region81
    $region80: #{head_forward.2} parent=1 // pred_region
      _
    $region81: #{head_forward.2} parent=1 // pred_fallthru
      _
    // Predicated region
    $region82: #{head_forward.2} parent=1 // pred_check
      _
    $region83: #{head_forward.2} parent=1 // pred_check_branch
      %4994 = sbr.rel (0) target = $region85
    $region84: #{head_forward.2} parent=1 // pred_region
      _
    $region85: #{head_forward.2} parent=1 // pred_fallthru
      _
    // Predicated region
    $region86: #{head_forward.2} parent=1 // pred_check
      _
    $region87: #{head_forward.2} parent=1 // pred_check_branch
      %4996 = sbr.rel (0) target = $region89
    $region88: #{head_forward.2} parent=1 // pred_region
      _
    $region89: #{head_forward.2} parent=1 // pred_fallthru
      _
    %4997 = vsyncpa [#allocation3], 1
    %4998 = vsyncpa [#allocation5], 1
    %4999 = vsyncpa [#allocation8], 1
    %5000 = vsyncpa [#allocation11], 1
    %5001 = vsyncpa [#allocation14], 1

</llo_original>
